<compile_context>
chip_gen: v5e
topology: v5e:2x2
jax: 0.10.0
libtpu: 0.0.40
codegen_flags: <defaults>
</compile_context>

<pallas_src>
import jax
import jax.numpy as jnp
from jax.experimental import pallas as pl
from jax.experimental.pallas import tpu as pltpu


# ----------------------------------------------------------------------------
# helpers
# ----------------------------------------------------------------------------
def _interp_matrix(l_out, l_in):
    """(l_out, l_in) matrix A s.t. A @ v is 1-D linear interp, align_corners=True."""
    if l_in == 1:
        return jnp.ones((l_out, 1), jnp.float32)
    src = jnp.arange(l_out, dtype=jnp.float32) * (float(l_in - 1) / float(l_out - 1))
    lo = jnp.clip(jnp.floor(src).astype(jnp.int32), 0, l_in - 2)
    frac = src - lo.astype(jnp.float32)
    rows = jnp.arange(l_out)
    a = jnp.zeros((l_out, l_in), jnp.float32)
    a = a.at[rows, lo].add(1.0 - frac)
    a = a.at[rows, lo + 1].add(frac)
    return a


def _accumulate_conv3x3(acc, pad_ref, w_ref, c_in, c_out, h, w):
    """acc[co] += sum_{ci,dy,dx} w[co,ci,dy,dx] * pad_ref[ci, dy:dy+h, dx:dx+w].

    pad_ref : zero-haloed (c_in, h+2, w+2) VMEM scratch.
    w_ref   : flattened (c_out*c_in*9,) f32 weights in SMEM (scalar reads).
    Small channel counts -> fully unrolled scalar-times-tile FMAs on the VPU.
    """
    for ci in range(c_in):
        for dy in range(3):
            for dx in range(3):
                tile = pad_ref[ci, dy:dy + h, dx:dx + w]
                base = ci * 9 + dy * 3 + dx
                for co in range(c_out):
                    acc[co] = acc[co] + w_ref[co * c_in * 9 + base] * tile
    return acc


# ----------------------------------------------------------------------------
# kernel 1: bilinear up(x1) + pad + concat + conv1(3x3) + BN1(folded) + ReLU
# ----------------------------------------------------------------------------
def _make_up_conv1_kernel(c1, c2, c_mid, h1, w1, h, w, y0, x0):
    h1u, w1u = 2 * h1, 2 * w1

    def kernel(x1_ref, x2_ref, ah_ref, awt_ref, wa_ref, wb_ref, b_ref,
               o_ref, pada_ref, padb_ref):
        # Zero halo scratches every step (keeps grid steps independent so the
        # batch axis can be sharded across TensorCores).
        pada_ref[...] = jnp.zeros_like(pada_ref)
        padb_ref[...] = jnp.zeros_like(padb_ref)

        # Skip connection x2 -> interior of its padded scratch (conv halo = 1).
        for c in range(c2):
            pada_ref[c, 1:h + 1, 1:w + 1] = x2_ref[0, c].astype(jnp.float32)

        # Bilinear 2x upsample of x1 (align_corners=True): two small matmuls
        # per channel against precomputed interpolation matrices, written at
        # the F.pad offset inside the halo scratch -> upsample, pad and concat
        # never touch HBM.
        ah = ah_ref[...]
        awt = awt_ref[...]
        for c in range(c1):
            t = jnp.dot(x1_ref[0, c].astype(jnp.float32), awt,
                        preferred_element_type=jnp.float32)            # (h1, 2*w1)
            up_c = jnp.dot(ah, t, preferred_element_type=jnp.float32)  # (2*h1, 2*w1)
            padb_ref[c, y0:y0 + h1u, x0:x0 + w1u] = up_c

        # conv(cat([x2, up(x1)], dim=1)) == conv_a(x2) + conv_b(up(x1)).
        acc = [jnp.full((h, w), b_ref[co], dtype=jnp.float32) for co in range(c_mid)]
        _accumulate_conv3x3(acc, pada_ref, wa_ref, c2, c_mid, h, w)
        _accumulate_conv3x3(acc, padb_ref, wb_ref, c1, c_mid, h, w)

        for co in range(c_mid):
            o_ref[0, co] = jnp.maximum(acc[co], 0.0).astype(o_ref.dtype)

    return kernel


# ----------------------------------------------------------------------------
# kernel 2: conv2(3x3) + BN2(folded) + ReLU
# ----------------------------------------------------------------------------
def _make_conv3x3_kernel(c_in, c_out, h, w):
    def kernel(x_ref, w_ref, b_ref, o_ref, pad_ref):
        pad_ref[...] = jnp.zeros_like(pad_ref)
        for c in range(c_in):
            pad_ref[c, 1:h + 1, 1:w + 1] = x_ref[0, c].astype(jnp.float32)

        acc = [jnp.full((h, w), b_ref[co], dtype=jnp.float32) for co in range(c_out)]
        _accumulate_conv3x3(acc, pad_ref, w_ref, c_in, c_out, h, w)

        for co in range(c_out):
            o_ref[0, co] = jnp.maximum(acc[co], 0.0).astype(o_ref.dtype)

    return kernel


# ----------------------------------------------------------------------------
# wrapper: full Up.forward
# ----------------------------------------------------------------------------
def up_forward_pallas(x1, x2, params, eps=1e-5):
    """Forward of Up(in_channels=C1+C2, outchannels, bilinear=True)."""
    n, c1, h1, w1 = x1.shape
    n2, c2, h, w = x2.shape
    assert n == n2
    h1u, w1u = 2 * h1, 2 * w1
    diff_y, diff_x = h - h1u, w - w1u
    assert diff_y >= 0 and diff_x >= 0

    c_mid = params["w1"].shape[0]
    c_out = params["w2"].shape[0]
    assert params["w1"].shape[1] == c1 + c2
    f32 = jnp.float32

    # Fold BatchNorm (inference-mode running stats) into conv weight + bias.
    s1 = params["g1"] / jnp.sqrt(params["v1"] + eps)
    w1f = params["w1"].astype(f32) * s1[:, None, None, None]
    b1f = ((params["b1"] - params["m1"]) * s1 + params["be1"]).astype(f32)
    s2 = params["g2"] / jnp.sqrt(params["v2"] + eps)
    w2f = params["w2"].astype(f32) * s2[:, None, None, None]
    b2f = ((params["b2"] - params["m2"]) * s2 + params["be2"]).astype(f32)

    # Split conv1 weights along input channels: concat order is [x2, up(x1)].
    wa = w1f[:, :c2].reshape(-1)   # multiplies x2
    wb = w1f[:, c2:].reshape(-1)   # multiplies up(x1)

    # Separable bilinear (align_corners=True) interpolation matrices.
    a_h = _interp_matrix(h1u, h1)        # (2*h1, h1)
    a_wt = _interp_matrix(w1u, w1).T     # (w1, 2*w1)

    y0 = 1 + diff_y // 2                 # F.pad offset inside the conv halo
    x0 = 1 + diff_x // 2

    smem = pl.BlockSpec(memory_space=pltpu.MemorySpace.SMEM)

    # ---- kernel 1: upsample + pad + concat + conv1 + BN1 + ReLU ----
    hidden = pl.pallas_call(
        _make_up_conv1_kernel(c1, c2, c_mid, h1, w1, h, w, y0, x0),
        grid=(n,),
        in_specs=[
            pl.BlockSpec((1, c1, h1, w1), lambda i: (i, 0, 0, 0)),
            pl.BlockSpec((1, c2, h, w), lambda i: (i, 0, 0, 0)),
            pl.BlockSpec((h1u, h1), lambda i: (0, 0)),
            pl.BlockSpec((w1, w1u), lambda i: (0, 0)),
            smem,   # wa (flattened, SMEM scalar reads)
            smem,   # wb
            smem,   # folded bias1
        ],
        out_specs=pl.BlockSpec((1, c_mid, h, w), lambda i: (i, 0, 0, 0)),
        out_shape=jax.ShapeDtypeStruct((n, c_mid, h, w), f32),
        scratch_shapes=[
            pltpu.VMEM((c2, h + 2, w + 2), f32),   # zero-haloed x2
            pltpu.VMEM((c1, h + 2, w + 2), f32),   # zero-haloed up(x1)
        ],
        compiler_params=pltpu.CompilerParams(dimension_semantics=("parallel",)),
    )(x1, x2, a_h, a_wt, wa, wb, b1f)

    # ---- kernel 2: conv2 + BN2 + ReLU ----
    out = pl.pallas_call(
        _make_conv3x3_kernel(c_mid, c_out, h, w),
        grid=(n,),
        in_specs=[
            pl.BlockSpec((1, c_mid, h, w), lambda i: (i, 0, 0, 0)),
            smem,   # w2 (flattened)
            smem,   # folded bias2
        ],
        out_specs=pl.BlockSpec((1, c_out, h, w), lambda i: (i, 0, 0, 0)),
        out_shape=jax.ShapeDtypeStruct((n, c_out, h, w), f32),
        scratch_shapes=[pltpu.VMEM((c_mid, h + 2, w + 2), f32)],
        compiler_params=pltpu.CompilerParams(dimension_semantics=("parallel",)),
    )(hidden, w2f.reshape(-1), b2f)

    return out


# ----------------------------------------------------------------------------
# pure-JAX reference (independent code path)
# ----------------------------------------------------------------------------
def _ref_upsample_bilinear_ac(x, scale=2):
    n, c, h, w = x.shape
    h2, w2 = h * scale, w * scale
    ys = jnp.arange(h2, dtype=jnp.float32) * (h - 1) / (h2 - 1)
    xs = jnp.arange(w2, dtype=jnp.float32) * (w - 1) / (w2 - 1)
    y0 = jnp.clip(jnp.floor(ys).astype(jnp.int32), 0, h - 2)
    x0 = jnp.clip(jnp.floor(xs).astype(jnp.int32), 0, w - 2)
    wy = (ys - y0.astype(jnp.float32))[None, None, :, None]
    wx = (xs - x0.astype(jnp.float32))[None, None, None, :]
    rows = x[:, :, y0, :] * (1.0 - wy) + x[:, :, y0 + 1, :] * wy
    return rows[:, :, :, x0] * (1.0 - wx) + rows[:, :, :, x0 + 1] * wx


def _ref_conv3x3(x, wgt, b):
    y = jax.lax.conv_general_dilated(
        x, wgt, window_strides=(1, 1), padding=((1, 1), (1, 1)),
        dimension_numbers=("NCHW", "OIHW", "NCHW"))
    return y + b[None, :, None, None]


def _ref_bn(x, g, be, m, v, eps=1e-5):
    return (x - m[None, :, None, None]) / jnp.sqrt(v[None, :, None, None] + eps) \
        * g[None, :, None, None] + be[None, :, None, None]


def _ref_up_forward(x1, x2, p, eps=1e-5):
    u = _ref_upsample_bilinear_ac(x1)
    dy = x2.shape[2] - u.shape[2]
    dx = x2.shape[3] - u.shape[3]
    u = jnp.pad(u, ((0, 0), (0, 0), (dy // 2, dy - dy // 2), (dx // 2, dx - dx // 2)))
    x = jnp.concatenate([x2, u], axis=1)
    h = jax.nn.relu(_ref_bn(_ref_conv3x3(x, p["w1"], p["b1"]),
                            p["g1"], p["be1"], p["m1"], p["v1"], eps))
    return jax.nn.relu(_ref_bn(_ref_conv3x3(h, p["w2"], p["b2"]),
                               p["g2"], p["be2"], p["m2"], p["v2"], eps))


# ----------------------------------------------------------------------------
if __name__ == "__main__":
    key = jax.random.PRNGKey(0)
    ks = jax.random.split(key, 16)

    N = 2
    C1, C2 = 4, 4                 # channels of x1 (to upsample) / x2 (skip)
    in_channels = C1 + C2         # 8
    outchannels = 4
    H1, W1 = 8, 8                 # x1 spatial; x2 is 2x -> (16, 16)
    H, W = 16, 16

    x1 = jax.random.normal(ks[0], (N, C1, H1, W1), dtype=jnp.float32)
    x2 = jax.random.normal(ks[1], (N, C2, H, W), dtype=jnp.float32)

    params = dict(
        w1=jax.random.normal(ks[2], (outchannels, in_channels, 3, 3), jnp.float32) * 0.2,
        b1=jax.random.normal(ks[3], (outchannels,), jnp.float32) * 0.1,
        g1=jax.random.uniform(ks[4], (outchannels,), jnp.float32, 0.5, 1.5),
        be1=jax.random.normal(ks[5], (outchannels,), jnp.float32) * 0.1,
        m1=jax.random.normal(ks[6], (outchannels,), jnp.float32) * 0.1,
        v1=jax.random.uniform(ks[7], (outchannels,), jnp.float32, 0.5, 1.5),
        w2=jax.random.normal(ks[8], (outchannels, outchannels, 3, 3), jnp.float32) * 0.2,
        b2=jax.random.normal(ks[9], (outchannels,), jnp.float32) * 0.1,
        g2=jax.random.uniform(ks[10], (outchannels,), jnp.float32, 0.5, 1.5),
        be2=jax.random.normal(ks[11], (outchannels,), jnp.float32) * 0.1,
        m2=jax.random.normal(ks[12], (outchannels,), jnp.float32) * 0.1,
        v2=jax.random.uniform(ks[13], (outchannels,), jnp.float32, 0.5, 1.5),
    )

    out = up_forward_pallas(x1, x2, params)
    out = jax.block_until_ready(out)

    ref = _ref_up_forward(x1, x2, params)
    assert out.shape == (N, outchannels, H, W), out.shape
    max_err = float(jnp.max(jnp.abs(out - ref)))
    assert jnp.allclose(out, ref, atol=1e-4, rtol=1e-4), max_err

    print("KERNEL_OK")
</pallas_src>

<mosaic_0001>
module attributes {stable_mosaic.version = 11 : i64} {
  func.func @kernel(%arg0: i32, %arg1: memref<1x4x8x8xf32, #tpu.memory_space<vmem>>, %arg2: memref<1x4x16x16xf32, #tpu.memory_space<vmem>>, %arg3: memref<16x8xf32, #tpu.memory_space<vmem>>, %arg4: memref<8x16xf32, #tpu.memory_space<vmem>>, %arg5: memref<144xf32, #tpu.memory_space<smem>>, %arg6: memref<144xf32, #tpu.memory_space<smem>>, %arg7: memref<4xf32, #tpu.memory_space<smem>>, %arg8: memref<1x4x16x16xf32, #tpu.memory_space<vmem>>, %arg9: memref<4x18x18xf32, #tpu.memory_space<vmem>>, %arg10: memref<4x18x18xf32, #tpu.memory_space<vmem>>) attributes {dimension_semantics = [#tpu.dimension_semantics<parallel>], iteration_bounds = array<i64: 2>, scalar_prefetch = 0 : i64, scratch_operands = 2 : i64, tpu.core_type = #tpu.core_type<tc>, window_params = [{transform_indices = @transform_0, window_bounds = array<i64: 1, 4, 8, 8>}, {transform_indices = @transform_1, window_bounds = array<i64: 1, 4, 16, 16>}, {pipeline_mode = #tpu.pipeline_mode<synchronous>, transform_indices = @transform_2, window_bounds = array<i64: 16, 8>}, {pipeline_mode = #tpu.pipeline_mode<synchronous>, transform_indices = @transform_3, window_bounds = array<i64: 8, 16>}, {transform_indices = @transform_4, window_bounds = array<i64: 144>}, {transform_indices = @transform_5, window_bounds = array<i64: 144>}, {transform_indices = @transform_6, window_bounds = array<i64: 4>}, {transform_indices = @transform_7, window_bounds = array<i64: 1, 4, 16, 16>}]} {
    %cst = arith.constant 0.000000e+00 : f32
    %0 = vector.broadcast %cst : f32 to vector<4x18x18xf32>
    %c0 = arith.constant 0 : index
    %c0_0 = arith.constant 0 : index
    %c0_1 = arith.constant 0 : index
    %1 = vector.load %arg9[%c0, %c0_0, %c0_1] : memref<4x18x18xf32, #tpu.memory_space<vmem>>, vector<4x18x18xf32>
    tpu.vector_store %arg9[%c0, %c0_0, %c0_1], %0 {strides = array<i32>} : memref<4x18x18xf32, #tpu.memory_space<vmem>>, vector<4x18x18xf32>,
    %cst_2 = arith.constant 0.000000e+00 : f32
    %2 = vector.broadcast %cst_2 : f32 to vector<4x18x18xf32>
    %c0_3 = arith.constant 0 : index
    %c0_4 = arith.constant 0 : index
    %c0_5 = arith.constant 0 : index
    %3 = vector.load %arg10[%c0_3, %c0_4, %c0_5] : memref<4x18x18xf32, #tpu.memory_space<vmem>>, vector<4x18x18xf32>
    tpu.vector_store %arg10[%c0_3, %c0_4, %c0_5], %2 {strides = array<i32>} : memref<4x18x18xf32, #tpu.memory_space<vmem>>, vector<4x18x18xf32>,
    %c0_6 = arith.constant 0 : index
    %c0_7 = arith.constant 0 : index
    %c0_8 = arith.constant 0 : index
    %c0_9 = arith.constant 0 : index
    %4 = vector.load %arg2[%c0_6, %c0_7, %c0_8, %c0_9] : memref<1x4x16x16xf32, #tpu.memory_space<vmem>>, vector<1x1x16x16xf32>
    %5 = vector.shape_cast %4 : vector<1x1x16x16xf32> to vector<16x16xf32>
    %c0_10 = arith.constant 0 : index
    %c1 = arith.constant 1 : index
    %c1_11 = arith.constant 1 : index
    %6 = vector.load %arg9[%c0_10, %c1, %c1_11] : memref<4x18x18xf32, #tpu.memory_space<vmem>>, vector<1x16x16xf32>
    %7 = vector.shape_cast %6 : vector<1x16x16xf32> to vector<16x16xf32>
    %8 = vector.shape_cast %5 : vector<16x16xf32> to vector<1x16x16xf32>
    tpu.vector_store %arg9[%c0_10, %c1, %c1_11], %8 {strides = array<i32>} : memref<4x18x18xf32, #tpu.memory_space<vmem>>, vector<1x16x16xf32>,
    %c0_12 = arith.constant 0 : index
    %c1_13 = arith.constant 1 : index
    %c0_14 = arith.constant 0 : index
    %c0_15 = arith.constant 0 : index
    %9 = vector.load %arg2[%c0_12, %c1_13, %c0_14, %c0_15] : memref<1x4x16x16xf32, #tpu.memory_space<vmem>>, vector<1x1x16x16xf32>
    %10 = vector.shape_cast %9 : vector<1x1x16x16xf32> to vector<16x16xf32>
    %c1_16 = arith.constant 1 : index
    %c1_17 = arith.constant 1 : index
    %c1_18 = arith.constant 1 : index
    %11 = vector.load %arg9[%c1_16, %c1_17, %c1_18] : memref<4x18x18xf32, #tpu.memory_space<vmem>>, vector<1x16x16xf32>
    %12 = vector.shape_cast %11 : vector<1x16x16xf32> to vector<16x16xf32>
    %13 = vector.shape_cast %10 : vector<16x16xf32> to vector<1x16x16xf32>
    tpu.vector_store %arg9[%c1_16, %c1_17, %c1_18], %13 {strides = array<i32>} : memref<4x18x18xf32, #tpu.memory_space<vmem>>, vector<1x16x16xf32>,
    %c0_19 = arith.constant 0 : index
    %c2 = arith.constant 2 : index
    %c0_20 = arith.constant 0 : index
    %c0_21 = arith.constant 0 : index
    %14 = vector.load %arg2[%c0_19, %c2, %c0_20, %c0_21] : memref<1x4x16x16xf32, #tpu.memory_space<vmem>>, vector<1x1x16x16xf32>
    %15 = vector.shape_cast %14 : vector<1x1x16x16xf32> to vector<16x16xf32>
    %c2_22 = arith.constant 2 : index
    %c1_23 = arith.constant 1 : index
    %c1_24 = arith.constant 1 : index
    %16 = vector.load %arg9[%c2_22, %c1_23, %c1_24] : memref<4x18x18xf32, #tpu.memory_space<vmem>>, vector<1x16x16xf32>
    %17 = vector.shape_cast %16 : vector<1x16x16xf32> to vector<16x16xf32>
    %18 = vector.shape_cast %15 : vector<16x16xf32> to vector<1x16x16xf32>
    tpu.vector_store %arg9[%c2_22, %c1_23, %c1_24], %18 {strides = array<i32>} : memref<4x18x18xf32, #tpu.memory_space<vmem>>, vector<1x16x16xf32>,
    %c0_25 = arith.constant 0 : index
    %c3 = arith.constant 3 : index
    %c0_26 = arith.constant 0 : index
    %c0_27 = arith.constant 0 : index
    %19 = vector.load %arg2[%c0_25, %c3, %c0_26, %c0_27] : memref<1x4x16x16xf32, #tpu.memory_space<vmem>>, vector<1x1x16x16xf32>
    %20 = vector.shape_cast %19 : vector<1x1x16x16xf32> to vector<16x16xf32>
    %c3_28 = arith.constant 3 : index
    %c1_29 = arith.constant 1 : index
    %c1_30 = arith.constant 1 : index
    %21 = vector.load %arg9[%c3_28, %c1_29, %c1_30] : memref<4x18x18xf32, #tpu.memory_space<vmem>>, vector<1x16x16xf32>
    %22 = vector.shape_cast %21 : vector<1x16x16xf32> to vector<16x16xf32>
    %23 = vector.shape_cast %20 : vector<16x16xf32> to vector<1x16x16xf32>
    tpu.vector_store %arg9[%c3_28, %c1_29, %c1_30], %23 {strides = array<i32>} : memref<4x18x18xf32, #tpu.memory_space<vmem>>, vector<1x16x16xf32>,
    %c0_31 = arith.constant 0 : index
    %c0_32 = arith.constant 0 : index
    %24 = vector.load %arg3[%c0_31, %c0_32] : memref<16x8xf32, #tpu.memory_space<vmem>>, vector<16x8xf32>
    %c0_33 = arith.constant 0 : index
    %c0_34 = arith.constant 0 : index
    %25 = vector.load %arg4[%c0_33, %c0_34] : memref<8x16xf32, #tpu.memory_space<vmem>>, vector<8x16xf32>
    %c0_35 = arith.constant 0 : index
    %c0_36 = arith.constant 0 : index
    %c0_37 = arith.constant 0 : index
    %c0_38 = arith.constant 0 : index
    %26 = vector.load %arg1[%c0_35, %c0_36, %c0_37, %c0_38] : memref<1x4x8x8xf32, #tpu.memory_space<vmem>>, vector<1x1x8x8xf32>
    %27 = vector.shape_cast %26 : vector<1x1x8x8xf32> to vector<8x8xf32>
    %cst_39 = arith.constant dense<0.000000e+00> : vector<8x16xf32>
    %28 = tpu.matmul %27, %25, %cst_39 {dimension_numbers = #tpu.dot_dimension_numbers<[1], [0], [0], [1], [0, 0, 1, 1], [], []>} : vector<8x8xf32>, vector<8x16xf32>, vector<8x16xf32> -> vector<8x16xf32>
    %cst_40 = arith.constant dense<0.000000e+00> : vector<16x16xf32>
    %29 = tpu.matmul %24, %28, %cst_40 {dimension_numbers = #tpu.dot_dimension_numbers<[1], [0], [0], [1], [0, 0, 1, 1], [], []>} : vector<16x8xf32>, vector<8x16xf32>, vector<16x16xf32> -> vector<16x16xf32>
    %c0_41 = arith.constant 0 : index
    %c1_42 = arith.constant 1 : index
    %c1_43 = arith.constant 1 : index
    %30 = vector.load %arg10[%c0_41, %c1_42, %c1_43] : memref<4x18x18xf32, #tpu.memory_space<vmem>>, vector<1x16x16xf32>
    %31 = vector.shape_cast %30 : vector<1x16x16xf32> to vector<16x16xf32>
    %32 = vector.shape_cast %29 : vector<16x16xf32> to vector<1x16x16xf32>
    tpu.vector_store %arg10[%c0_41, %c1_42, %c1_43], %32 {strides = array<i32>} : memref<4x18x18xf32, #tpu.memory_space<vmem>>, vector<1x16x16xf32>,
    %c0_44 = arith.constant 0 : index
    %c1_45 = arith.constant 1 : index
    %c0_46 = arith.constant 0 : index
    %c0_47 = arith.constant 0 : index
    %33 = vector.load %arg1[%c0_44, %c1_45, %c0_46, %c0_47] : memref<1x4x8x8xf32, #tpu.memory_space<vmem>>, vector<1x1x8x8xf32>
    %34 = vector.shape_cast %33 : vector<1x1x8x8xf32> to vector<8x8xf32>
    %cst_48 = arith.constant dense<0.000000e+00> : vector<8x16xf32>
    %35 = tpu.matmul %34, %25, %cst_48 {dimension_numbers = #tpu.dot_dimension_numbers<[1], [0], [0], [1], [0, 0, 1, 1], [], []>} : vector<8x8xf32>, vector<8x16xf32>, vector<8x16xf32> -> vector<8x16xf32>
    %cst_49 = arith.constant dense<0.000000e+00> : vector<16x16xf32>
    %36 = tpu.matmul %24, %35, %cst_49 {dimension_numbers = #tpu.dot_dimension_numbers<[1], [0], [0], [1], [0, 0, 1, 1], [], []>} : vector<16x8xf32>, vector<8x16xf32>, vector<16x16xf32> -> vector<16x16xf32>
    %c1_50 = arith.constant 1 : index
    %c1_51 = arith.constant 1 : index
    %c1_52 = arith.constant 1 : index
    %37 = vector.load %arg10[%c1_50, %c1_51, %c1_52] : memref<4x18x18xf32, #tpu.memory_space<vmem>>, vector<1x16x16xf32>
    %38 = vector.shape_cast %37 : vector<1x16x16xf32> to vector<16x16xf32>
    %39 = vector.shape_cast %36 : vector<16x16xf32> to vector<1x16x16xf32>
    tpu.vector_store %arg10[%c1_50, %c1_51, %c1_52], %39 {strides = array<i32>} : memref<4x18x18xf32, #tpu.memory_space<vmem>>, vector<1x16x16xf32>,
    %c0_53 = arith.constant 0 : index
    %c2_54 = arith.constant 2 : index
    %c0_55 = arith.constant 0 : index
    %c0_56 = arith.constant 0 : index
    %40 = vector.load %arg1[%c0_53, %c2_54, %c0_55, %c0_56] : memref<1x4x8x8xf32, #tpu.memory_space<vmem>>, vector<1x1x8x8xf32>
    %41 = vector.shape_cast %40 : vector<1x1x8x8xf32> to vector<8x8xf32>
    %cst_57 = arith.constant dense<0.000000e+00> : vector<8x16xf32>
    %42 = tpu.matmul %41, %25, %cst_57 {dimension_numbers = #tpu.dot_dimension_numbers<[1], [0], [0], [1], [0, 0, 1, 1], [], []>} : vector<8x8xf32>, vector<8x16xf32>, vector<8x16xf32> -> vector<8x16xf32>
    %cst_58 = arith.constant dense<0.000000e+00> : vector<16x16xf32>
    %43 = tpu.matmul %24, %42, %cst_58 {dimension_numbers = #tpu.dot_dimension_numbers<[1], [0], [0], [1], [0, 0, 1, 1], [], []>} : vector<16x8xf32>, vector<8x16xf32>, vector<16x16xf32> -> vector<16x16xf32>
    %c2_59 = arith.constant 2 : index
    %c1_60 = arith.constant 1 : index
    %c1_61 = arith.constant 1 : index
    %44 = vector.load %arg10[%c2_59, %c1_60, %c1_61] : memref<4x18x18xf32, #tpu.memory_space<vmem>>, vector<1x16x16xf32>
    %45 = vector.shape_cast %44 : vector<1x16x16xf32> to vector<16x16xf32>
    %46 = vector.shape_cast %43 : vector<16x16xf32> to vector<1x16x16xf32>
    tpu.vector_store %arg10[%c2_59, %c1_60, %c1_61], %46 {strides = array<i32>} : memref<4x18x18xf32, #tpu.memory_space<vmem>>, vector<1x16x16xf32>,
    %c0_62 = arith.constant 0 : index
    %c3_63 = arith.constant 3 : index
    %c0_64 = arith.constant 0 : index
    %c0_65 = arith.constant 0 : index
    %47 = vector.load %arg1[%c0_62, %c3_63, %c0_64, %c0_65] : memref<1x4x8x8xf32, #tpu.memory_space<vmem>>, vector<1x1x8x8xf32>
    %48 = vector.shape_cast %47 : vector<1x1x8x8xf32> to vector<8x8xf32>
    %cst_66 = arith.constant dense<0.000000e+00> : vector<8x16xf32>
    %49 = tpu.matmul %48, %25, %cst_66 {dimension_numbers = #tpu.dot_dimension_numbers<[1], [0], [0], [1], [0, 0, 1, 1], [], []>} : vector<8x8xf32>, vector<8x16xf32>, vector<8x16xf32> -> vector<8x16xf32>
    %cst_67 = arith.constant dense<0.000000e+00> : vector<16x16xf32>
    %50 = tpu.matmul %24, %49, %cst_67 {dimension_numbers = #tpu.dot_dimension_numbers<[1], [0], [0], [1], [0, 0, 1, 1], [], []>} : vector<16x8xf32>, vector<8x16xf32>, vector<16x16xf32> -> vector<16x16xf32>
    %c3_68 = arith.constant 3 : index
    %c1_69 = arith.constant 1 : index
    %c1_70 = arith.constant 1 : index
    %51 = vector.load %arg10[%c3_68, %c1_69, %c1_70] : memref<4x18x18xf32, #tpu.memory_space<vmem>>, vector<1x16x16xf32>
    %52 = vector.shape_cast %51 : vector<1x16x16xf32> to vector<16x16xf32>
    %53 = vector.shape_cast %50 : vector<16x16xf32> to vector<1x16x16xf32>
    tpu.vector_store %arg10[%c3_68, %c1_69, %c1_70], %53 {strides = array<i32>} : memref<4x18x18xf32, #tpu.memory_space<vmem>>, vector<1x16x16xf32>,
    %c0_71 = arith.constant 0 : index
    %54 = memref.load %arg7[%c0_71] : memref<4xf32, #tpu.memory_space<smem>>
    %55 = vector.broadcast %54 : f32 to vector<16x16xf32>
    %c1_72 = arith.constant 1 : index
    %56 = memref.load %arg7[%c1_72] : memref<4xf32, #tpu.memory_space<smem>>
    %57 = vector.broadcast %56 : f32 to vector<16x16xf32>
    %c2_73 = arith.constant 2 : index
    %58 = memref.load %arg7[%c2_73] : memref<4xf32, #tpu.memory_space<smem>>
    %59 = vector.broadcast %58 : f32 to vector<16x16xf32>
    %c3_74 = arith.constant 3 : index
    %60 = memref.load %arg7[%c3_74] : memref<4xf32, #tpu.memory_space<smem>>
    %61 = vector.broadcast %60 : f32 to vector<16x16xf32>
    %c0_75 = arith.constant 0 : index
    %c0_76 = arith.constant 0 : index
    %c0_77 = arith.constant 0 : index
    %62 = vector.load %arg9[%c0_75, %c0_76, %c0_77] : memref<4x18x18xf32, #tpu.memory_space<vmem>>, vector<1x16x16xf32>
    %63 = vector.shape_cast %62 : vector<1x16x16xf32> to vector<16x16xf32>
    %c0_78 = arith.constant 0 : index
    %64 = memref.load %arg5[%c0_78] : memref<144xf32, #tpu.memory_space<smem>>
    %65 = vector.broadcast %64 : f32 to vector<16x16xf32>
    %66 = arith.mulf %65, %63 : vector<16x16xf32>
    %67 = arith.addf %55, %66 : vector<16x16xf32>
    %c36 = arith.constant 36 : index
    %68 = memref.load %arg5[%c36] : memref<144xf32, #tpu.memory_space<smem>>
    %69 = vector.broadcast %68 : f32 to vector<16x16xf32>
    %70 = arith.mulf %69, %63 : vector<16x16xf32>
    %71 = arith.addf %57, %70 : vector<16x16xf32>
    %c72 = arith.constant 72 : index
    %72 = memref.load %arg5[%c72] : memref<144xf32, #tpu.memory_space<smem>>
    %73 = vector.broadcast %72 : f32 to vector<16x16xf32>
    %74 = arith.mulf %73, %63 : vector<16x16xf32>
    %75 = arith.addf %59, %74 : vector<16x16xf32>
    %c108 = arith.constant 108 : index
    %76 = memref.load %arg5[%c108] : memref<144xf32, #tpu.memory_space<smem>>
    %77 = vector.broadcast %76 : f32 to vector<16x16xf32>
    %78 = arith.mulf %77, %63 : vector<16x16xf32>
    %79 = arith.addf %61, %78 : vector<16x16xf32>
    %c0_79 = arith.constant 0 : index
    %c0_80 = arith.constant 0 : index
    %c1_81 = arith.constant 1 : index
    %80 = vector.load %arg9[%c0_79, %c0_80, %c1_81] : memref<4x18x18xf32, #tpu.memory_space<vmem>>, vector<1x16x16xf32>
    %81 = vector.shape_cast %80 : vector<1x16x16xf32> to vector<16x16xf32>
    %c1_82 = arith.constant 1 : index
    %82 = memref.load %arg5[%c1_82] : memref<144xf32, #tpu.memory_space<smem>>
    %83 = vector.broadcast %82 : f32 to vector<16x16xf32>
    %84 = arith.mulf %83, %81 : vector<16x16xf32>
    %85 = arith.addf %67, %84 : vector<16x16xf32>
    %c37 = arith.constant 37 : index
    %86 = memref.load %arg5[%c37] : memref<144xf32, #tpu.memory_space<smem>>
    %87 = vector.broadcast %86 : f32 to vector<16x16xf32>
    %88 = arith.mulf %87, %81 : vector<16x16xf32>
    %89 = arith.addf %71, %88 : vector<16x16xf32>
    %c73 = arith.constant 73 : index
    %90 = memref.load %arg5[%c73] : memref<144xf32, #tpu.memory_space<smem>>
    %91 = vector.broadcast %90 : f32 to vector<16x16xf32>
    %92 = arith.mulf %91, %81 : vector<16x16xf32>
    %93 = arith.addf %75, %92 : vector<16x16xf32>
    %c109 = arith.constant 109 : index
    %94 = memref.load %arg5[%c109] : memref<144xf32, #tpu.memory_space<smem>>
    %95 = vector.broadcast %94 : f32 to vector<16x16xf32>
    %96 = arith.mulf %95, %81 : vector<16x16xf32>
    %97 = arith.addf %79, %96 : vector<16x16xf32>
    %c0_83 = arith.constant 0 : index
    %c0_84 = arith.constant 0 : index
    %c2_85 = arith.constant 2 : index
    %98 = vector.load %arg9[%c0_83, %c0_84, %c2_85] : memref<4x18x18xf32, #tpu.memory_space<vmem>>, vector<1x16x16xf32>
    %99 = vector.shape_cast %98 : vector<1x16x16xf32> to vector<16x16xf32>
    %c2_86 = arith.constant 2 : index
    %100 = memref.load %arg5[%c2_86] : memref<144xf32, #tpu.memory_space<smem>>
    %101 = vector.broadcast %100 : f32 to vector<16x16xf32>
    %102 = arith.mulf %101, %99 : vector<16x16xf32>
    %103 = arith.addf %85, %102 : vector<16x16xf32>
    %c38 = arith.constant 38 : index
    %104 = memref.load %arg5[%c38] : memref<144xf32, #tpu.memory_space<smem>>
    %105 = vector.broadcast %104 : f32 to vector<16x16xf32>
    %106 = arith.mulf %105, %99 : vector<16x16xf32>
    %107 = arith.addf %89, %106 : vector<16x16xf32>
    %c74 = arith.constant 74 : index
    %108 = memref.load %arg5[%c74] : memref<144xf32, #tpu.memory_space<smem>>
    %109 = vector.broadcast %108 : f32 to vector<16x16xf32>
    %110 = arith.mulf %109, %99 : vector<16x16xf32>
    %111 = arith.addf %93, %110 : vector<16x16xf32>
    %c110 = arith.constant 110 : index
    %112 = memref.load %arg5[%c110] : memref<144xf32, #tpu.memory_space<smem>>
    %113 = vector.broadcast %112 : f32 to vector<16x16xf32>
    %114 = arith.mulf %113, %99 : vector<16x16xf32>
    %115 = arith.addf %97, %114 : vector<16x16xf32>
    %c0_87 = arith.constant 0 : index
    %c1_88 = arith.constant 1 : index
    %c0_89 = arith.constant 0 : index
    %116 = vector.load %arg9[%c0_87, %c1_88, %c0_89] : memref<4x18x18xf32, #tpu.memory_space<vmem>>, vector<1x16x16xf32>
    %117 = vector.shape_cast %116 : vector<1x16x16xf32> to vector<16x16xf32>
    %c3_90 = arith.constant 3 : index
    %118 = memref.load %arg5[%c3_90] : memref<144xf32, #tpu.memory_space<smem>>
    %119 = vector.broadcast %118 : f32 to vector<16x16xf32>
    %120 = arith.mulf %119, %117 : vector<16x16xf32>
    %121 = arith.addf %103, %120 : vector<16x16xf32>
    %c39 = arith.constant 39 : index
    %122 = memref.load %arg5[%c39] : memref<144xf32, #tpu.memory_space<smem>>
    %123 = vector.broadcast %122 : f32 to vector<16x16xf32>
    %124 = arith.mulf %123, %117 : vector<16x16xf32>
    %125 = arith.addf %107, %124 : vector<16x16xf32>
    %c75 = arith.constant 75 : index
    %126 = memref.load %arg5[%c75] : memref<144xf32, #tpu.memory_space<smem>>
    %127 = vector.broadcast %126 : f32 to vector<16x16xf32>
    %128 = arith.mulf %127, %117 : vector<16x16xf32>
    %129 = arith.addf %111, %128 : vector<16x16xf32>
    %c111 = arith.constant 111 : index
    %130 = memref.load %arg5[%c111] : memref<144xf32, #tpu.memory_space<smem>>
    %131 = vector.broadcast %130 : f32 to vector<16x16xf32>
    %132 = arith.mulf %131, %117 : vector<16x16xf32>
    %133 = arith.addf %115, %132 : vector<16x16xf32>
    %c0_91 = arith.constant 0 : index
    %c1_92 = arith.constant 1 : index
    %c1_93 = arith.constant 1 : index
    %134 = vector.load %arg9[%c0_91, %c1_92, %c1_93] : memref<4x18x18xf32, #tpu.memory_space<vmem>>, vector<1x16x16xf32>
    %135 = vector.shape_cast %134 : vector<1x16x16xf32> to vector<16x16xf32>
    %c4 = arith.constant 4 : index
    %136 = memref.load %arg5[%c4] : memref<144xf32, #tpu.memory_space<smem>>
    %137 = vector.broadcast %136 : f32 to vector<16x16xf32>
    %138 = arith.mulf %137, %135 : vector<16x16xf32>
    %139 = arith.addf %121, %138 : vector<16x16xf32>
    %c40 = arith.constant 40 : index
    %140 = memref.load %arg5[%c40] : memref<144xf32, #tpu.memory_space<smem>>
    %141 = vector.broadcast %140 : f32 to vector<16x16xf32>
    %142 = arith.mulf %141, %135 : vector<16x16xf32>
    %143 = arith.addf %125, %142 : vector<16x16xf32>
    %c76 = arith.constant 76 : index
    %144 = memref.load %arg5[%c76] : memref<144xf32, #tpu.memory_space<smem>>
    %145 = vector.broadcast %144 : f32 to vector<16x16xf32>
    %146 = arith.mulf %145, %135 : vector<16x16xf32>
    %147 = arith.addf %129, %146 : vector<16x16xf32>
    %c112 = arith.constant 112 : index
    %148 = memref.load %arg5[%c112] : memref<144xf32, #tpu.memory_space<smem>>
    %149 = vector.broadcast %148 : f32 to vector<16x16xf32>
    %150 = arith.mulf %149, %135 : vector<16x16xf32>
    %151 = arith.addf %133, %150 : vector<16x16xf32>
    %c0_94 = arith.constant 0 : index
    %c1_95 = arith.constant 1 : index
    %c2_96 = arith.constant 2 : index
    %152 = vector.load %arg9[%c0_94, %c1_95, %c2_96] : memref<4x18x18xf32, #tpu.memory_space<vmem>>, vector<1x16x16xf32>
    %153 = vector.shape_cast %152 : vector<1x16x16xf32> to vector<16x16xf32>
    %c5 = arith.constant 5 : index
    %154 = memref.load %arg5[%c5] : memref<144xf32, #tpu.memory_space<smem>>
    %155 = vector.broadcast %154 : f32 to vector<16x16xf32>
    %156 = arith.mulf %155, %153 : vector<16x16xf32>
    %157 = arith.addf %139, %156 : vector<16x16xf32>
    %c41 = arith.constant 41 : index
    %158 = memref.load %arg5[%c41] : memref<144xf32, #tpu.memory_space<smem>>
    %159 = vector.broadcast %158 : f32 to vector<16x16xf32>
    %160 = arith.mulf %159, %153 : vector<16x16xf32>
    %161 = arith.addf %143, %160 : vector<16x16xf32>
    %c77 = arith.constant 77 : index
    %162 = memref.load %arg5[%c77] : memref<144xf32, #tpu.memory_space<smem>>
    %163 = vector.broadcast %162 : f32 to vector<16x16xf32>
    %164 = arith.mulf %163, %153 : vector<16x16xf32>
    %165 = arith.addf %147, %164 : vector<16x16xf32>
    %c113 = arith.constant 113 : index
    %166 = memref.load %arg5[%c113] : memref<144xf32, #tpu.memory_space<smem>>
    %167 = vector.broadcast %166 : f32 to vector<16x16xf32>
    %168 = arith.mulf %167, %153 : vector<16x16xf32>
    %169 = arith.addf %151, %168 : vector<16x16xf32>
    %c0_97 = arith.constant 0 : index
    %c2_98 = arith.constant 2 : index
    %c0_99 = arith.constant 0 : index
    %170 = vector.load %arg9[%c0_97, %c2_98, %c0_99] : memref<4x18x18xf32, #tpu.memory_space<vmem>>, vector<1x16x16xf32>
    %171 = vector.shape_cast %170 : vector<1x16x16xf32> to vector<16x16xf32>
    %c6 = arith.constant 6 : index
    %172 = memref.load %arg5[%c6] : memref<144xf32, #tpu.memory_space<smem>>
    %173 = vector.broadcast %172 : f32 to vector<16x16xf32>
    %174 = arith.mulf %173, %171 : vector<16x16xf32>
    %175 = arith.addf %157, %174 : vector<16x16xf32>
    %c42 = arith.constant 42 : index
    %176 = memref.load %arg5[%c42] : memref<144xf32, #tpu.memory_space<smem>>
    %177 = vector.broadcast %176 : f32 to vector<16x16xf32>
    %178 = arith.mulf %177, %171 : vector<16x16xf32>
    %179 = arith.addf %161, %178 : vector<16x16xf32>
    %c78 = arith.constant 78 : index
    %180 = memref.load %arg5[%c78] : memref<144xf32, #tpu.memory_space<smem>>
    %181 = vector.broadcast %180 : f32 to vector<16x16xf32>
    %182 = arith.mulf %181, %171 : vector<16x16xf32>
    %183 = arith.addf %165, %182 : vector<16x16xf32>
    %c114 = arith.constant 114 : index
    %184 = memref.load %arg5[%c114] : memref<144xf32, #tpu.memory_space<smem>>
    %185 = vector.broadcast %184 : f32 to vector<16x16xf32>
    %186 = arith.mulf %185, %171 : vector<16x16xf32>
    %187 = arith.addf %169, %186 : vector<16x16xf32>
    %c0_100 = arith.constant 0 : index
    %c2_101 = arith.constant 2 : index
    %c1_102 = arith.constant 1 : index
    %188 = vector.load %arg9[%c0_100, %c2_101, %c1_102] : memref<4x18x18xf32, #tpu.memory_space<vmem>>, vector<1x16x16xf32>
    %189 = vector.shape_cast %188 : vector<1x16x16xf32> to vector<16x16xf32>
    %c7 = arith.constant 7 : index
    %190 = memref.load %arg5[%c7] : memref<144xf32, #tpu.memory_space<smem>>
    %191 = vector.broadcast %190 : f32 to vector<16x16xf32>
    %192 = arith.mulf %191, %189 : vector<16x16xf32>
    %193 = arith.addf %175, %192 : vector<16x16xf32>
    %c43 = arith.constant 43 : index
    %194 = memref.load %arg5[%c43] : memref<144xf32, #tpu.memory_space<smem>>
    %195 = vector.broadcast %194 : f32 to vector<16x16xf32>
    %196 = arith.mulf %195, %189 : vector<16x16xf32>
    %197 = arith.addf %179, %196 : vector<16x16xf32>
    %c79 = arith.constant 79 : index
    %198 = memref.load %arg5[%c79] : memref<144xf32, #tpu.memory_space<smem>>
    %199 = vector.broadcast %198 : f32 to vector<16x16xf32>
    %200 = arith.mulf %199, %189 : vector<16x16xf32>
    %201 = arith.addf %183, %200 : vector<16x16xf32>
    %c115 = arith.constant 115 : index
    %202 = memref.load %arg5[%c115] : memref<144xf32, #tpu.memory_space<smem>>
    %203 = vector.broadcast %202 : f32 to vector<16x16xf32>
    %204 = arith.mulf %203, %189 : vector<16x16xf32>
    %205 = arith.addf %187, %204 : vector<16x16xf32>
    %c0_103 = arith.constant 0 : index
    %c2_104 = arith.constant 2 : index
    %c2_105 = arith.constant 2 : index
    %206 = vector.load %arg9[%c0_103, %c2_104, %c2_105] : memref<4x18x18xf32, #tpu.memory_space<vmem>>, vector<1x16x16xf32>
    %207 = vector.shape_cast %206 : vector<1x16x16xf32> to vector<16x16xf32>
    %c8 = arith.constant 8 : index
    %208 = memref.load %arg5[%c8] : memref<144xf32, #tpu.memory_space<smem>>
    %209 = vector.broadcast %208 : f32 to vector<16x16xf32>
    %210 = arith.mulf %209, %207 : vector<16x16xf32>
    %211 = arith.addf %193, %210 : vector<16x16xf32>
    %c44 = arith.constant 44 : index
    %212 = memref.load %arg5[%c44] : memref<144xf32, #tpu.memory_space<smem>>
    %213 = vector.broadcast %212 : f32 to vector<16x16xf32>
    %214 = arith.mulf %213, %207 : vector<16x16xf32>
    %215 = arith.addf %197, %214 : vector<16x16xf32>
    %c80 = arith.constant 80 : index
    %216 = memref.load %arg5[%c80] : memref<144xf32, #tpu.memory_space<smem>>
    %217 = vector.broadcast %216 : f32 to vector<16x16xf32>
    %218 = arith.mulf %217, %207 : vector<16x16xf32>
    %219 = arith.addf %201, %218 : vector<16x16xf32>
    %c116 = arith.constant 116 : index
    %220 = memref.load %arg5[%c116] : memref<144xf32, #tpu.memory_space<smem>>
    %221 = vector.broadcast %220 : f32 to vector<16x16xf32>
    %222 = arith.mulf %221, %207 : vector<16x16xf32>
    %223 = arith.addf %205, %222 : vector<16x16xf32>
    %c1_106 = arith.constant 1 : index
    %c0_107 = arith.constant 0 : index
    %c0_108 = arith.constant 0 : index
    %224 = vector.load %arg9[%c1_106, %c0_107, %c0_108] : memref<4x18x18xf32, #tpu.memory_space<vmem>>, vector<1x16x16xf32>
    %225 = vector.shape_cast %224 : vector<1x16x16xf32> to vector<16x16xf32>
    %c9 = arith.constant 9 : index
    %226 = memref.load %arg5[%c9] : memref<144xf32, #tpu.memory_space<smem>>
    %227 = vector.broadcast %226 : f32 to vector<16x16xf32>
    %228 = arith.mulf %227, %225 : vector<16x16xf32>
    %229 = arith.addf %211, %228 : vector<16x16xf32>
    %c45 = arith.constant 45 : index
    %230 = memref.load %arg5[%c45] : memref<144xf32, #tpu.memory_space<smem>>
    %231 = vector.broadcast %230 : f32 to vector<16x16xf32>
    %232 = arith.mulf %231, %225 : vector<16x16xf32>
    %233 = arith.addf %215, %232 : vector<16x16xf32>
    %c81 = arith.constant 81 : index
    %234 = memref.load %arg5[%c81] : memref<144xf32, #tpu.memory_space<smem>>
    %235 = vector.broadcast %234 : f32 to vector<16x16xf32>
    %236 = arith.mulf %235, %225 : vector<16x16xf32>
    %237 = arith.addf %219, %236 : vector<16x16xf32>
    %c117 = arith.constant 117 : index
    %238 = memref.load %arg5[%c117] : memref<144xf32, #tpu.memory_space<smem>>
    %239 = vector.broadcast %238 : f32 to vector<16x16xf32>
    %240 = arith.mulf %239, %225 : vector<16x16xf32>
    %241 = arith.addf %223, %240 : vector<16x16xf32>
    %c1_109 = arith.constant 1 : index
    %c0_110 = arith.constant 0 : index
    %c1_111 = arith.constant 1 : index
    %242 = vector.load %arg9[%c1_109, %c0_110, %c1_111] : memref<4x18x18xf32, #tpu.memory_space<vmem>>, vector<1x16x16xf32>
    %243 = vector.shape_cast %242 : vector<1x16x16xf32> to vector<16x16xf32>
    %c10 = arith.constant 10 : index
    %244 = memref.load %arg5[%c10] : memref<144xf32, #tpu.memory_space<smem>>
    %245 = vector.broadcast %244 : f32 to vector<16x16xf32>
    %246 = arith.mulf %245, %243 : vector<16x16xf32>
    %247 = arith.addf %229, %246 : vector<16x16xf32>
    %c46 = arith.constant 46 : index
    %248 = memref.load %arg5[%c46] : memref<144xf32, #tpu.memory_space<smem>>
    %249 = vector.broadcast %248 : f32 to vector<16x16xf32>
    %250 = arith.mulf %249, %243 : vector<16x16xf32>
    %251 = arith.addf %233, %250 : vector<16x16xf32>
    %c82 = arith.constant 82 : index
    %252 = memref.load %arg5[%c82] : memref<144xf32, #tpu.memory_space<smem>>
    %253 = vector.broadcast %252 : f32 to vector<16x16xf32>
    %254 = arith.mulf %253, %243 : vector<16x16xf32>
    %255 = arith.addf %237, %254 : vector<16x16xf32>
    %c118 = arith.constant 118 : index
    %256 = memref.load %arg5[%c118] : memref<144xf32, #tpu.memory_space<smem>>
    %257 = vector.broadcast %256 : f32 to vector<16x16xf32>
    %258 = arith.mulf %257, %243 : vector<16x16xf32>
    %259 = arith.addf %241, %258 : vector<16x16xf32>
    %c1_112 = arith.constant 1 : index
    %c0_113 = arith.constant 0 : index
    %c2_114 = arith.constant 2 : index
    %260 = vector.load %arg9[%c1_112, %c0_113, %c2_114] : memref<4x18x18xf32, #tpu.memory_space<vmem>>, vector<1x16x16xf32>
    %261 = vector.shape_cast %260 : vector<1x16x16xf32> to vector<16x16xf32>
    %c11 = arith.constant 11 : index
    %262 = memref.load %arg5[%c11] : memref<144xf32, #tpu.memory_space<smem>>
    %263 = vector.broadcast %262 : f32 to vector<16x16xf32>
    %264 = arith.mulf %263, %261 : vector<16x16xf32>
    %265 = arith.addf %247, %264 : vector<16x16xf32>
    %c47 = arith.constant 47 : index
    %266 = memref.load %arg5[%c47] : memref<144xf32, #tpu.memory_space<smem>>
    %267 = vector.broadcast %266 : f32 to vector<16x16xf32>
    %268 = arith.mulf %267, %261 : vector<16x16xf32>
    %269 = arith.addf %251, %268 : vector<16x16xf32>
    %c83 = arith.constant 83 : index
    %270 = memref.load %arg5[%c83] : memref<144xf32, #tpu.memory_space<smem>>
    %271 = vector.broadcast %270 : f32 to vector<16x16xf32>
    %272 = arith.mulf %271, %261 : vector<16x16xf32>
    %273 = arith.addf %255, %272 : vector<16x16xf32>
    %c119 = arith.constant 119 : index
    %274 = memref.load %arg5[%c119] : memref<144xf32, #tpu.memory_space<smem>>
    %275 = vector.broadcast %274 : f32 to vector<16x16xf32>
    %276 = arith.mulf %275, %261 : vector<16x16xf32>
    %277 = arith.addf %259, %276 : vector<16x16xf32>
    %c1_115 = arith.constant 1 : index
    %c1_116 = arith.constant 1 : index
    %c0_117 = arith.constant 0 : index
    %278 = vector.load %arg9[%c1_115, %c1_116, %c0_117] : memref<4x18x18xf32, #tpu.memory_space<vmem>>, vector<1x16x16xf32>
    %279 = vector.shape_cast %278 : vector<1x16x16xf32> to vector<16x16xf32>
    %c12 = arith.constant 12 : index
    %280 = memref.load %arg5[%c12] : memref<144xf32, #tpu.memory_space<smem>>
    %281 = vector.broadcast %280 : f32 to vector<16x16xf32>
    %282 = arith.mulf %281, %279 : vector<16x16xf32>
    %283 = arith.addf %265, %282 : vector<16x16xf32>
    %c48 = arith.constant 48 : index
    %284 = memref.load %arg5[%c48] : memref<144xf32, #tpu.memory_space<smem>>
    %285 = vector.broadcast %284 : f32 to vector<16x16xf32>
    %286 = arith.mulf %285, %279 : vector<16x16xf32>
    %287 = arith.addf %269, %286 : vector<16x16xf32>
    %c84 = arith.constant 84 : index
    %288 = memref.load %arg5[%c84] : memref<144xf32, #tpu.memory_space<smem>>
    %289 = vector.broadcast %288 : f32 to vector<16x16xf32>
    %290 = arith.mulf %289, %279 : vector<16x16xf32>
    %291 = arith.addf %273, %290 : vector<16x16xf32>
    %c120 = arith.constant 120 : index
    %292 = memref.load %arg5[%c120] : memref<144xf32, #tpu.memory_space<smem>>
    %293 = vector.broadcast %292 : f32 to vector<16x16xf32>
    %294 = arith.mulf %293, %279 : vector<16x16xf32>
    %295 = arith.addf %277, %294 : vector<16x16xf32>
    %c1_118 = arith.constant 1 : index
    %c1_119 = arith.constant 1 : index
    %c1_120 = arith.constant 1 : index
    %296 = vector.load %arg9[%c1_118, %c1_119, %c1_120] : memref<4x18x18xf32, #tpu.memory_space<vmem>>, vector<1x16x16xf32>
    %297 = vector.shape_cast %296 : vector<1x16x16xf32> to vector<16x16xf32>
    %c13 = arith.constant 13 : index
    %298 = memref.load %arg5[%c13] : memref<144xf32, #tpu.memory_space<smem>>
    %299 = vector.broadcast %298 : f32 to vector<16x16xf32>
    %300 = arith.mulf %299, %297 : vector<16x16xf32>
    %301 = arith.addf %283, %300 : vector<16x16xf32>
    %c49 = arith.constant 49 : index
    %302 = memref.load %arg5[%c49] : memref<144xf32, #tpu.memory_space<smem>>
    %303 = vector.broadcast %302 : f32 to vector<16x16xf32>
    %304 = arith.mulf %303, %297 : vector<16x16xf32>
    %305 = arith.addf %287, %304 : vector<16x16xf32>
    %c85 = arith.constant 85 : index
    %306 = memref.load %arg5[%c85] : memref<144xf32, #tpu.memory_space<smem>>
    %307 = vector.broadcast %306 : f32 to vector<16x16xf32>
    %308 = arith.mulf %307, %297 : vector<16x16xf32>
    %309 = arith.addf %291, %308 : vector<16x16xf32>
    %c121 = arith.constant 121 : index
    %310 = memref.load %arg5[%c121] : memref<144xf32, #tpu.memory_space<smem>>
    %311 = vector.broadcast %310 : f32 to vector<16x16xf32>
    %312 = arith.mulf %311, %297 : vector<16x16xf32>
    %313 = arith.addf %295, %312 : vector<16x16xf32>
    %c1_121 = arith.constant 1 : index
    %c1_122 = arith.constant 1 : index
    %c2_123 = arith.constant 2 : index
    %314 = vector.load %arg9[%c1_121, %c1_122, %c2_123] : memref<4x18x18xf32, #tpu.memory_space<vmem>>, vector<1x16x16xf32>
    %315 = vector.shape_cast %314 : vector<1x16x16xf32> to vector<16x16xf32>
    %c14 = arith.constant 14 : index
    %316 = memref.load %arg5[%c14] : memref<144xf32, #tpu.memory_space<smem>>
    %317 = vector.broadcast %316 : f32 to vector<16x16xf32>
    %318 = arith.mulf %317, %315 : vector<16x16xf32>
    %319 = arith.addf %301, %318 : vector<16x16xf32>
    %c50 = arith.constant 50 : index
    %320 = memref.load %arg5[%c50] : memref<144xf32, #tpu.memory_space<smem>>
    %321 = vector.broadcast %320 : f32 to vector<16x16xf32>
    %322 = arith.mulf %321, %315 : vector<16x16xf32>
    %323 = arith.addf %305, %322 : vector<16x16xf32>
    %c86 = arith.constant 86 : index
    %324 = memref.load %arg5[%c86] : memref<144xf32, #tpu.memory_space<smem>>
    %325 = vector.broadcast %324 : f32 to vector<16x16xf32>
    %326 = arith.mulf %325, %315 : vector<16x16xf32>
    %327 = arith.addf %309, %326 : vector<16x16xf32>
    %c122 = arith.constant 122 : index
    %328 = memref.load %arg5[%c122] : memref<144xf32, #tpu.memory_space<smem>>
    %329 = vector.broadcast %328 : f32 to vector<16x16xf32>
    %330 = arith.mulf %329, %315 : vector<16x16xf32>
    %331 = arith.addf %313, %330 : vector<16x16xf32>
    %c1_124 = arith.constant 1 : index
    %c2_125 = arith.constant 2 : index
    %c0_126 = arith.constant 0 : index
    %332 = vector.load %arg9[%c1_124, %c2_125, %c0_126] : memref<4x18x18xf32, #tpu.memory_space<vmem>>, vector<1x16x16xf32>
    %333 = vector.shape_cast %332 : vector<1x16x16xf32> to vector<16x16xf32>
    %c15 = arith.constant 15 : index
    %334 = memref.load %arg5[%c15] : memref<144xf32, #tpu.memory_space<smem>>
    %335 = vector.broadcast %334 : f32 to vector<16x16xf32>
    %336 = arith.mulf %335, %333 : vector<16x16xf32>
    %337 = arith.addf %319, %336 : vector<16x16xf32>
    %c51 = arith.constant 51 : index
    %338 = memref.load %arg5[%c51] : memref<144xf32, #tpu.memory_space<smem>>
    %339 = vector.broadcast %338 : f32 to vector<16x16xf32>
    %340 = arith.mulf %339, %333 : vector<16x16xf32>
    %341 = arith.addf %323, %340 : vector<16x16xf32>
    %c87 = arith.constant 87 : index
    %342 = memref.load %arg5[%c87] : memref<144xf32, #tpu.memory_space<smem>>
    %343 = vector.broadcast %342 : f32 to vector<16x16xf32>
    %344 = arith.mulf %343, %333 : vector<16x16xf32>
    %345 = arith.addf %327, %344 : vector<16x16xf32>
    %c123 = arith.constant 123 : index
    %346 = memref.load %arg5[%c123] : memref<144xf32, #tpu.memory_space<smem>>
    %347 = vector.broadcast %346 : f32 to vector<16x16xf32>
    %348 = arith.mulf %347, %333 : vector<16x16xf32>
    %349 = arith.addf %331, %348 : vector<16x16xf32>
    %c1_127 = arith.constant 1 : index
    %c2_128 = arith.constant 2 : index
    %c1_129 = arith.constant 1 : index
    %350 = vector.load %arg9[%c1_127, %c2_128, %c1_129] : memref<4x18x18xf32, #tpu.memory_space<vmem>>, vector<1x16x16xf32>
    %351 = vector.shape_cast %350 : vector<1x16x16xf32> to vector<16x16xf32>
    %c16 = arith.constant 16 : index
    %352 = memref.load %arg5[%c16] : memref<144xf32, #tpu.memory_space<smem>>
    %353 = vector.broadcast %352 : f32 to vector<16x16xf32>
    %354 = arith.mulf %353, %351 : vector<16x16xf32>
    %355 = arith.addf %337, %354 : vector<16x16xf32>
    %c52 = arith.constant 52 : index
    %356 = memref.load %arg5[%c52] : memref<144xf32, #tpu.memory_space<smem>>
    %357 = vector.broadcast %356 : f32 to vector<16x16xf32>
    %358 = arith.mulf %357, %351 : vector<16x16xf32>
    %359 = arith.addf %341, %358 : vector<16x16xf32>
    %c88 = arith.constant 88 : index
    %360 = memref.load %arg5[%c88] : memref<144xf32, #tpu.memory_space<smem>>
    %361 = vector.broadcast %360 : f32 to vector<16x16xf32>
    %362 = arith.mulf %361, %351 : vector<16x16xf32>
    %363 = arith.addf %345, %362 : vector<16x16xf32>
    %c124 = arith.constant 124 : index
    %364 = memref.load %arg5[%c124] : memref<144xf32, #tpu.memory_space<smem>>
    %365 = vector.broadcast %364 : f32 to vector<16x16xf32>
    %366 = arith.mulf %365, %351 : vector<16x16xf32>
    %367 = arith.addf %349, %366 : vector<16x16xf32>
    %c1_130 = arith.constant 1 : index
    %c2_131 = arith.constant 2 : index
    %c2_132 = arith.constant 2 : index
    %368 = vector.load %arg9[%c1_130, %c2_131, %c2_132] : memref<4x18x18xf32, #tpu.memory_space<vmem>>, vector<1x16x16xf32>
    %369 = vector.shape_cast %368 : vector<1x16x16xf32> to vector<16x16xf32>
    %c17 = arith.constant 17 : index
    %370 = memref.load %arg5[%c17] : memref<144xf32, #tpu.memory_space<smem>>
    %371 = vector.broadcast %370 : f32 to vector<16x16xf32>
    %372 = arith.mulf %371, %369 : vector<16x16xf32>
    %373 = arith.addf %355, %372 : vector<16x16xf32>
    %c53 = arith.constant 53 : index
    %374 = memref.load %arg5[%c53] : memref<144xf32, #tpu.memory_space<smem>>
    %375 = vector.broadcast %374 : f32 to vector<16x16xf32>
    %376 = arith.mulf %375, %369 : vector<16x16xf32>
    %377 = arith.addf %359, %376 : vector<16x16xf32>
    %c89 = arith.constant 89 : index
    %378 = memref.load %arg5[%c89] : memref<144xf32, #tpu.memory_space<smem>>
    %379 = vector.broadcast %378 : f32 to vector<16x16xf32>
    %380 = arith.mulf %379, %369 : vector<16x16xf32>
    %381 = arith.addf %363, %380 : vector<16x16xf32>
    %c125 = arith.constant 125 : index
    %382 = memref.load %arg5[%c125] : memref<144xf32, #tpu.memory_space<smem>>
    %383 = vector.broadcast %382 : f32 to vector<16x16xf32>
    %384 = arith.mulf %383, %369 : vector<16x16xf32>
    %385 = arith.addf %367, %384 : vector<16x16xf32>
    %c2_133 = arith.constant 2 : index
    %c0_134 = arith.constant 0 : index
    %c0_135 = arith.constant 0 : index
    %386 = vector.load %arg9[%c2_133, %c0_134, %c0_135] : memref<4x18x18xf32, #tpu.memory_space<vmem>>, vector<1x16x16xf32>
    %387 = vector.shape_cast %386 : vector<1x16x16xf32> to vector<16x16xf32>
    %c18 = arith.constant 18 : index
    %388 = memref.load %arg5[%c18] : memref<144xf32, #tpu.memory_space<smem>>
    %389 = vector.broadcast %388 : f32 to vector<16x16xf32>
    %390 = arith.mulf %389, %387 : vector<16x16xf32>
    %391 = arith.addf %373, %390 : vector<16x16xf32>
    %c54 = arith.constant 54 : index
    %392 = memref.load %arg5[%c54] : memref<144xf32, #tpu.memory_space<smem>>
    %393 = vector.broadcast %392 : f32 to vector<16x16xf32>
    %394 = arith.mulf %393, %387 : vector<16x16xf32>
    %395 = arith.addf %377, %394 : vector<16x16xf32>
    %c90 = arith.constant 90 : index
    %396 = memref.load %arg5[%c90] : memref<144xf32, #tpu.memory_space<smem>>
    %397 = vector.broadcast %396 : f32 to vector<16x16xf32>
    %398 = arith.mulf %397, %387 : vector<16x16xf32>
    %399 = arith.addf %381, %398 : vector<16x16xf32>
    %c126 = arith.constant 126 : index
    %400 = memref.load %arg5[%c126] : memref<144xf32, #tpu.memory_space<smem>>
    %401 = vector.broadcast %400 : f32 to vector<16x16xf32>
    %402 = arith.mulf %401, %387 : vector<16x16xf32>
    %403 = arith.addf %385, %402 : vector<16x16xf32>
    %c2_136 = arith.constant 2 : index
    %c0_137 = arith.constant 0 : index
    %c1_138 = arith.constant 1 : index
    %404 = vector.load %arg9[%c2_136, %c0_137, %c1_138] : memref<4x18x18xf32, #tpu.memory_space<vmem>>, vector<1x16x16xf32>
    %405 = vector.shape_cast %404 : vector<1x16x16xf32> to vector<16x16xf32>
    %c19 = arith.constant 19 : index
    %406 = memref.load %arg5[%c19] : memref<144xf32, #tpu.memory_space<smem>>
    %407 = vector.broadcast %406 : f32 to vector<16x16xf32>
    %408 = arith.mulf %407, %405 : vector<16x16xf32>
    %409 = arith.addf %391, %408 : vector<16x16xf32>
    %c55 = arith.constant 55 : index
    %410 = memref.load %arg5[%c55] : memref<144xf32, #tpu.memory_space<smem>>
    %411 = vector.broadcast %410 : f32 to vector<16x16xf32>
    %412 = arith.mulf %411, %405 : vector<16x16xf32>
    %413 = arith.addf %395, %412 : vector<16x16xf32>
    %c91 = arith.constant 91 : index
    %414 = memref.load %arg5[%c91] : memref<144xf32, #tpu.memory_space<smem>>
    %415 = vector.broadcast %414 : f32 to vector<16x16xf32>
    %416 = arith.mulf %415, %405 : vector<16x16xf32>
    %417 = arith.addf %399, %416 : vector<16x16xf32>
    %c127 = arith.constant 127 : index
    %418 = memref.load %arg5[%c127] : memref<144xf32, #tpu.memory_space<smem>>
    %419 = vector.broadcast %418 : f32 to vector<16x16xf32>
    %420 = arith.mulf %419, %405 : vector<16x16xf32>
    %421 = arith.addf %403, %420 : vector<16x16xf32>
    %c2_139 = arith.constant 2 : index
    %c0_140 = arith.constant 0 : index
    %c2_141 = arith.constant 2 : index
    %422 = vector.load %arg9[%c2_139, %c0_140, %c2_141] : memref<4x18x18xf32, #tpu.memory_space<vmem>>, vector<1x16x16xf32>
    %423 = vector.shape_cast %422 : vector<1x16x16xf32> to vector<16x16xf32>
    %c20 = arith.constant 20 : index
    %424 = memref.load %arg5[%c20] : memref<144xf32, #tpu.memory_space<smem>>
    %425 = vector.broadcast %424 : f32 to vector<16x16xf32>
    %426 = arith.mulf %425, %423 : vector<16x16xf32>
    %427 = arith.addf %409, %426 : vector<16x16xf32>
    %c56 = arith.constant 56 : index
    %428 = memref.load %arg5[%c56] : memref<144xf32, #tpu.memory_space<smem>>
    %429 = vector.broadcast %428 : f32 to vector<16x16xf32>
    %430 = arith.mulf %429, %423 : vector<16x16xf32>
    %431 = arith.addf %413, %430 : vector<16x16xf32>
    %c92 = arith.constant 92 : index
    %432 = memref.load %arg5[%c92] : memref<144xf32, #tpu.memory_space<smem>>
    %433 = vector.broadcast %432 : f32 to vector<16x16xf32>
    %434 = arith.mulf %433, %423 : vector<16x16xf32>
    %435 = arith.addf %417, %434 : vector<16x16xf32>
    %c128 = arith.constant 128 : index
    %436 = memref.load %arg5[%c128] : memref<144xf32, #tpu.memory_space<smem>>
    %437 = vector.broadcast %436 : f32 to vector<16x16xf32>
    %438 = arith.mulf %437, %423 : vector<16x16xf32>
    %439 = arith.addf %421, %438 : vector<16x16xf32>
    %c2_142 = arith.constant 2 : index
    %c1_143 = arith.constant 1 : index
    %c0_144 = arith.constant 0 : index
    %440 = vector.load %arg9[%c2_142, %c1_143, %c0_144] : memref<4x18x18xf32, #tpu.memory_space<vmem>>, vector<1x16x16xf32>
    %441 = vector.shape_cast %440 : vector<1x16x16xf32> to vector<16x16xf32>
    %c21 = arith.constant 21 : index
    %442 = memref.load %arg5[%c21] : memref<144xf32, #tpu.memory_space<smem>>
    %443 = vector.broadcast %442 : f32 to vector<16x16xf32>
    %444 = arith.mulf %443, %441 : vector<16x16xf32>
    %445 = arith.addf %427, %444 : vector<16x16xf32>
    %c57 = arith.constant 57 : index
    %446 = memref.load %arg5[%c57] : memref<144xf32, #tpu.memory_space<smem>>
    %447 = vector.broadcast %446 : f32 to vector<16x16xf32>
    %448 = arith.mulf %447, %441 : vector<16x16xf32>
    %449 = arith.addf %431, %448 : vector<16x16xf32>
    %c93 = arith.constant 93 : index
    %450 = memref.load %arg5[%c93] : memref<144xf32, #tpu.memory_space<smem>>
    %451 = vector.broadcast %450 : f32 to vector<16x16xf32>
    %452 = arith.mulf %451, %441 : vector<16x16xf32>
    %453 = arith.addf %435, %452 : vector<16x16xf32>
    %c129 = arith.constant 129 : index
    %454 = memref.load %arg5[%c129] : memref<144xf32, #tpu.memory_space<smem>>
    %455 = vector.broadcast %454 : f32 to vector<16x16xf32>
    %456 = arith.mulf %455, %441 : vector<16x16xf32>
    %457 = arith.addf %439, %456 : vector<16x16xf32>
    %c2_145 = arith.constant 2 : index
    %c1_146 = arith.constant 1 : index
    %c1_147 = arith.constant 1 : index
    %458 = vector.load %arg9[%c2_145, %c1_146, %c1_147] : memref<4x18x18xf32, #tpu.memory_space<vmem>>, vector<1x16x16xf32>
    %459 = vector.shape_cast %458 : vector<1x16x16xf32> to vector<16x16xf32>
    %c22 = arith.constant 22 : index
    %460 = memref.load %arg5[%c22] : memref<144xf32, #tpu.memory_space<smem>>
    %461 = vector.broadcast %460 : f32 to vector<16x16xf32>
    %462 = arith.mulf %461, %459 : vector<16x16xf32>
    %463 = arith.addf %445, %462 : vector<16x16xf32>
    %c58 = arith.constant 58 : index
    %464 = memref.load %arg5[%c58] : memref<144xf32, #tpu.memory_space<smem>>
    %465 = vector.broadcast %464 : f32 to vector<16x16xf32>
    %466 = arith.mulf %465, %459 : vector<16x16xf32>
    %467 = arith.addf %449, %466 : vector<16x16xf32>
    %c94 = arith.constant 94 : index
    %468 = memref.load %arg5[%c94] : memref<144xf32, #tpu.memory_space<smem>>
    %469 = vector.broadcast %468 : f32 to vector<16x16xf32>
    %470 = arith.mulf %469, %459 : vector<16x16xf32>
    %471 = arith.addf %453, %470 : vector<16x16xf32>
    %c130 = arith.constant 130 : index
    %472 = memref.load %arg5[%c130] : memref<144xf32, #tpu.memory_space<smem>>
    %473 = vector.broadcast %472 : f32 to vector<16x16xf32>
    %474 = arith.mulf %473, %459 : vector<16x16xf32>
    %475 = arith.addf %457, %474 : vector<16x16xf32>
    %c2_148 = arith.constant 2 : index
    %c1_149 = arith.constant 1 : index
    %c2_150 = arith.constant 2 : index
    %476 = vector.load %arg9[%c2_148, %c1_149, %c2_150] : memref<4x18x18xf32, #tpu.memory_space<vmem>>, vector<1x16x16xf32>
    %477 = vector.shape_cast %476 : vector<1x16x16xf32> to vector<16x16xf32>
    %c23 = arith.constant 23 : index
    %478 = memref.load %arg5[%c23] : memref<144xf32, #tpu.memory_space<smem>>
    %479 = vector.broadcast %478 : f32 to vector<16x16xf32>
    %480 = arith.mulf %479, %477 : vector<16x16xf32>
    %481 = arith.addf %463, %480 : vector<16x16xf32>
    %c59 = arith.constant 59 : index
    %482 = memref.load %arg5[%c59] : memref<144xf32, #tpu.memory_space<smem>>
    %483 = vector.broadcast %482 : f32 to vector<16x16xf32>
    %484 = arith.mulf %483, %477 : vector<16x16xf32>
    %485 = arith.addf %467, %484 : vector<16x16xf32>
    %c95 = arith.constant 95 : index
    %486 = memref.load %arg5[%c95] : memref<144xf32, #tpu.memory_space<smem>>
    %487 = vector.broadcast %486 : f32 to vector<16x16xf32>
    %488 = arith.mulf %487, %477 : vector<16x16xf32>
    %489 = arith.addf %471, %488 : vector<16x16xf32>
    %c131 = arith.constant 131 : index
    %490 = memref.load %arg5[%c131] : memref<144xf32, #tpu.memory_space<smem>>
    %491 = vector.broadcast %490 : f32 to vector<16x16xf32>
    %492 = arith.mulf %491, %477 : vector<16x16xf32>
    %493 = arith.addf %475, %492 : vector<16x16xf32>
    %c2_151 = arith.constant 2 : index
    %c2_152 = arith.constant 2 : index
    %c0_153 = arith.constant 0 : index
    %494 = vector.load %arg9[%c2_151, %c2_152, %c0_153] : memref<4x18x18xf32, #tpu.memory_space<vmem>>, vector<1x16x16xf32>
    %495 = vector.shape_cast %494 : vector<1x16x16xf32> to vector<16x16xf32>
    %c24 = arith.constant 24 : index
    %496 = memref.load %arg5[%c24] : memref<144xf32, #tpu.memory_space<smem>>
    %497 = vector.broadcast %496 : f32 to vector<16x16xf32>
    %498 = arith.mulf %497, %495 : vector<16x16xf32>
    %499 = arith.addf %481, %498 : vector<16x16xf32>
    %c60 = arith.constant 60 : index
    %500 = memref.load %arg5[%c60] : memref<144xf32, #tpu.memory_space<smem>>
    %501 = vector.broadcast %500 : f32 to vector<16x16xf32>
    %502 = arith.mulf %501, %495 : vector<16x16xf32>
    %503 = arith.addf %485, %502 : vector<16x16xf32>
    %c96 = arith.constant 96 : index
    %504 = memref.load %arg5[%c96] : memref<144xf32, #tpu.memory_space<smem>>
    %505 = vector.broadcast %504 : f32 to vector<16x16xf32>
    %506 = arith.mulf %505, %495 : vector<16x16xf32>
    %507 = arith.addf %489, %506 : vector<16x16xf32>
    %c132 = arith.constant 132 : index
    %508 = memref.load %arg5[%c132] : memref<144xf32, #tpu.memory_space<smem>>
    %509 = vector.broadcast %508 : f32 to vector<16x16xf32>
    %510 = arith.mulf %509, %495 : vector<16x16xf32>
    %511 = arith.addf %493, %510 : vector<16x16xf32>
    %c2_154 = arith.constant 2 : index
    %c2_155 = arith.constant 2 : index
    %c1_156 = arith.constant 1 : index
    %512 = vector.load %arg9[%c2_154, %c2_155, %c1_156] : memref<4x18x18xf32, #tpu.memory_space<vmem>>, vector<1x16x16xf32>
    %513 = vector.shape_cast %512 : vector<1x16x16xf32> to vector<16x16xf32>
    %c25 = arith.constant 25 : index
    %514 = memref.load %arg5[%c25] : memref<144xf32, #tpu.memory_space<smem>>
    %515 = vector.broadcast %514 : f32 to vector<16x16xf32>
    %516 = arith.mulf %515, %513 : vector<16x16xf32>
    %517 = arith.addf %499, %516 : vector<16x16xf32>
    %c61 = arith.constant 61 : index
    %518 = memref.load %arg5[%c61] : memref<144xf32, #tpu.memory_space<smem>>
    %519 = vector.broadcast %518 : f32 to vector<16x16xf32>
    %520 = arith.mulf %519, %513 : vector<16x16xf32>
    %521 = arith.addf %503, %520 : vector<16x16xf32>
    %c97 = arith.constant 97 : index
    %522 = memref.load %arg5[%c97] : memref<144xf32, #tpu.memory_space<smem>>
    %523 = vector.broadcast %522 : f32 to vector<16x16xf32>
    %524 = arith.mulf %523, %513 : vector<16x16xf32>
    %525 = arith.addf %507, %524 : vector<16x16xf32>
    %c133 = arith.constant 133 : index
    %526 = memref.load %arg5[%c133] : memref<144xf32, #tpu.memory_space<smem>>
    %527 = vector.broadcast %526 : f32 to vector<16x16xf32>
    %528 = arith.mulf %527, %513 : vector<16x16xf32>
    %529 = arith.addf %511, %528 : vector<16x16xf32>
    %c2_157 = arith.constant 2 : index
    %c2_158 = arith.constant 2 : index
    %c2_159 = arith.constant 2 : index
    %530 = vector.load %arg9[%c2_157, %c2_158, %c2_159] : memref<4x18x18xf32, #tpu.memory_space<vmem>>, vector<1x16x16xf32>
    %531 = vector.shape_cast %530 : vector<1x16x16xf32> to vector<16x16xf32>
    %c26 = arith.constant 26 : index
    %532 = memref.load %arg5[%c26] : memref<144xf32, #tpu.memory_space<smem>>
    %533 = vector.broadcast %532 : f32 to vector<16x16xf32>
    %534 = arith.mulf %533, %531 : vector<16x16xf32>
    %535 = arith.addf %517, %534 : vector<16x16xf32>
    %c62 = arith.constant 62 : index
    %536 = memref.load %arg5[%c62] : memref<144xf32, #tpu.memory_space<smem>>
    %537 = vector.broadcast %536 : f32 to vector<16x16xf32>
    %538 = arith.mulf %537, %531 : vector<16x16xf32>
    %539 = arith.addf %521, %538 : vector<16x16xf32>
    %c98 = arith.constant 98 : index
    %540 = memref.load %arg5[%c98] : memref<144xf32, #tpu.memory_space<smem>>
    %541 = vector.broadcast %540 : f32 to vector<16x16xf32>
    %542 = arith.mulf %541, %531 : vector<16x16xf32>
    %543 = arith.addf %525, %542 : vector<16x16xf32>
    %c134 = arith.constant 134 : index
    %544 = memref.load %arg5[%c134] : memref<144xf32, #tpu.memory_space<smem>>
    %545 = vector.broadcast %544 : f32 to vector<16x16xf32>
    %546 = arith.mulf %545, %531 : vector<16x16xf32>
    %547 = arith.addf %529, %546 : vector<16x16xf32>
    %c3_160 = arith.constant 3 : index
    %c0_161 = arith.constant 0 : index
    %c0_162 = arith.constant 0 : index
    %548 = vector.load %arg9[%c3_160, %c0_161, %c0_162] : memref<4x18x18xf32, #tpu.memory_space<vmem>>, vector<1x16x16xf32>
    %549 = vector.shape_cast %548 : vector<1x16x16xf32> to vector<16x16xf32>
    %c27 = arith.constant 27 : index
    %550 = memref.load %arg5[%c27] : memref<144xf32, #tpu.memory_space<smem>>
    %551 = vector.broadcast %550 : f32 to vector<16x16xf32>
    %552 = arith.mulf %551, %549 : vector<16x16xf32>
    %553 = arith.addf %535, %552 : vector<16x16xf32>
    %c63 = arith.constant 63 : index
    %554 = memref.load %arg5[%c63] : memref<144xf32, #tpu.memory_space<smem>>
    %555 = vector.broadcast %554 : f32 to vector<16x16xf32>
    %556 = arith.mulf %555, %549 : vector<16x16xf32>
    %557 = arith.addf %539, %556 : vector<16x16xf32>
    %c99 = arith.constant 99 : index
    %558 = memref.load %arg5[%c99] : memref<144xf32, #tpu.memory_space<smem>>
    %559 = vector.broadcast %558 : f32 to vector<16x16xf32>
    %560 = arith.mulf %559, %549 : vector<16x16xf32>
    %561 = arith.addf %543, %560 : vector<16x16xf32>
    %c135 = arith.constant 135 : index
    %562 = memref.load %arg5[%c135] : memref<144xf32, #tpu.memory_space<smem>>
    %563 = vector.broadcast %562 : f32 to vector<16x16xf32>
    %564 = arith.mulf %563, %549 : vector<16x16xf32>
    %565 = arith.addf %547, %564 : vector<16x16xf32>
    %c3_163 = arith.constant 3 : index
    %c0_164 = arith.constant 0 : index
    %c1_165 = arith.constant 1 : index
    %566 = vector.load %arg9[%c3_163, %c0_164, %c1_165] : memref<4x18x18xf32, #tpu.memory_space<vmem>>, vector<1x16x16xf32>
    %567 = vector.shape_cast %566 : vector<1x16x16xf32> to vector<16x16xf32>
    %c28 = arith.constant 28 : index
    %568 = memref.load %arg5[%c28] : memref<144xf32, #tpu.memory_space<smem>>
    %569 = vector.broadcast %568 : f32 to vector<16x16xf32>
    %570 = arith.mulf %569, %567 : vector<16x16xf32>
    %571 = arith.addf %553, %570 : vector<16x16xf32>
    %c64 = arith.constant 64 : index
    %572 = memref.load %arg5[%c64] : memref<144xf32, #tpu.memory_space<smem>>
    %573 = vector.broadcast %572 : f32 to vector<16x16xf32>
    %574 = arith.mulf %573, %567 : vector<16x16xf32>
    %575 = arith.addf %557, %574 : vector<16x16xf32>
    %c100 = arith.constant 100 : index
    %576 = memref.load %arg5[%c100] : memref<144xf32, #tpu.memory_space<smem>>
    %577 = vector.broadcast %576 : f32 to vector<16x16xf32>
    %578 = arith.mulf %577, %567 : vector<16x16xf32>
    %579 = arith.addf %561, %578 : vector<16x16xf32>
    %c136 = arith.constant 136 : index
    %580 = memref.load %arg5[%c136] : memref<144xf32, #tpu.memory_space<smem>>
    %581 = vector.broadcast %580 : f32 to vector<16x16xf32>
    %582 = arith.mulf %581, %567 : vector<16x16xf32>
    %583 = arith.addf %565, %582 : vector<16x16xf32>
    %c3_166 = arith.constant 3 : index
    %c0_167 = arith.constant 0 : index
    %c2_168 = arith.constant 2 : index
    %584 = vector.load %arg9[%c3_166, %c0_167, %c2_168] : memref<4x18x18xf32, #tpu.memory_space<vmem>>, vector<1x16x16xf32>
    %585 = vector.shape_cast %584 : vector<1x16x16xf32> to vector<16x16xf32>
    %c29 = arith.constant 29 : index
    %586 = memref.load %arg5[%c29] : memref<144xf32, #tpu.memory_space<smem>>
    %587 = vector.broadcast %586 : f32 to vector<16x16xf32>
    %588 = arith.mulf %587, %585 : vector<16x16xf32>
    %589 = arith.addf %571, %588 : vector<16x16xf32>
    %c65 = arith.constant 65 : index
    %590 = memref.load %arg5[%c65] : memref<144xf32, #tpu.memory_space<smem>>
    %591 = vector.broadcast %590 : f32 to vector<16x16xf32>
    %592 = arith.mulf %591, %585 : vector<16x16xf32>
    %593 = arith.addf %575, %592 : vector<16x16xf32>
    %c101 = arith.constant 101 : index
    %594 = memref.load %arg5[%c101] : memref<144xf32, #tpu.memory_space<smem>>
    %595 = vector.broadcast %594 : f32 to vector<16x16xf32>
    %596 = arith.mulf %595, %585 : vector<16x16xf32>
    %597 = arith.addf %579, %596 : vector<16x16xf32>
    %c137 = arith.constant 137 : index
    %598 = memref.load %arg5[%c137] : memref<144xf32, #tpu.memory_space<smem>>
    %599 = vector.broadcast %598 : f32 to vector<16x16xf32>
    %600 = arith.mulf %599, %585 : vector<16x16xf32>
    %601 = arith.addf %583, %600 : vector<16x16xf32>
    %c3_169 = arith.constant 3 : index
    %c1_170 = arith.constant 1 : index
    %c0_171 = arith.constant 0 : index
    %602 = vector.load %arg9[%c3_169, %c1_170, %c0_171] : memref<4x18x18xf32, #tpu.memory_space<vmem>>, vector<1x16x16xf32>
    %603 = vector.shape_cast %602 : vector<1x16x16xf32> to vector<16x16xf32>
    %c30 = arith.constant 30 : index
    %604 = memref.load %arg5[%c30] : memref<144xf32, #tpu.memory_space<smem>>
    %605 = vector.broadcast %604 : f32 to vector<16x16xf32>
    %606 = arith.mulf %605, %603 : vector<16x16xf32>
    %607 = arith.addf %589, %606 : vector<16x16xf32>
    %c66 = arith.constant 66 : index
    %608 = memref.load %arg5[%c66] : memref<144xf32, #tpu.memory_space<smem>>
    %609 = vector.broadcast %608 : f32 to vector<16x16xf32>
    %610 = arith.mulf %609, %603 : vector<16x16xf32>
    %611 = arith.addf %593, %610 : vector<16x16xf32>
    %c102 = arith.constant 102 : index
    %612 = memref.load %arg5[%c102] : memref<144xf32, #tpu.memory_space<smem>>
    %613 = vector.broadcast %612 : f32 to vector<16x16xf32>
    %614 = arith.mulf %613, %603 : vector<16x16xf32>
    %615 = arith.addf %597, %614 : vector<16x16xf32>
    %c138 = arith.constant 138 : index
    %616 = memref.load %arg5[%c138] : memref<144xf32, #tpu.memory_space<smem>>
    %617 = vector.broadcast %616 : f32 to vector<16x16xf32>
    %618 = arith.mulf %617, %603 : vector<16x16xf32>
    %619 = arith.addf %601, %618 : vector<16x16xf32>
    %c3_172 = arith.constant 3 : index
    %c1_173 = arith.constant 1 : index
    %c1_174 = arith.constant 1 : index
    %620 = vector.load %arg9[%c3_172, %c1_173, %c1_174] : memref<4x18x18xf32, #tpu.memory_space<vmem>>, vector<1x16x16xf32>
    %621 = vector.shape_cast %620 : vector<1x16x16xf32> to vector<16x16xf32>
    %c31 = arith.constant 31 : index
    %622 = memref.load %arg5[%c31] : memref<144xf32, #tpu.memory_space<smem>>
    %623 = vector.broadcast %622 : f32 to vector<16x16xf32>
    %624 = arith.mulf %623, %621 : vector<16x16xf32>
    %625 = arith.addf %607, %624 : vector<16x16xf32>
    %c67 = arith.constant 67 : index
    %626 = memref.load %arg5[%c67] : memref<144xf32, #tpu.memory_space<smem>>
    %627 = vector.broadcast %626 : f32 to vector<16x16xf32>
    %628 = arith.mulf %627, %621 : vector<16x16xf32>
    %629 = arith.addf %611, %628 : vector<16x16xf32>
    %c103 = arith.constant 103 : index
    %630 = memref.load %arg5[%c103] : memref<144xf32, #tpu.memory_space<smem>>
    %631 = vector.broadcast %630 : f32 to vector<16x16xf32>
    %632 = arith.mulf %631, %621 : vector<16x16xf32>
    %633 = arith.addf %615, %632 : vector<16x16xf32>
    %c139 = arith.constant 139 : index
    %634 = memref.load %arg5[%c139] : memref<144xf32, #tpu.memory_space<smem>>
    %635 = vector.broadcast %634 : f32 to vector<16x16xf32>
    %636 = arith.mulf %635, %621 : vector<16x16xf32>
    %637 = arith.addf %619, %636 : vector<16x16xf32>
    %c3_175 = arith.constant 3 : index
    %c1_176 = arith.constant 1 : index
    %c2_177 = arith.constant 2 : index
    %638 = vector.load %arg9[%c3_175, %c1_176, %c2_177] : memref<4x18x18xf32, #tpu.memory_space<vmem>>, vector<1x16x16xf32>
    %639 = vector.shape_cast %638 : vector<1x16x16xf32> to vector<16x16xf32>
    %c32 = arith.constant 32 : index
    %640 = memref.load %arg5[%c32] : memref<144xf32, #tpu.memory_space<smem>>
    %641 = vector.broadcast %640 : f32 to vector<16x16xf32>
    %642 = arith.mulf %641, %639 : vector<16x16xf32>
    %643 = arith.addf %625, %642 : vector<16x16xf32>
    %c68 = arith.constant 68 : index
    %644 = memref.load %arg5[%c68] : memref<144xf32, #tpu.memory_space<smem>>
    %645 = vector.broadcast %644 : f32 to vector<16x16xf32>
    %646 = arith.mulf %645, %639 : vector<16x16xf32>
    %647 = arith.addf %629, %646 : vector<16x16xf32>
    %c104 = arith.constant 104 : index
    %648 = memref.load %arg5[%c104] : memref<144xf32, #tpu.memory_space<smem>>
    %649 = vector.broadcast %648 : f32 to vector<16x16xf32>
    %650 = arith.mulf %649, %639 : vector<16x16xf32>
    %651 = arith.addf %633, %650 : vector<16x16xf32>
    %c140 = arith.constant 140 : index
    %652 = memref.load %arg5[%c140] : memref<144xf32, #tpu.memory_space<smem>>
    %653 = vector.broadcast %652 : f32 to vector<16x16xf32>
    %654 = arith.mulf %653, %639 : vector<16x16xf32>
    %655 = arith.addf %637, %654 : vector<16x16xf32>
    %c3_178 = arith.constant 3 : index
    %c2_179 = arith.constant 2 : index
    %c0_180 = arith.constant 0 : index
    %656 = vector.load %arg9[%c3_178, %c2_179, %c0_180] : memref<4x18x18xf32, #tpu.memory_space<vmem>>, vector<1x16x16xf32>
    %657 = vector.shape_cast %656 : vector<1x16x16xf32> to vector<16x16xf32>
    %c33 = arith.constant 33 : index
    %658 = memref.load %arg5[%c33] : memref<144xf32, #tpu.memory_space<smem>>
    %659 = vector.broadcast %658 : f32 to vector<16x16xf32>
    %660 = arith.mulf %659, %657 : vector<16x16xf32>
    %661 = arith.addf %643, %660 : vector<16x16xf32>
    %c69 = arith.constant 69 : index
    %662 = memref.load %arg5[%c69] : memref<144xf32, #tpu.memory_space<smem>>
    %663 = vector.broadcast %662 : f32 to vector<16x16xf32>
    %664 = arith.mulf %663, %657 : vector<16x16xf32>
    %665 = arith.addf %647, %664 : vector<16x16xf32>
    %c105 = arith.constant 105 : index
    %666 = memref.load %arg5[%c105] : memref<144xf32, #tpu.memory_space<smem>>
    %667 = vector.broadcast %666 : f32 to vector<16x16xf32>
    %668 = arith.mulf %667, %657 : vector<16x16xf32>
    %669 = arith.addf %651, %668 : vector<16x16xf32>
    %c141 = arith.constant 141 : index
    %670 = memref.load %arg5[%c141] : memref<144xf32, #tpu.memory_space<smem>>
    %671 = vector.broadcast %670 : f32 to vector<16x16xf32>
    %672 = arith.mulf %671, %657 : vector<16x16xf32>
    %673 = arith.addf %655, %672 : vector<16x16xf32>
    %c3_181 = arith.constant 3 : index
    %c2_182 = arith.constant 2 : index
    %c1_183 = arith.constant 1 : index
    %674 = vector.load %arg9[%c3_181, %c2_182, %c1_183] : memref<4x18x18xf32, #tpu.memory_space<vmem>>, vector<1x16x16xf32>
    %675 = vector.shape_cast %674 : vector<1x16x16xf32> to vector<16x16xf32>
    %c34 = arith.constant 34 : index
    %676 = memref.load %arg5[%c34] : memref<144xf32, #tpu.memory_space<smem>>
    %677 = vector.broadcast %676 : f32 to vector<16x16xf32>
    %678 = arith.mulf %677, %675 : vector<16x16xf32>
    %679 = arith.addf %661, %678 : vector<16x16xf32>
    %c70 = arith.constant 70 : index
    %680 = memref.load %arg5[%c70] : memref<144xf32, #tpu.memory_space<smem>>
    %681 = vector.broadcast %680 : f32 to vector<16x16xf32>
    %682 = arith.mulf %681, %675 : vector<16x16xf32>
    %683 = arith.addf %665, %682 : vector<16x16xf32>
    %c106 = arith.constant 106 : index
    %684 = memref.load %arg5[%c106] : memref<144xf32, #tpu.memory_space<smem>>
    %685 = vector.broadcast %684 : f32 to vector<16x16xf32>
    %686 = arith.mulf %685, %675 : vector<16x16xf32>
    %687 = arith.addf %669, %686 : vector<16x16xf32>
    %c142 = arith.constant 142 : index
    %688 = memref.load %arg5[%c142] : memref<144xf32, #tpu.memory_space<smem>>
    %689 = vector.broadcast %688 : f32 to vector<16x16xf32>
    %690 = arith.mulf %689, %675 : vector<16x16xf32>
    %691 = arith.addf %673, %690 : vector<16x16xf32>
    %c3_184 = arith.constant 3 : index
    %c2_185 = arith.constant 2 : index
    %c2_186 = arith.constant 2 : index
    %692 = vector.load %arg9[%c3_184, %c2_185, %c2_186] : memref<4x18x18xf32, #tpu.memory_space<vmem>>, vector<1x16x16xf32>
    %693 = vector.shape_cast %692 : vector<1x16x16xf32> to vector<16x16xf32>
    %c35 = arith.constant 35 : index
    %694 = memref.load %arg5[%c35] : memref<144xf32, #tpu.memory_space<smem>>
    %695 = vector.broadcast %694 : f32 to vector<16x16xf32>
    %696 = arith.mulf %695, %693 : vector<16x16xf32>
    %697 = arith.addf %679, %696 : vector<16x16xf32>
    %c71 = arith.constant 71 : index
    %698 = memref.load %arg5[%c71] : memref<144xf32, #tpu.memory_space<smem>>
    %699 = vector.broadcast %698 : f32 to vector<16x16xf32>
    %700 = arith.mulf %699, %693 : vector<16x16xf32>
    %701 = arith.addf %683, %700 : vector<16x16xf32>
    %c107 = arith.constant 107 : index
    %702 = memref.load %arg5[%c107] : memref<144xf32, #tpu.memory_space<smem>>
    %703 = vector.broadcast %702 : f32 to vector<16x16xf32>
    %704 = arith.mulf %703, %693 : vector<16x16xf32>
    %705 = arith.addf %687, %704 : vector<16x16xf32>
    %c143 = arith.constant 143 : index
    %706 = memref.load %arg5[%c143] : memref<144xf32, #tpu.memory_space<smem>>
    %707 = vector.broadcast %706 : f32 to vector<16x16xf32>
    %708 = arith.mulf %707, %693 : vector<16x16xf32>
    %709 = arith.addf %691, %708 : vector<16x16xf32>
    %c0_187 = arith.constant 0 : index
    %c0_188 = arith.constant 0 : index
    %c0_189 = arith.constant 0 : index
    %710 = vector.load %arg10[%c0_187, %c0_188, %c0_189] : memref<4x18x18xf32, #tpu.memory_space<vmem>>, vector<1x16x16xf32>
    %711 = vector.shape_cast %710 : vector<1x16x16xf32> to vector<16x16xf32>
    %c0_190 = arith.constant 0 : index
    %712 = memref.load %arg6[%c0_190] : memref<144xf32, #tpu.memory_space<smem>>
    %713 = vector.broadcast %712 : f32 to vector<16x16xf32>
    %714 = arith.mulf %713, %711 : vector<16x16xf32>
    %715 = arith.addf %697, %714 : vector<16x16xf32>
    %c36_191 = arith.constant 36 : index
    %716 = memref.load %arg6[%c36_191] : memref<144xf32, #tpu.memory_space<smem>>
    %717 = vector.broadcast %716 : f32 to vector<16x16xf32>
    %718 = arith.mulf %717, %711 : vector<16x16xf32>
    %719 = arith.addf %701, %718 : vector<16x16xf32>
    %c72_192 = arith.constant 72 : index
    %720 = memref.load %arg6[%c72_192] : memref<144xf32, #tpu.memory_space<smem>>
    %721 = vector.broadcast %720 : f32 to vector<16x16xf32>
    %722 = arith.mulf %721, %711 : vector<16x16xf32>
    %723 = arith.addf %705, %722 : vector<16x16xf32>
    %c108_193 = arith.constant 108 : index
    %724 = memref.load %arg6[%c108_193] : memref<144xf32, #tpu.memory_space<smem>>
    %725 = vector.broadcast %724 : f32 to vector<16x16xf32>
    %726 = arith.mulf %725, %711 : vector<16x16xf32>
    %727 = arith.addf %709, %726 : vector<16x16xf32>
    %c0_194 = arith.constant 0 : index
    %c0_195 = arith.constant 0 : index
    %c1_196 = arith.constant 1 : index
    %728 = vector.load %arg10[%c0_194, %c0_195, %c1_196] : memref<4x18x18xf32, #tpu.memory_space<vmem>>, vector<1x16x16xf32>
    %729 = vector.shape_cast %728 : vector<1x16x16xf32> to vector<16x16xf32>
    %c1_197 = arith.constant 1 : index
    %730 = memref.load %arg6[%c1_197] : memref<144xf32, #tpu.memory_space<smem>>
    %731 = vector.broadcast %730 : f32 to vector<16x16xf32>
    %732 = arith.mulf %731, %729 : vector<16x16xf32>
    %733 = arith.addf %715, %732 : vector<16x16xf32>
    %c37_198 = arith.constant 37 : index
    %734 = memref.load %arg6[%c37_198] : memref<144xf32, #tpu.memory_space<smem>>
    %735 = vector.broadcast %734 : f32 to vector<16x16xf32>
    %736 = arith.mulf %735, %729 : vector<16x16xf32>
    %737 = arith.addf %719, %736 : vector<16x16xf32>
    %c73_199 = arith.constant 73 : index
    %738 = memref.load %arg6[%c73_199] : memref<144xf32, #tpu.memory_space<smem>>
    %739 = vector.broadcast %738 : f32 to vector<16x16xf32>
    %740 = arith.mulf %739, %729 : vector<16x16xf32>
    %741 = arith.addf %723, %740 : vector<16x16xf32>
    %c109_200 = arith.constant 109 : index
    %742 = memref.load %arg6[%c109_200] : memref<144xf32, #tpu.memory_space<smem>>
    %743 = vector.broadcast %742 : f32 to vector<16x16xf32>
    %744 = arith.mulf %743, %729 : vector<16x16xf32>
    %745 = arith.addf %727, %744 : vector<16x16xf32>
    %c0_201 = arith.constant 0 : index
    %c0_202 = arith.constant 0 : index
    %c2_203 = arith.constant 2 : index
    %746 = vector.load %arg10[%c0_201, %c0_202, %c2_203] : memref<4x18x18xf32, #tpu.memory_space<vmem>>, vector<1x16x16xf32>
    %747 = vector.shape_cast %746 : vector<1x16x16xf32> to vector<16x16xf32>
    %c2_204 = arith.constant 2 : index
    %748 = memref.load %arg6[%c2_204] : memref<144xf32, #tpu.memory_space<smem>>
    %749 = vector.broadcast %748 : f32 to vector<16x16xf32>
    %750 = arith.mulf %749, %747 : vector<16x16xf32>
    %751 = arith.addf %733, %750 : vector<16x16xf32>
    %c38_205 = arith.constant 38 : index
    %752 = memref.load %arg6[%c38_205] : memref<144xf32, #tpu.memory_space<smem>>
    %753 = vector.broadcast %752 : f32 to vector<16x16xf32>
    %754 = arith.mulf %753, %747 : vector<16x16xf32>
    %755 = arith.addf %737, %754 : vector<16x16xf32>
    %c74_206 = arith.constant 74 : index
    %756 = memref.load %arg6[%c74_206] : memref<144xf32, #tpu.memory_space<smem>>
    %757 = vector.broadcast %756 : f32 to vector<16x16xf32>
    %758 = arith.mulf %757, %747 : vector<16x16xf32>
    %759 = arith.addf %741, %758 : vector<16x16xf32>
    %c110_207 = arith.constant 110 : index
    %760 = memref.load %arg6[%c110_207] : memref<144xf32, #tpu.memory_space<smem>>
    %761 = vector.broadcast %760 : f32 to vector<16x16xf32>
    %762 = arith.mulf %761, %747 : vector<16x16xf32>
    %763 = arith.addf %745, %762 : vector<16x16xf32>
    %c0_208 = arith.constant 0 : index
    %c1_209 = arith.constant 1 : index
    %c0_210 = arith.constant 0 : index
    %764 = vector.load %arg10[%c0_208, %c1_209, %c0_210] : memref<4x18x18xf32, #tpu.memory_space<vmem>>, vector<1x16x16xf32>
    %765 = vector.shape_cast %764 : vector<1x16x16xf32> to vector<16x16xf32>
    %c3_211 = arith.constant 3 : index
    %766 = memref.load %arg6[%c3_211] : memref<144xf32, #tpu.memory_space<smem>>
    %767 = vector.broadcast %766 : f32 to vector<16x16xf32>
    %768 = arith.mulf %767, %765 : vector<16x16xf32>
    %769 = arith.addf %751, %768 : vector<16x16xf32>
    %c39_212 = arith.constant 39 : index
    %770 = memref.load %arg6[%c39_212] : memref<144xf32, #tpu.memory_space<smem>>
    %771 = vector.broadcast %770 : f32 to vector<16x16xf32>
    %772 = arith.mulf %771, %765 : vector<16x16xf32>
    %773 = arith.addf %755, %772 : vector<16x16xf32>
    %c75_213 = arith.constant 75 : index
    %774 = memref.load %arg6[%c75_213] : memref<144xf32, #tpu.memory_space<smem>>
    %775 = vector.broadcast %774 : f32 to vector<16x16xf32>
    %776 = arith.mulf %775, %765 : vector<16x16xf32>
    %777 = arith.addf %759, %776 : vector<16x16xf32>
    %c111_214 = arith.constant 111 : index
    %778 = memref.load %arg6[%c111_214] : memref<144xf32, #tpu.memory_space<smem>>
    %779 = vector.broadcast %778 : f32 to vector<16x16xf32>
    %780 = arith.mulf %779, %765 : vector<16x16xf32>
    %781 = arith.addf %763, %780 : vector<16x16xf32>
    %c0_215 = arith.constant 0 : index
    %c1_216 = arith.constant 1 : index
    %c1_217 = arith.constant 1 : index
    %782 = vector.load %arg10[%c0_215, %c1_216, %c1_217] : memref<4x18x18xf32, #tpu.memory_space<vmem>>, vector<1x16x16xf32>
    %783 = vector.shape_cast %782 : vector<1x16x16xf32> to vector<16x16xf32>
    %c4_218 = arith.constant 4 : index
    %784 = memref.load %arg6[%c4_218] : memref<144xf32, #tpu.memory_space<smem>>
    %785 = vector.broadcast %784 : f32 to vector<16x16xf32>
    %786 = arith.mulf %785, %783 : vector<16x16xf32>
    %787 = arith.addf %769, %786 : vector<16x16xf32>
    %c40_219 = arith.constant 40 : index
    %788 = memref.load %arg6[%c40_219] : memref<144xf32, #tpu.memory_space<smem>>
    %789 = vector.broadcast %788 : f32 to vector<16x16xf32>
    %790 = arith.mulf %789, %783 : vector<16x16xf32>
    %791 = arith.addf %773, %790 : vector<16x16xf32>
    %c76_220 = arith.constant 76 : index
    %792 = memref.load %arg6[%c76_220] : memref<144xf32, #tpu.memory_space<smem>>
    %793 = vector.broadcast %792 : f32 to vector<16x16xf32>
    %794 = arith.mulf %793, %783 : vector<16x16xf32>
    %795 = arith.addf %777, %794 : vector<16x16xf32>
    %c112_221 = arith.constant 112 : index
    %796 = memref.load %arg6[%c112_221] : memref<144xf32, #tpu.memory_space<smem>>
    %797 = vector.broadcast %796 : f32 to vector<16x16xf32>
    %798 = arith.mulf %797, %783 : vector<16x16xf32>
    %799 = arith.addf %781, %798 : vector<16x16xf32>
    %c0_222 = arith.constant 0 : index
    %c1_223 = arith.constant 1 : index
    %c2_224 = arith.constant 2 : index
    %800 = vector.load %arg10[%c0_222, %c1_223, %c2_224] : memref<4x18x18xf32, #tpu.memory_space<vmem>>, vector<1x16x16xf32>
    %801 = vector.shape_cast %800 : vector<1x16x16xf32> to vector<16x16xf32>
    %c5_225 = arith.constant 5 : index
    %802 = memref.load %arg6[%c5_225] : memref<144xf32, #tpu.memory_space<smem>>
    %803 = vector.broadcast %802 : f32 to vector<16x16xf32>
    %804 = arith.mulf %803, %801 : vector<16x16xf32>
    %805 = arith.addf %787, %804 : vector<16x16xf32>
    %c41_226 = arith.constant 41 : index
    %806 = memref.load %arg6[%c41_226] : memref<144xf32, #tpu.memory_space<smem>>
    %807 = vector.broadcast %806 : f32 to vector<16x16xf32>
    %808 = arith.mulf %807, %801 : vector<16x16xf32>
    %809 = arith.addf %791, %808 : vector<16x16xf32>
    %c77_227 = arith.constant 77 : index
    %810 = memref.load %arg6[%c77_227] : memref<144xf32, #tpu.memory_space<smem>>
    %811 = vector.broadcast %810 : f32 to vector<16x16xf32>
    %812 = arith.mulf %811, %801 : vector<16x16xf32>
    %813 = arith.addf %795, %812 : vector<16x16xf32>
    %c113_228 = arith.constant 113 : index
    %814 = memref.load %arg6[%c113_228] : memref<144xf32, #tpu.memory_space<smem>>
    %815 = vector.broadcast %814 : f32 to vector<16x16xf32>
    %816 = arith.mulf %815, %801 : vector<16x16xf32>
    %817 = arith.addf %799, %816 : vector<16x16xf32>
    %c0_229 = arith.constant 0 : index
    %c2_230 = arith.constant 2 : index
    %c0_231 = arith.constant 0 : index
    %818 = vector.load %arg10[%c0_229, %c2_230, %c0_231] : memref<4x18x18xf32, #tpu.memory_space<vmem>>, vector<1x16x16xf32>
    %819 = vector.shape_cast %818 : vector<1x16x16xf32> to vector<16x16xf32>
    %c6_232 = arith.constant 6 : index
    %820 = memref.load %arg6[%c6_232] : memref<144xf32, #tpu.memory_space<smem>>
    %821 = vector.broadcast %820 : f32 to vector<16x16xf32>
    %822 = arith.mulf %821, %819 : vector<16x16xf32>
    %823 = arith.addf %805, %822 : vector<16x16xf32>
    %c42_233 = arith.constant 42 : index
    %824 = memref.load %arg6[%c42_233] : memref<144xf32, #tpu.memory_space<smem>>
    %825 = vector.broadcast %824 : f32 to vector<16x16xf32>
    %826 = arith.mulf %825, %819 : vector<16x16xf32>
    %827 = arith.addf %809, %826 : vector<16x16xf32>
    %c78_234 = arith.constant 78 : index
    %828 = memref.load %arg6[%c78_234] : memref<144xf32, #tpu.memory_space<smem>>
    %829 = vector.broadcast %828 : f32 to vector<16x16xf32>
    %830 = arith.mulf %829, %819 : vector<16x16xf32>
    %831 = arith.addf %813, %830 : vector<16x16xf32>
    %c114_235 = arith.constant 114 : index
    %832 = memref.load %arg6[%c114_235] : memref<144xf32, #tpu.memory_space<smem>>
    %833 = vector.broadcast %832 : f32 to vector<16x16xf32>
    %834 = arith.mulf %833, %819 : vector<16x16xf32>
    %835 = arith.addf %817, %834 : vector<16x16xf32>
    %c0_236 = arith.constant 0 : index
    %c2_237 = arith.constant 2 : index
    %c1_238 = arith.constant 1 : index
    %836 = vector.load %arg10[%c0_236, %c2_237, %c1_238] : memref<4x18x18xf32, #tpu.memory_space<vmem>>, vector<1x16x16xf32>
    %837 = vector.shape_cast %836 : vector<1x16x16xf32> to vector<16x16xf32>
    %c7_239 = arith.constant 7 : index
    %838 = memref.load %arg6[%c7_239] : memref<144xf32, #tpu.memory_space<smem>>
    %839 = vector.broadcast %838 : f32 to vector<16x16xf32>
    %840 = arith.mulf %839, %837 : vector<16x16xf32>
    %841 = arith.addf %823, %840 : vector<16x16xf32>
    %c43_240 = arith.constant 43 : index
    %842 = memref.load %arg6[%c43_240] : memref<144xf32, #tpu.memory_space<smem>>
    %843 = vector.broadcast %842 : f32 to vector<16x16xf32>
    %844 = arith.mulf %843, %837 : vector<16x16xf32>
    %845 = arith.addf %827, %844 : vector<16x16xf32>
    %c79_241 = arith.constant 79 : index
    %846 = memref.load %arg6[%c79_241] : memref<144xf32, #tpu.memory_space<smem>>
    %847 = vector.broadcast %846 : f32 to vector<16x16xf32>
    %848 = arith.mulf %847, %837 : vector<16x16xf32>
    %849 = arith.addf %831, %848 : vector<16x16xf32>
    %c115_242 = arith.constant 115 : index
    %850 = memref.load %arg6[%c115_242] : memref<144xf32, #tpu.memory_space<smem>>
    %851 = vector.broadcast %850 : f32 to vector<16x16xf32>
    %852 = arith.mulf %851, %837 : vector<16x16xf32>
    %853 = arith.addf %835, %852 : vector<16x16xf32>
    %c0_243 = arith.constant 0 : index
    %c2_244 = arith.constant 2 : index
    %c2_245 = arith.constant 2 : index
    %854 = vector.load %arg10[%c0_243, %c2_244, %c2_245] : memref<4x18x18xf32, #tpu.memory_space<vmem>>, vector<1x16x16xf32>
    %855 = vector.shape_cast %854 : vector<1x16x16xf32> to vector<16x16xf32>
    %c8_246 = arith.constant 8 : index
    %856 = memref.load %arg6[%c8_246] : memref<144xf32, #tpu.memory_space<smem>>
    %857 = vector.broadcast %856 : f32 to vector<16x16xf32>
    %858 = arith.mulf %857, %855 : vector<16x16xf32>
    %859 = arith.addf %841, %858 : vector<16x16xf32>
    %c44_247 = arith.constant 44 : index
    %860 = memref.load %arg6[%c44_247] : memref<144xf32, #tpu.memory_space<smem>>
    %861 = vector.broadcast %860 : f32 to vector<16x16xf32>
    %862 = arith.mulf %861, %855 : vector<16x16xf32>
    %863 = arith.addf %845, %862 : vector<16x16xf32>
    %c80_248 = arith.constant 80 : index
    %864 = memref.load %arg6[%c80_248] : memref<144xf32, #tpu.memory_space<smem>>
    %865 = vector.broadcast %864 : f32 to vector<16x16xf32>
    %866 = arith.mulf %865, %855 : vector<16x16xf32>
    %867 = arith.addf %849, %866 : vector<16x16xf32>
    %c116_249 = arith.constant 116 : index
    %868 = memref.load %arg6[%c116_249] : memref<144xf32, #tpu.memory_space<smem>>
    %869 = vector.broadcast %868 : f32 to vector<16x16xf32>
    %870 = arith.mulf %869, %855 : vector<16x16xf32>
    %871 = arith.addf %853, %870 : vector<16x16xf32>
    %c1_250 = arith.constant 1 : index
    %c0_251 = arith.constant 0 : index
    %c0_252 = arith.constant 0 : index
    %872 = vector.load %arg10[%c1_250, %c0_251, %c0_252] : memref<4x18x18xf32, #tpu.memory_space<vmem>>, vector<1x16x16xf32>
    %873 = vector.shape_cast %872 : vector<1x16x16xf32> to vector<16x16xf32>
    %c9_253 = arith.constant 9 : index
    %874 = memref.load %arg6[%c9_253] : memref<144xf32, #tpu.memory_space<smem>>
    %875 = vector.broadcast %874 : f32 to vector<16x16xf32>
    %876 = arith.mulf %875, %873 : vector<16x16xf32>
    %877 = arith.addf %859, %876 : vector<16x16xf32>
    %c45_254 = arith.constant 45 : index
    %878 = memref.load %arg6[%c45_254] : memref<144xf32, #tpu.memory_space<smem>>
    %879 = vector.broadcast %878 : f32 to vector<16x16xf32>
    %880 = arith.mulf %879, %873 : vector<16x16xf32>
    %881 = arith.addf %863, %880 : vector<16x16xf32>
    %c81_255 = arith.constant 81 : index
    %882 = memref.load %arg6[%c81_255] : memref<144xf32, #tpu.memory_space<smem>>
    %883 = vector.broadcast %882 : f32 to vector<16x16xf32>
    %884 = arith.mulf %883, %873 : vector<16x16xf32>
    %885 = arith.addf %867, %884 : vector<16x16xf32>
    %c117_256 = arith.constant 117 : index
    %886 = memref.load %arg6[%c117_256] : memref<144xf32, #tpu.memory_space<smem>>
    %887 = vector.broadcast %886 : f32 to vector<16x16xf32>
    %888 = arith.mulf %887, %873 : vector<16x16xf32>
    %889 = arith.addf %871, %888 : vector<16x16xf32>
    %c1_257 = arith.constant 1 : index
    %c0_258 = arith.constant 0 : index
    %c1_259 = arith.constant 1 : index
    %890 = vector.load %arg10[%c1_257, %c0_258, %c1_259] : memref<4x18x18xf32, #tpu.memory_space<vmem>>, vector<1x16x16xf32>
    %891 = vector.shape_cast %890 : vector<1x16x16xf32> to vector<16x16xf32>
    %c10_260 = arith.constant 10 : index
    %892 = memref.load %arg6[%c10_260] : memref<144xf32, #tpu.memory_space<smem>>
    %893 = vector.broadcast %892 : f32 to vector<16x16xf32>
    %894 = arith.mulf %893, %891 : vector<16x16xf32>
    %895 = arith.addf %877, %894 : vector<16x16xf32>
    %c46_261 = arith.constant 46 : index
    %896 = memref.load %arg6[%c46_261] : memref<144xf32, #tpu.memory_space<smem>>
    %897 = vector.broadcast %896 : f32 to vector<16x16xf32>
    %898 = arith.mulf %897, %891 : vector<16x16xf32>
    %899 = arith.addf %881, %898 : vector<16x16xf32>
    %c82_262 = arith.constant 82 : index
    %900 = memref.load %arg6[%c82_262] : memref<144xf32, #tpu.memory_space<smem>>
    %901 = vector.broadcast %900 : f32 to vector<16x16xf32>
    %902 = arith.mulf %901, %891 : vector<16x16xf32>
    %903 = arith.addf %885, %902 : vector<16x16xf32>
    %c118_263 = arith.constant 118 : index
    %904 = memref.load %arg6[%c118_263] : memref<144xf32, #tpu.memory_space<smem>>
    %905 = vector.broadcast %904 : f32 to vector<16x16xf32>
    %906 = arith.mulf %905, %891 : vector<16x16xf32>
    %907 = arith.addf %889, %906 : vector<16x16xf32>
    %c1_264 = arith.constant 1 : index
    %c0_265 = arith.constant 0 : index
    %c2_266 = arith.constant 2 : index
    %908 = vector.load %arg10[%c1_264, %c0_265, %c2_266] : memref<4x18x18xf32, #tpu.memory_space<vmem>>, vector<1x16x16xf32>
    %909 = vector.shape_cast %908 : vector<1x16x16xf32> to vector<16x16xf32>
    %c11_267 = arith.constant 11 : index
    %910 = memref.load %arg6[%c11_267] : memref<144xf32, #tpu.memory_space<smem>>
    %911 = vector.broadcast %910 : f32 to vector<16x16xf32>
    %912 = arith.mulf %911, %909 : vector<16x16xf32>
    %913 = arith.addf %895, %912 : vector<16x16xf32>
    %c47_268 = arith.constant 47 : index
    %914 = memref.load %arg6[%c47_268] : memref<144xf32, #tpu.memory_space<smem>>
    %915 = vector.broadcast %914 : f32 to vector<16x16xf32>
    %916 = arith.mulf %915, %909 : vector<16x16xf32>
    %917 = arith.addf %899, %916 : vector<16x16xf32>
    %c83_269 = arith.constant 83 : index
    %918 = memref.load %arg6[%c83_269] : memref<144xf32, #tpu.memory_space<smem>>
    %919 = vector.broadcast %918 : f32 to vector<16x16xf32>
    %920 = arith.mulf %919, %909 : vector<16x16xf32>
    %921 = arith.addf %903, %920 : vector<16x16xf32>
    %c119_270 = arith.constant 119 : index
    %922 = memref.load %arg6[%c119_270] : memref<144xf32, #tpu.memory_space<smem>>
    %923 = vector.broadcast %922 : f32 to vector<16x16xf32>
    %924 = arith.mulf %923, %909 : vector<16x16xf32>
    %925 = arith.addf %907, %924 : vector<16x16xf32>
    %c1_271 = arith.constant 1 : index
    %c1_272 = arith.constant 1 : index
    %c0_273 = arith.constant 0 : index
    %926 = vector.load %arg10[%c1_271, %c1_272, %c0_273] : memref<4x18x18xf32, #tpu.memory_space<vmem>>, vector<1x16x16xf32>
    %927 = vector.shape_cast %926 : vector<1x16x16xf32> to vector<16x16xf32>
    %c12_274 = arith.constant 12 : index
    %928 = memref.load %arg6[%c12_274] : memref<144xf32, #tpu.memory_space<smem>>
    %929 = vector.broadcast %928 : f32 to vector<16x16xf32>
    %930 = arith.mulf %929, %927 : vector<16x16xf32>
    %931 = arith.addf %913, %930 : vector<16x16xf32>
    %c48_275 = arith.constant 48 : index
    %932 = memref.load %arg6[%c48_275] : memref<144xf32, #tpu.memory_space<smem>>
    %933 = vector.broadcast %932 : f32 to vector<16x16xf32>
    %934 = arith.mulf %933, %927 : vector<16x16xf32>
    %935 = arith.addf %917, %934 : vector<16x16xf32>
    %c84_276 = arith.constant 84 : index
    %936 = memref.load %arg6[%c84_276] : memref<144xf32, #tpu.memory_space<smem>>
    %937 = vector.broadcast %936 : f32 to vector<16x16xf32>
    %938 = arith.mulf %937, %927 : vector<16x16xf32>
    %939 = arith.addf %921, %938 : vector<16x16xf32>
    %c120_277 = arith.constant 120 : index
    %940 = memref.load %arg6[%c120_277] : memref<144xf32, #tpu.memory_space<smem>>
    %941 = vector.broadcast %940 : f32 to vector<16x16xf32>
    %942 = arith.mulf %941, %927 : vector<16x16xf32>
    %943 = arith.addf %925, %942 : vector<16x16xf32>
    %c1_278 = arith.constant 1 : index
    %c1_279 = arith.constant 1 : index
    %c1_280 = arith.constant 1 : index
    %944 = vector.load %arg10[%c1_278, %c1_279, %c1_280] : memref<4x18x18xf32, #tpu.memory_space<vmem>>, vector<1x16x16xf32>
    %945 = vector.shape_cast %944 : vector<1x16x16xf32> to vector<16x16xf32>
    %c13_281 = arith.constant 13 : index
    %946 = memref.load %arg6[%c13_281] : memref<144xf32, #tpu.memory_space<smem>>
    %947 = vector.broadcast %946 : f32 to vector<16x16xf32>
    %948 = arith.mulf %947, %945 : vector<16x16xf32>
    %949 = arith.addf %931, %948 : vector<16x16xf32>
    %c49_282 = arith.constant 49 : index
    %950 = memref.load %arg6[%c49_282] : memref<144xf32, #tpu.memory_space<smem>>
    %951 = vector.broadcast %950 : f32 to vector<16x16xf32>
    %952 = arith.mulf %951, %945 : vector<16x16xf32>
    %953 = arith.addf %935, %952 : vector<16x16xf32>
    %c85_283 = arith.constant 85 : index
    %954 = memref.load %arg6[%c85_283] : memref<144xf32, #tpu.memory_space<smem>>
    %955 = vector.broadcast %954 : f32 to vector<16x16xf32>
    %956 = arith.mulf %955, %945 : vector<16x16xf32>
    %957 = arith.addf %939, %956 : vector<16x16xf32>
    %c121_284 = arith.constant 121 : index
    %958 = memref.load %arg6[%c121_284] : memref<144xf32, #tpu.memory_space<smem>>
    %959 = vector.broadcast %958 : f32 to vector<16x16xf32>
    %960 = arith.mulf %959, %945 : vector<16x16xf32>
    %961 = arith.addf %943, %960 : vector<16x16xf32>
    %c1_285 = arith.constant 1 : index
    %c1_286 = arith.constant 1 : index
    %c2_287 = arith.constant 2 : index
    %962 = vector.load %arg10[%c1_285, %c1_286, %c2_287] : memref<4x18x18xf32, #tpu.memory_space<vmem>>, vector<1x16x16xf32>
    %963 = vector.shape_cast %962 : vector<1x16x16xf32> to vector<16x16xf32>
    %c14_288 = arith.constant 14 : index
    %964 = memref.load %arg6[%c14_288] : memref<144xf32, #tpu.memory_space<smem>>
    %965 = vector.broadcast %964 : f32 to vector<16x16xf32>
    %966 = arith.mulf %965, %963 : vector<16x16xf32>
    %967 = arith.addf %949, %966 : vector<16x16xf32>
    %c50_289 = arith.constant 50 : index
    %968 = memref.load %arg6[%c50_289] : memref<144xf32, #tpu.memory_space<smem>>
    %969 = vector.broadcast %968 : f32 to vector<16x16xf32>
    %970 = arith.mulf %969, %963 : vector<16x16xf32>
    %971 = arith.addf %953, %970 : vector<16x16xf32>
    %c86_290 = arith.constant 86 : index
    %972 = memref.load %arg6[%c86_290] : memref<144xf32, #tpu.memory_space<smem>>
    %973 = vector.broadcast %972 : f32 to vector<16x16xf32>
    %974 = arith.mulf %973, %963 : vector<16x16xf32>
    %975 = arith.addf %957, %974 : vector<16x16xf32>
    %c122_291 = arith.constant 122 : index
    %976 = memref.load %arg6[%c122_291] : memref<144xf32, #tpu.memory_space<smem>>
    %977 = vector.broadcast %976 : f32 to vector<16x16xf32>
    %978 = arith.mulf %977, %963 : vector<16x16xf32>
    %979 = arith.addf %961, %978 : vector<16x16xf32>
    %c1_292 = arith.constant 1 : index
    %c2_293 = arith.constant 2 : index
    %c0_294 = arith.constant 0 : index
    %980 = vector.load %arg10[%c1_292, %c2_293, %c0_294] : memref<4x18x18xf32, #tpu.memory_space<vmem>>, vector<1x16x16xf32>
    %981 = vector.shape_cast %980 : vector<1x16x16xf32> to vector<16x16xf32>
    %c15_295 = arith.constant 15 : index
    %982 = memref.load %arg6[%c15_295] : memref<144xf32, #tpu.memory_space<smem>>
    %983 = vector.broadcast %982 : f32 to vector<16x16xf32>
    %984 = arith.mulf %983, %981 : vector<16x16xf32>
    %985 = arith.addf %967, %984 : vector<16x16xf32>
    %c51_296 = arith.constant 51 : index
    %986 = memref.load %arg6[%c51_296] : memref<144xf32, #tpu.memory_space<smem>>
    %987 = vector.broadcast %986 : f32 to vector<16x16xf32>
    %988 = arith.mulf %987, %981 : vector<16x16xf32>
    %989 = arith.addf %971, %988 : vector<16x16xf32>
    %c87_297 = arith.constant 87 : index
    %990 = memref.load %arg6[%c87_297] : memref<144xf32, #tpu.memory_space<smem>>
    %991 = vector.broadcast %990 : f32 to vector<16x16xf32>
    %992 = arith.mulf %991, %981 : vector<16x16xf32>
    %993 = arith.addf %975, %992 : vector<16x16xf32>
    %c123_298 = arith.constant 123 : index
    %994 = memref.load %arg6[%c123_298] : memref<144xf32, #tpu.memory_space<smem>>
    %995 = vector.broadcast %994 : f32 to vector<16x16xf32>
    %996 = arith.mulf %995, %981 : vector<16x16xf32>
    %997 = arith.addf %979, %996 : vector<16x16xf32>
    %c1_299 = arith.constant 1 : index
    %c2_300 = arith.constant 2 : index
    %c1_301 = arith.constant 1 : index
    %998 = vector.load %arg10[%c1_299, %c2_300, %c1_301] : memref<4x18x18xf32, #tpu.memory_space<vmem>>, vector<1x16x16xf32>
    %999 = vector.shape_cast %998 : vector<1x16x16xf32> to vector<16x16xf32>
    %c16_302 = arith.constant 16 : index
    %1000 = memref.load %arg6[%c16_302] : memref<144xf32, #tpu.memory_space<smem>>
    %1001 = vector.broadcast %1000 : f32 to vector<16x16xf32>
    %1002 = arith.mulf %1001, %999 : vector<16x16xf32>
    %1003 = arith.addf %985, %1002 : vector<16x16xf32>
    %c52_303 = arith.constant 52 : index
    %1004 = memref.load %arg6[%c52_303] : memref<144xf32, #tpu.memory_space<smem>>
    %1005 = vector.broadcast %1004 : f32 to vector<16x16xf32>
    %1006 = arith.mulf %1005, %999 : vector<16x16xf32>
    %1007 = arith.addf %989, %1006 : vector<16x16xf32>
    %c88_304 = arith.constant 88 : index
    %1008 = memref.load %arg6[%c88_304] : memref<144xf32, #tpu.memory_space<smem>>
    %1009 = vector.broadcast %1008 : f32 to vector<16x16xf32>
    %1010 = arith.mulf %1009, %999 : vector<16x16xf32>
    %1011 = arith.addf %993, %1010 : vector<16x16xf32>
    %c124_305 = arith.constant 124 : index
    %1012 = memref.load %arg6[%c124_305] : memref<144xf32, #tpu.memory_space<smem>>
    %1013 = vector.broadcast %1012 : f32 to vector<16x16xf32>
    %1014 = arith.mulf %1013, %999 : vector<16x16xf32>
    %1015 = arith.addf %997, %1014 : vector<16x16xf32>
    %c1_306 = arith.constant 1 : index
    %c2_307 = arith.constant 2 : index
    %c2_308 = arith.constant 2 : index
    %1016 = vector.load %arg10[%c1_306, %c2_307, %c2_308] : memref<4x18x18xf32, #tpu.memory_space<vmem>>, vector<1x16x16xf32>
    %1017 = vector.shape_cast %1016 : vector<1x16x16xf32> to vector<16x16xf32>
    %c17_309 = arith.constant 17 : index
    %1018 = memref.load %arg6[%c17_309] : memref<144xf32, #tpu.memory_space<smem>>
    %1019 = vector.broadcast %1018 : f32 to vector<16x16xf32>
    %1020 = arith.mulf %1019, %1017 : vector<16x16xf32>
    %1021 = arith.addf %1003, %1020 : vector<16x16xf32>
    %c53_310 = arith.constant 53 : index
    %1022 = memref.load %arg6[%c53_310] : memref<144xf32, #tpu.memory_space<smem>>
    %1023 = vector.broadcast %1022 : f32 to vector<16x16xf32>
    %1024 = arith.mulf %1023, %1017 : vector<16x16xf32>
    %1025 = arith.addf %1007, %1024 : vector<16x16xf32>
    %c89_311 = arith.constant 89 : index
    %1026 = memref.load %arg6[%c89_311] : memref<144xf32, #tpu.memory_space<smem>>
    %1027 = vector.broadcast %1026 : f32 to vector<16x16xf32>
    %1028 = arith.mulf %1027, %1017 : vector<16x16xf32>
    %1029 = arith.addf %1011, %1028 : vector<16x16xf32>
    %c125_312 = arith.constant 125 : index
    %1030 = memref.load %arg6[%c125_312] : memref<144xf32, #tpu.memory_space<smem>>
    %1031 = vector.broadcast %1030 : f32 to vector<16x16xf32>
    %1032 = arith.mulf %1031, %1017 : vector<16x16xf32>
    %1033 = arith.addf %1015, %1032 : vector<16x16xf32>
    %c2_313 = arith.constant 2 : index
    %c0_314 = arith.constant 0 : index
    %c0_315 = arith.constant 0 : index
    %1034 = vector.load %arg10[%c2_313, %c0_314, %c0_315] : memref<4x18x18xf32, #tpu.memory_space<vmem>>, vector<1x16x16xf32>
    %1035 = vector.shape_cast %1034 : vector<1x16x16xf32> to vector<16x16xf32>
    %c18_316 = arith.constant 18 : index
    %1036 = memref.load %arg6[%c18_316] : memref<144xf32, #tpu.memory_space<smem>>
    %1037 = vector.broadcast %1036 : f32 to vector<16x16xf32>
    %1038 = arith.mulf %1037, %1035 : vector<16x16xf32>
    %1039 = arith.addf %1021, %1038 : vector<16x16xf32>
    %c54_317 = arith.constant 54 : index
    %1040 = memref.load %arg6[%c54_317] : memref<144xf32, #tpu.memory_space<smem>>
    %1041 = vector.broadcast %1040 : f32 to vector<16x16xf32>
    %1042 = arith.mulf %1041, %1035 : vector<16x16xf32>
    %1043 = arith.addf %1025, %1042 : vector<16x16xf32>
    %c90_318 = arith.constant 90 : index
    %1044 = memref.load %arg6[%c90_318] : memref<144xf32, #tpu.memory_space<smem>>
    %1045 = vector.broadcast %1044 : f32 to vector<16x16xf32>
    %1046 = arith.mulf %1045, %1035 : vector<16x16xf32>
    %1047 = arith.addf %1029, %1046 : vector<16x16xf32>
    %c126_319 = arith.constant 126 : index
    %1048 = memref.load %arg6[%c126_319] : memref<144xf32, #tpu.memory_space<smem>>
    %1049 = vector.broadcast %1048 : f32 to vector<16x16xf32>
    %1050 = arith.mulf %1049, %1035 : vector<16x16xf32>
    %1051 = arith.addf %1033, %1050 : vector<16x16xf32>
    %c2_320 = arith.constant 2 : index
    %c0_321 = arith.constant 0 : index
    %c1_322 = arith.constant 1 : index
    %1052 = vector.load %arg10[%c2_320, %c0_321, %c1_322] : memref<4x18x18xf32, #tpu.memory_space<vmem>>, vector<1x16x16xf32>
    %1053 = vector.shape_cast %1052 : vector<1x16x16xf32> to vector<16x16xf32>
    %c19_323 = arith.constant 19 : index
    %1054 = memref.load %arg6[%c19_323] : memref<144xf32, #tpu.memory_space<smem>>
    %1055 = vector.broadcast %1054 : f32 to vector<16x16xf32>
    %1056 = arith.mulf %1055, %1053 : vector<16x16xf32>
    %1057 = arith.addf %1039, %1056 : vector<16x16xf32>
    %c55_324 = arith.constant 55 : index
    %1058 = memref.load %arg6[%c55_324] : memref<144xf32, #tpu.memory_space<smem>>
    %1059 = vector.broadcast %1058 : f32 to vector<16x16xf32>
    %1060 = arith.mulf %1059, %1053 : vector<16x16xf32>
    %1061 = arith.addf %1043, %1060 : vector<16x16xf32>
    %c91_325 = arith.constant 91 : index
    %1062 = memref.load %arg6[%c91_325] : memref<144xf32, #tpu.memory_space<smem>>
    %1063 = vector.broadcast %1062 : f32 to vector<16x16xf32>
    %1064 = arith.mulf %1063, %1053 : vector<16x16xf32>
    %1065 = arith.addf %1047, %1064 : vector<16x16xf32>
    %c127_326 = arith.constant 127 : index
    %1066 = memref.load %arg6[%c127_326] : memref<144xf32, #tpu.memory_space<smem>>
    %1067 = vector.broadcast %1066 : f32 to vector<16x16xf32>
    %1068 = arith.mulf %1067, %1053 : vector<16x16xf32>
    %1069 = arith.addf %1051, %1068 : vector<16x16xf32>
    %c2_327 = arith.constant 2 : index
    %c0_328 = arith.constant 0 : index
    %c2_329 = arith.constant 2 : index
    %1070 = vector.load %arg10[%c2_327, %c0_328, %c2_329] : memref<4x18x18xf32, #tpu.memory_space<vmem>>, vector<1x16x16xf32>
    %1071 = vector.shape_cast %1070 : vector<1x16x16xf32> to vector<16x16xf32>
    %c20_330 = arith.constant 20 : index
    %1072 = memref.load %arg6[%c20_330] : memref<144xf32, #tpu.memory_space<smem>>
    %1073 = vector.broadcast %1072 : f32 to vector<16x16xf32>
    %1074 = arith.mulf %1073, %1071 : vector<16x16xf32>
    %1075 = arith.addf %1057, %1074 : vector<16x16xf32>
    %c56_331 = arith.constant 56 : index
    %1076 = memref.load %arg6[%c56_331] : memref<144xf32, #tpu.memory_space<smem>>
    %1077 = vector.broadcast %1076 : f32 to vector<16x16xf32>
    %1078 = arith.mulf %1077, %1071 : vector<16x16xf32>
    %1079 = arith.addf %1061, %1078 : vector<16x16xf32>
    %c92_332 = arith.constant 92 : index
    %1080 = memref.load %arg6[%c92_332] : memref<144xf32, #tpu.memory_space<smem>>
    %1081 = vector.broadcast %1080 : f32 to vector<16x16xf32>
    %1082 = arith.mulf %1081, %1071 : vector<16x16xf32>
    %1083 = arith.addf %1065, %1082 : vector<16x16xf32>
    %c128_333 = arith.constant 128 : index
    %1084 = memref.load %arg6[%c128_333] : memref<144xf32, #tpu.memory_space<smem>>
    %1085 = vector.broadcast %1084 : f32 to vector<16x16xf32>
    %1086 = arith.mulf %1085, %1071 : vector<16x16xf32>
    %1087 = arith.addf %1069, %1086 : vector<16x16xf32>
    %c2_334 = arith.constant 2 : index
    %c1_335 = arith.constant 1 : index
    %c0_336 = arith.constant 0 : index
    %1088 = vector.load %arg10[%c2_334, %c1_335, %c0_336] : memref<4x18x18xf32, #tpu.memory_space<vmem>>, vector<1x16x16xf32>
    %1089 = vector.shape_cast %1088 : vector<1x16x16xf32> to vector<16x16xf32>
    %c21_337 = arith.constant 21 : index
    %1090 = memref.load %arg6[%c21_337] : memref<144xf32, #tpu.memory_space<smem>>
    %1091 = vector.broadcast %1090 : f32 to vector<16x16xf32>
    %1092 = arith.mulf %1091, %1089 : vector<16x16xf32>
    %1093 = arith.addf %1075, %1092 : vector<16x16xf32>
    %c57_338 = arith.constant 57 : index
    %1094 = memref.load %arg6[%c57_338] : memref<144xf32, #tpu.memory_space<smem>>
    %1095 = vector.broadcast %1094 : f32 to vector<16x16xf32>
    %1096 = arith.mulf %1095, %1089 : vector<16x16xf32>
    %1097 = arith.addf %1079, %1096 : vector<16x16xf32>
    %c93_339 = arith.constant 93 : index
    %1098 = memref.load %arg6[%c93_339] : memref<144xf32, #tpu.memory_space<smem>>
    %1099 = vector.broadcast %1098 : f32 to vector<16x16xf32>
    %1100 = arith.mulf %1099, %1089 : vector<16x16xf32>
    %1101 = arith.addf %1083, %1100 : vector<16x16xf32>
    %c129_340 = arith.constant 129 : index
    %1102 = memref.load %arg6[%c129_340] : memref<144xf32, #tpu.memory_space<smem>>
    %1103 = vector.broadcast %1102 : f32 to vector<16x16xf32>
    %1104 = arith.mulf %1103, %1089 : vector<16x16xf32>
    %1105 = arith.addf %1087, %1104 : vector<16x16xf32>
    %c2_341 = arith.constant 2 : index
    %c1_342 = arith.constant 1 : index
    %c1_343 = arith.constant 1 : index
    %1106 = vector.load %arg10[%c2_341, %c1_342, %c1_343] : memref<4x18x18xf32, #tpu.memory_space<vmem>>, vector<1x16x16xf32>
    %1107 = vector.shape_cast %1106 : vector<1x16x16xf32> to vector<16x16xf32>
    %c22_344 = arith.constant 22 : index
    %1108 = memref.load %arg6[%c22_344] : memref<144xf32, #tpu.memory_space<smem>>
    %1109 = vector.broadcast %1108 : f32 to vector<16x16xf32>
    %1110 = arith.mulf %1109, %1107 : vector<16x16xf32>
    %1111 = arith.addf %1093, %1110 : vector<16x16xf32>
    %c58_345 = arith.constant 58 : index
    %1112 = memref.load %arg6[%c58_345] : memref<144xf32, #tpu.memory_space<smem>>
    %1113 = vector.broadcast %1112 : f32 to vector<16x16xf32>
    %1114 = arith.mulf %1113, %1107 : vector<16x16xf32>
    %1115 = arith.addf %1097, %1114 : vector<16x16xf32>
    %c94_346 = arith.constant 94 : index
    %1116 = memref.load %arg6[%c94_346] : memref<144xf32, #tpu.memory_space<smem>>
    %1117 = vector.broadcast %1116 : f32 to vector<16x16xf32>
    %1118 = arith.mulf %1117, %1107 : vector<16x16xf32>
    %1119 = arith.addf %1101, %1118 : vector<16x16xf32>
    %c130_347 = arith.constant 130 : index
    %1120 = memref.load %arg6[%c130_347] : memref<144xf32, #tpu.memory_space<smem>>
    %1121 = vector.broadcast %1120 : f32 to vector<16x16xf32>
    %1122 = arith.mulf %1121, %1107 : vector<16x16xf32>
    %1123 = arith.addf %1105, %1122 : vector<16x16xf32>
    %c2_348 = arith.constant 2 : index
    %c1_349 = arith.constant 1 : index
    %c2_350 = arith.constant 2 : index
    %1124 = vector.load %arg10[%c2_348, %c1_349, %c2_350] : memref<4x18x18xf32, #tpu.memory_space<vmem>>, vector<1x16x16xf32>
    %1125 = vector.shape_cast %1124 : vector<1x16x16xf32> to vector<16x16xf32>
    %c23_351 = arith.constant 23 : index
    %1126 = memref.load %arg6[%c23_351] : memref<144xf32, #tpu.memory_space<smem>>
    %1127 = vector.broadcast %1126 : f32 to vector<16x16xf32>
    %1128 = arith.mulf %1127, %1125 : vector<16x16xf32>
    %1129 = arith.addf %1111, %1128 : vector<16x16xf32>
    %c59_352 = arith.constant 59 : index
    %1130 = memref.load %arg6[%c59_352] : memref<144xf32, #tpu.memory_space<smem>>
    %1131 = vector.broadcast %1130 : f32 to vector<16x16xf32>
    %1132 = arith.mulf %1131, %1125 : vector<16x16xf32>
    %1133 = arith.addf %1115, %1132 : vector<16x16xf32>
    %c95_353 = arith.constant 95 : index
    %1134 = memref.load %arg6[%c95_353] : memref<144xf32, #tpu.memory_space<smem>>
    %1135 = vector.broadcast %1134 : f32 to vector<16x16xf32>
    %1136 = arith.mulf %1135, %1125 : vector<16x16xf32>
    %1137 = arith.addf %1119, %1136 : vector<16x16xf32>
    %c131_354 = arith.constant 131 : index
    %1138 = memref.load %arg6[%c131_354] : memref<144xf32, #tpu.memory_space<smem>>
    %1139 = vector.broadcast %1138 : f32 to vector<16x16xf32>
    %1140 = arith.mulf %1139, %1125 : vector<16x16xf32>
    %1141 = arith.addf %1123, %1140 : vector<16x16xf32>
    %c2_355 = arith.constant 2 : index
    %c2_356 = arith.constant 2 : index
    %c0_357 = arith.constant 0 : index
    %1142 = vector.load %arg10[%c2_355, %c2_356, %c0_357] : memref<4x18x18xf32, #tpu.memory_space<vmem>>, vector<1x16x16xf32>
    %1143 = vector.shape_cast %1142 : vector<1x16x16xf32> to vector<16x16xf32>
    %c24_358 = arith.constant 24 : index
    %1144 = memref.load %arg6[%c24_358] : memref<144xf32, #tpu.memory_space<smem>>
    %1145 = vector.broadcast %1144 : f32 to vector<16x16xf32>
    %1146 = arith.mulf %1145, %1143 : vector<16x16xf32>
    %1147 = arith.addf %1129, %1146 : vector<16x16xf32>
    %c60_359 = arith.constant 60 : index
    %1148 = memref.load %arg6[%c60_359] : memref<144xf32, #tpu.memory_space<smem>>
    %1149 = vector.broadcast %1148 : f32 to vector<16x16xf32>
    %1150 = arith.mulf %1149, %1143 : vector<16x16xf32>
    %1151 = arith.addf %1133, %1150 : vector<16x16xf32>
    %c96_360 = arith.constant 96 : index
    %1152 = memref.load %arg6[%c96_360] : memref<144xf32, #tpu.memory_space<smem>>
    %1153 = vector.broadcast %1152 : f32 to vector<16x16xf32>
    %1154 = arith.mulf %1153, %1143 : vector<16x16xf32>
    %1155 = arith.addf %1137, %1154 : vector<16x16xf32>
    %c132_361 = arith.constant 132 : index
    %1156 = memref.load %arg6[%c132_361] : memref<144xf32, #tpu.memory_space<smem>>
    %1157 = vector.broadcast %1156 : f32 to vector<16x16xf32>
    %1158 = arith.mulf %1157, %1143 : vector<16x16xf32>
    %1159 = arith.addf %1141, %1158 : vector<16x16xf32>
    %c2_362 = arith.constant 2 : index
    %c2_363 = arith.constant 2 : index
    %c1_364 = arith.constant 1 : index
    %1160 = vector.load %arg10[%c2_362, %c2_363, %c1_364] : memref<4x18x18xf32, #tpu.memory_space<vmem>>, vector<1x16x16xf32>
    %1161 = vector.shape_cast %1160 : vector<1x16x16xf32> to vector<16x16xf32>
    %c25_365 = arith.constant 25 : index
    %1162 = memref.load %arg6[%c25_365] : memref<144xf32, #tpu.memory_space<smem>>
    %1163 = vector.broadcast %1162 : f32 to vector<16x16xf32>
    %1164 = arith.mulf %1163, %1161 : vector<16x16xf32>
    %1165 = arith.addf %1147, %1164 : vector<16x16xf32>
    %c61_366 = arith.constant 61 : index
    %1166 = memref.load %arg6[%c61_366] : memref<144xf32, #tpu.memory_space<smem>>
    %1167 = vector.broadcast %1166 : f32 to vector<16x16xf32>
    %1168 = arith.mulf %1167, %1161 : vector<16x16xf32>
    %1169 = arith.addf %1151, %1168 : vector<16x16xf32>
    %c97_367 = arith.constant 97 : index
    %1170 = memref.load %arg6[%c97_367] : memref<144xf32, #tpu.memory_space<smem>>
    %1171 = vector.broadcast %1170 : f32 to vector<16x16xf32>
    %1172 = arith.mulf %1171, %1161 : vector<16x16xf32>
    %1173 = arith.addf %1155, %1172 : vector<16x16xf32>
    %c133_368 = arith.constant 133 : index
    %1174 = memref.load %arg6[%c133_368] : memref<144xf32, #tpu.memory_space<smem>>
    %1175 = vector.broadcast %1174 : f32 to vector<16x16xf32>
    %1176 = arith.mulf %1175, %1161 : vector<16x16xf32>
    %1177 = arith.addf %1159, %1176 : vector<16x16xf32>
    %c2_369 = arith.constant 2 : index
    %c2_370 = arith.constant 2 : index
    %c2_371 = arith.constant 2 : index
    %1178 = vector.load %arg10[%c2_369, %c2_370, %c2_371] : memref<4x18x18xf32, #tpu.memory_space<vmem>>, vector<1x16x16xf32>
    %1179 = vector.shape_cast %1178 : vector<1x16x16xf32> to vector<16x16xf32>
    %c26_372 = arith.constant 26 : index
    %1180 = memref.load %arg6[%c26_372] : memref<144xf32, #tpu.memory_space<smem>>
    %1181 = vector.broadcast %1180 : f32 to vector<16x16xf32>
    %1182 = arith.mulf %1181, %1179 : vector<16x16xf32>
    %1183 = arith.addf %1165, %1182 : vector<16x16xf32>
    %c62_373 = arith.constant 62 : index
    %1184 = memref.load %arg6[%c62_373] : memref<144xf32, #tpu.memory_space<smem>>
    %1185 = vector.broadcast %1184 : f32 to vector<16x16xf32>
    %1186 = arith.mulf %1185, %1179 : vector<16x16xf32>
    %1187 = arith.addf %1169, %1186 : vector<16x16xf32>
    %c98_374 = arith.constant 98 : index
    %1188 = memref.load %arg6[%c98_374] : memref<144xf32, #tpu.memory_space<smem>>
    %1189 = vector.broadcast %1188 : f32 to vector<16x16xf32>
    %1190 = arith.mulf %1189, %1179 : vector<16x16xf32>
    %1191 = arith.addf %1173, %1190 : vector<16x16xf32>
    %c134_375 = arith.constant 134 : index
    %1192 = memref.load %arg6[%c134_375] : memref<144xf32, #tpu.memory_space<smem>>
    %1193 = vector.broadcast %1192 : f32 to vector<16x16xf32>
    %1194 = arith.mulf %1193, %1179 : vector<16x16xf32>
    %1195 = arith.addf %1177, %1194 : vector<16x16xf32>
    %c3_376 = arith.constant 3 : index
    %c0_377 = arith.constant 0 : index
    %c0_378 = arith.constant 0 : index
    %1196 = vector.load %arg10[%c3_376, %c0_377, %c0_378] : memref<4x18x18xf32, #tpu.memory_space<vmem>>, vector<1x16x16xf32>
    %1197 = vector.shape_cast %1196 : vector<1x16x16xf32> to vector<16x16xf32>
    %c27_379 = arith.constant 27 : index
    %1198 = memref.load %arg6[%c27_379] : memref<144xf32, #tpu.memory_space<smem>>
    %1199 = vector.broadcast %1198 : f32 to vector<16x16xf32>
    %1200 = arith.mulf %1199, %1197 : vector<16x16xf32>
    %1201 = arith.addf %1183, %1200 : vector<16x16xf32>
    %c63_380 = arith.constant 63 : index
    %1202 = memref.load %arg6[%c63_380] : memref<144xf32, #tpu.memory_space<smem>>
    %1203 = vector.broadcast %1202 : f32 to vector<16x16xf32>
    %1204 = arith.mulf %1203, %1197 : vector<16x16xf32>
    %1205 = arith.addf %1187, %1204 : vector<16x16xf32>
    %c99_381 = arith.constant 99 : index
    %1206 = memref.load %arg6[%c99_381] : memref<144xf32, #tpu.memory_space<smem>>
    %1207 = vector.broadcast %1206 : f32 to vector<16x16xf32>
    %1208 = arith.mulf %1207, %1197 : vector<16x16xf32>
    %1209 = arith.addf %1191, %1208 : vector<16x16xf32>
    %c135_382 = arith.constant 135 : index
    %1210 = memref.load %arg6[%c135_382] : memref<144xf32, #tpu.memory_space<smem>>
    %1211 = vector.broadcast %1210 : f32 to vector<16x16xf32>
    %1212 = arith.mulf %1211, %1197 : vector<16x16xf32>
    %1213 = arith.addf %1195, %1212 : vector<16x16xf32>
    %c3_383 = arith.constant 3 : index
    %c0_384 = arith.constant 0 : index
    %c1_385 = arith.constant 1 : index
    %1214 = vector.load %arg10[%c3_383, %c0_384, %c1_385] : memref<4x18x18xf32, #tpu.memory_space<vmem>>, vector<1x16x16xf32>
    %1215 = vector.shape_cast %1214 : vector<1x16x16xf32> to vector<16x16xf32>
    %c28_386 = arith.constant 28 : index
    %1216 = memref.load %arg6[%c28_386] : memref<144xf32, #tpu.memory_space<smem>>
    %1217 = vector.broadcast %1216 : f32 to vector<16x16xf32>
    %1218 = arith.mulf %1217, %1215 : vector<16x16xf32>
    %1219 = arith.addf %1201, %1218 : vector<16x16xf32>
    %c64_387 = arith.constant 64 : index
    %1220 = memref.load %arg6[%c64_387] : memref<144xf32, #tpu.memory_space<smem>>
    %1221 = vector.broadcast %1220 : f32 to vector<16x16xf32>
    %1222 = arith.mulf %1221, %1215 : vector<16x16xf32>
    %1223 = arith.addf %1205, %1222 : vector<16x16xf32>
    %c100_388 = arith.constant 100 : index
    %1224 = memref.load %arg6[%c100_388] : memref<144xf32, #tpu.memory_space<smem>>
    %1225 = vector.broadcast %1224 : f32 to vector<16x16xf32>
    %1226 = arith.mulf %1225, %1215 : vector<16x16xf32>
    %1227 = arith.addf %1209, %1226 : vector<16x16xf32>
    %c136_389 = arith.constant 136 : index
    %1228 = memref.load %arg6[%c136_389] : memref<144xf32, #tpu.memory_space<smem>>
    %1229 = vector.broadcast %1228 : f32 to vector<16x16xf32>
    %1230 = arith.mulf %1229, %1215 : vector<16x16xf32>
    %1231 = arith.addf %1213, %1230 : vector<16x16xf32>
    %c3_390 = arith.constant 3 : index
    %c0_391 = arith.constant 0 : index
    %c2_392 = arith.constant 2 : index
    %1232 = vector.load %arg10[%c3_390, %c0_391, %c2_392] : memref<4x18x18xf32, #tpu.memory_space<vmem>>, vector<1x16x16xf32>
    %1233 = vector.shape_cast %1232 : vector<1x16x16xf32> to vector<16x16xf32>
    %c29_393 = arith.constant 29 : index
    %1234 = memref.load %arg6[%c29_393] : memref<144xf32, #tpu.memory_space<smem>>
    %1235 = vector.broadcast %1234 : f32 to vector<16x16xf32>
    %1236 = arith.mulf %1235, %1233 : vector<16x16xf32>
    %1237 = arith.addf %1219, %1236 : vector<16x16xf32>
    %c65_394 = arith.constant 65 : index
    %1238 = memref.load %arg6[%c65_394] : memref<144xf32, #tpu.memory_space<smem>>
    %1239 = vector.broadcast %1238 : f32 to vector<16x16xf32>
    %1240 = arith.mulf %1239, %1233 : vector<16x16xf32>
    %1241 = arith.addf %1223, %1240 : vector<16x16xf32>
    %c101_395 = arith.constant 101 : index
    %1242 = memref.load %arg6[%c101_395] : memref<144xf32, #tpu.memory_space<smem>>
    %1243 = vector.broadcast %1242 : f32 to vector<16x16xf32>
    %1244 = arith.mulf %1243, %1233 : vector<16x16xf32>
    %1245 = arith.addf %1227, %1244 : vector<16x16xf32>
    %c137_396 = arith.constant 137 : index
    %1246 = memref.load %arg6[%c137_396] : memref<144xf32, #tpu.memory_space<smem>>
    %1247 = vector.broadcast %1246 : f32 to vector<16x16xf32>
    %1248 = arith.mulf %1247, %1233 : vector<16x16xf32>
    %1249 = arith.addf %1231, %1248 : vector<16x16xf32>
    %c3_397 = arith.constant 3 : index
    %c1_398 = arith.constant 1 : index
    %c0_399 = arith.constant 0 : index
    %1250 = vector.load %arg10[%c3_397, %c1_398, %c0_399] : memref<4x18x18xf32, #tpu.memory_space<vmem>>, vector<1x16x16xf32>
    %1251 = vector.shape_cast %1250 : vector<1x16x16xf32> to vector<16x16xf32>
    %c30_400 = arith.constant 30 : index
    %1252 = memref.load %arg6[%c30_400] : memref<144xf32, #tpu.memory_space<smem>>
    %1253 = vector.broadcast %1252 : f32 to vector<16x16xf32>
    %1254 = arith.mulf %1253, %1251 : vector<16x16xf32>
    %1255 = arith.addf %1237, %1254 : vector<16x16xf32>
    %c66_401 = arith.constant 66 : index
    %1256 = memref.load %arg6[%c66_401] : memref<144xf32, #tpu.memory_space<smem>>
    %1257 = vector.broadcast %1256 : f32 to vector<16x16xf32>
    %1258 = arith.mulf %1257, %1251 : vector<16x16xf32>
    %1259 = arith.addf %1241, %1258 : vector<16x16xf32>
    %c102_402 = arith.constant 102 : index
    %1260 = memref.load %arg6[%c102_402] : memref<144xf32, #tpu.memory_space<smem>>
    %1261 = vector.broadcast %1260 : f32 to vector<16x16xf32>
    %1262 = arith.mulf %1261, %1251 : vector<16x16xf32>
    %1263 = arith.addf %1245, %1262 : vector<16x16xf32>
    %c138_403 = arith.constant 138 : index
    %1264 = memref.load %arg6[%c138_403] : memref<144xf32, #tpu.memory_space<smem>>
    %1265 = vector.broadcast %1264 : f32 to vector<16x16xf32>
    %1266 = arith.mulf %1265, %1251 : vector<16x16xf32>
    %1267 = arith.addf %1249, %1266 : vector<16x16xf32>
    %c3_404 = arith.constant 3 : index
    %c1_405 = arith.constant 1 : index
    %c1_406 = arith.constant 1 : index
    %1268 = vector.load %arg10[%c3_404, %c1_405, %c1_406] : memref<4x18x18xf32, #tpu.memory_space<vmem>>, vector<1x16x16xf32>
    %1269 = vector.shape_cast %1268 : vector<1x16x16xf32> to vector<16x16xf32>
    %c31_407 = arith.constant 31 : index
    %1270 = memref.load %arg6[%c31_407] : memref<144xf32, #tpu.memory_space<smem>>
    %1271 = vector.broadcast %1270 : f32 to vector<16x16xf32>
    %1272 = arith.mulf %1271, %1269 : vector<16x16xf32>
    %1273 = arith.addf %1255, %1272 : vector<16x16xf32>
    %c67_408 = arith.constant 67 : index
    %1274 = memref.load %arg6[%c67_408] : memref<144xf32, #tpu.memory_space<smem>>
    %1275 = vector.broadcast %1274 : f32 to vector<16x16xf32>
    %1276 = arith.mulf %1275, %1269 : vector<16x16xf32>
    %1277 = arith.addf %1259, %1276 : vector<16x16xf32>
    %c103_409 = arith.constant 103 : index
    %1278 = memref.load %arg6[%c103_409] : memref<144xf32, #tpu.memory_space<smem>>
    %1279 = vector.broadcast %1278 : f32 to vector<16x16xf32>
    %1280 = arith.mulf %1279, %1269 : vector<16x16xf32>
    %1281 = arith.addf %1263, %1280 : vector<16x16xf32>
    %c139_410 = arith.constant 139 : index
    %1282 = memref.load %arg6[%c139_410] : memref<144xf32, #tpu.memory_space<smem>>
    %1283 = vector.broadcast %1282 : f32 to vector<16x16xf32>
    %1284 = arith.mulf %1283, %1269 : vector<16x16xf32>
    %1285 = arith.addf %1267, %1284 : vector<16x16xf32>
    %c3_411 = arith.constant 3 : index
    %c1_412 = arith.constant 1 : index
    %c2_413 = arith.constant 2 : index
    %1286 = vector.load %arg10[%c3_411, %c1_412, %c2_413] : memref<4x18x18xf32, #tpu.memory_space<vmem>>, vector<1x16x16xf32>
    %1287 = vector.shape_cast %1286 : vector<1x16x16xf32> to vector<16x16xf32>
    %c32_414 = arith.constant 32 : index
    %1288 = memref.load %arg6[%c32_414] : memref<144xf32, #tpu.memory_space<smem>>
    %1289 = vector.broadcast %1288 : f32 to vector<16x16xf32>
    %1290 = arith.mulf %1289, %1287 : vector<16x16xf32>
    %1291 = arith.addf %1273, %1290 : vector<16x16xf32>
    %c68_415 = arith.constant 68 : index
    %1292 = memref.load %arg6[%c68_415] : memref<144xf32, #tpu.memory_space<smem>>
    %1293 = vector.broadcast %1292 : f32 to vector<16x16xf32>
    %1294 = arith.mulf %1293, %1287 : vector<16x16xf32>
    %1295 = arith.addf %1277, %1294 : vector<16x16xf32>
    %c104_416 = arith.constant 104 : index
    %1296 = memref.load %arg6[%c104_416] : memref<144xf32, #tpu.memory_space<smem>>
    %1297 = vector.broadcast %1296 : f32 to vector<16x16xf32>
    %1298 = arith.mulf %1297, %1287 : vector<16x16xf32>
    %1299 = arith.addf %1281, %1298 : vector<16x16xf32>
    %c140_417 = arith.constant 140 : index
    %1300 = memref.load %arg6[%c140_417] : memref<144xf32, #tpu.memory_space<smem>>
    %1301 = vector.broadcast %1300 : f32 to vector<16x16xf32>
    %1302 = arith.mulf %1301, %1287 : vector<16x16xf32>
    %1303 = arith.addf %1285, %1302 : vector<16x16xf32>
    %c3_418 = arith.constant 3 : index
    %c2_419 = arith.constant 2 : index
    %c0_420 = arith.constant 0 : index
    %1304 = vector.load %arg10[%c3_418, %c2_419, %c0_420] : memref<4x18x18xf32, #tpu.memory_space<vmem>>, vector<1x16x16xf32>
    %1305 = vector.shape_cast %1304 : vector<1x16x16xf32> to vector<16x16xf32>
    %c33_421 = arith.constant 33 : index
    %1306 = memref.load %arg6[%c33_421] : memref<144xf32, #tpu.memory_space<smem>>
    %1307 = vector.broadcast %1306 : f32 to vector<16x16xf32>
    %1308 = arith.mulf %1307, %1305 : vector<16x16xf32>
    %1309 = arith.addf %1291, %1308 : vector<16x16xf32>
    %c69_422 = arith.constant 69 : index
    %1310 = memref.load %arg6[%c69_422] : memref<144xf32, #tpu.memory_space<smem>>
    %1311 = vector.broadcast %1310 : f32 to vector<16x16xf32>
    %1312 = arith.mulf %1311, %1305 : vector<16x16xf32>
    %1313 = arith.addf %1295, %1312 : vector<16x16xf32>
    %c105_423 = arith.constant 105 : index
    %1314 = memref.load %arg6[%c105_423] : memref<144xf32, #tpu.memory_space<smem>>
    %1315 = vector.broadcast %1314 : f32 to vector<16x16xf32>
    %1316 = arith.mulf %1315, %1305 : vector<16x16xf32>
    %1317 = arith.addf %1299, %1316 : vector<16x16xf32>
    %c141_424 = arith.constant 141 : index
    %1318 = memref.load %arg6[%c141_424] : memref<144xf32, #tpu.memory_space<smem>>
    %1319 = vector.broadcast %1318 : f32 to vector<16x16xf32>
    %1320 = arith.mulf %1319, %1305 : vector<16x16xf32>
    %1321 = arith.addf %1303, %1320 : vector<16x16xf32>
    %c3_425 = arith.constant 3 : index
    %c2_426 = arith.constant 2 : index
    %c1_427 = arith.constant 1 : index
    %1322 = vector.load %arg10[%c3_425, %c2_426, %c1_427] : memref<4x18x18xf32, #tpu.memory_space<vmem>>, vector<1x16x16xf32>
    %1323 = vector.shape_cast %1322 : vector<1x16x16xf32> to vector<16x16xf32>
    %c34_428 = arith.constant 34 : index
    %1324 = memref.load %arg6[%c34_428] : memref<144xf32, #tpu.memory_space<smem>>
    %1325 = vector.broadcast %1324 : f32 to vector<16x16xf32>
    %1326 = arith.mulf %1325, %1323 : vector<16x16xf32>
    %1327 = arith.addf %1309, %1326 : vector<16x16xf32>
    %c70_429 = arith.constant 70 : index
    %1328 = memref.load %arg6[%c70_429] : memref<144xf32, #tpu.memory_space<smem>>
    %1329 = vector.broadcast %1328 : f32 to vector<16x16xf32>
    %1330 = arith.mulf %1329, %1323 : vector<16x16xf32>
    %1331 = arith.addf %1313, %1330 : vector<16x16xf32>
    %c106_430 = arith.constant 106 : index
    %1332 = memref.load %arg6[%c106_430] : memref<144xf32, #tpu.memory_space<smem>>
    %1333 = vector.broadcast %1332 : f32 to vector<16x16xf32>
    %1334 = arith.mulf %1333, %1323 : vector<16x16xf32>
    %1335 = arith.addf %1317, %1334 : vector<16x16xf32>
    %c142_431 = arith.constant 142 : index
    %1336 = memref.load %arg6[%c142_431] : memref<144xf32, #tpu.memory_space<smem>>
    %1337 = vector.broadcast %1336 : f32 to vector<16x16xf32>
    %1338 = arith.mulf %1337, %1323 : vector<16x16xf32>
    %1339 = arith.addf %1321, %1338 : vector<16x16xf32>
    %c3_432 = arith.constant 3 : index
    %c2_433 = arith.constant 2 : index
    %c2_434 = arith.constant 2 : index
    %1340 = vector.load %arg10[%c3_432, %c2_433, %c2_434] : memref<4x18x18xf32, #tpu.memory_space<vmem>>, vector<1x16x16xf32>
    %1341 = vector.shape_cast %1340 : vector<1x16x16xf32> to vector<16x16xf32>
    %c35_435 = arith.constant 35 : index
    %1342 = memref.load %arg6[%c35_435] : memref<144xf32, #tpu.memory_space<smem>>
    %1343 = vector.broadcast %1342 : f32 to vector<16x16xf32>
    %1344 = arith.mulf %1343, %1341 : vector<16x16xf32>
    %1345 = arith.addf %1327, %1344 : vector<16x16xf32>
    %c71_436 = arith.constant 71 : index
    %1346 = memref.load %arg6[%c71_436] : memref<144xf32, #tpu.memory_space<smem>>
    %1347 = vector.broadcast %1346 : f32 to vector<16x16xf32>
    %1348 = arith.mulf %1347, %1341 : vector<16x16xf32>
    %1349 = arith.addf %1331, %1348 : vector<16x16xf32>
    %c107_437 = arith.constant 107 : index
    %1350 = memref.load %arg6[%c107_437] : memref<144xf32, #tpu.memory_space<smem>>
    %1351 = vector.broadcast %1350 : f32 to vector<16x16xf32>
    %1352 = arith.mulf %1351, %1341 : vector<16x16xf32>
    %1353 = arith.addf %1335, %1352 : vector<16x16xf32>
    %c143_438 = arith.constant 143 : index
    %1354 = memref.load %arg6[%c143_438] : memref<144xf32, #tpu.memory_space<smem>>
    %1355 = vector.broadcast %1354 : f32 to vector<16x16xf32>
    %1356 = arith.mulf %1355, %1341 : vector<16x16xf32>
    %1357 = arith.addf %1339, %1356 : vector<16x16xf32>
    %cst_439 = arith.constant 0.000000e+00 : f32
    %1358 = vector.broadcast %cst_439 : f32 to vector<16x16xf32>
    %1359 = arith.maximumf %1345, %1358 : vector<16x16xf32>
    %c0_440 = arith.constant 0 : index
    %c0_441 = arith.constant 0 : index
    %c0_442 = arith.constant 0 : index
    %c0_443 = arith.constant 0 : index
    %1360 = vector.load %arg8[%c0_440, %c0_441, %c0_442, %c0_443] : memref<1x4x16x16xf32, #tpu.memory_space<vmem>>, vector<1x1x16x16xf32>
    %1361 = vector.shape_cast %1360 : vector<1x1x16x16xf32> to vector<16x16xf32>
    %1362 = vector.shape_cast %1359 : vector<16x16xf32> to vector<1x1x16x16xf32>
    tpu.vector_store %arg8[%c0_440, %c0_441, %c0_442, %c0_443], %1362 {strides = array<i32>} : memref<1x4x16x16xf32, #tpu.memory_space<vmem>>, vector<1x1x16x16xf32>,
    %cst_444 = arith.constant 0.000000e+00 : f32
    %1363 = vector.broadcast %cst_444 : f32 to vector<16x16xf32>
    %1364 = arith.maximumf %1349, %1363 : vector<16x16xf32>
    %c0_445 = arith.constant 0 : index
    %c1_446 = arith.constant 1 : index
    %c0_447 = arith.constant 0 : index
    %c0_448 = arith.constant 0 : index
    %1365 = vector.load %arg8[%c0_445, %c1_446, %c0_447, %c0_448] : memref<1x4x16x16xf32, #tpu.memory_space<vmem>>, vector<1x1x16x16xf32>
    %1366 = vector.shape_cast %1365 : vector<1x1x16x16xf32> to vector<16x16xf32>
    %1367 = vector.shape_cast %1364 : vector<16x16xf32> to vector<1x1x16x16xf32>
    tpu.vector_store %arg8[%c0_445, %c1_446, %c0_447, %c0_448], %1367 {strides = array<i32>} : memref<1x4x16x16xf32, #tpu.memory_space<vmem>>, vector<1x1x16x16xf32>,
    %cst_449 = arith.constant 0.000000e+00 : f32
    %1368 = vector.broadcast %cst_449 : f32 to vector<16x16xf32>
    %1369 = arith.maximumf %1353, %1368 : vector<16x16xf32>
    %c0_450 = arith.constant 0 : index
    %c2_451 = arith.constant 2 : index
    %c0_452 = arith.constant 0 : index
    %c0_453 = arith.constant 0 : index
    %1370 = vector.load %arg8[%c0_450, %c2_451, %c0_452, %c0_453] : memref<1x4x16x16xf32, #tpu.memory_space<vmem>>, vector<1x1x16x16xf32>
    %1371 = vector.shape_cast %1370 : vector<1x1x16x16xf32> to vector<16x16xf32>
    %1372 = vector.shape_cast %1369 : vector<16x16xf32> to vector<1x1x16x16xf32>
    tpu.vector_store %arg8[%c0_450, %c2_451, %c0_452, %c0_453], %1372 {strides = array<i32>} : memref<1x4x16x16xf32, #tpu.memory_space<vmem>>, vector<1x1x16x16xf32>,
    %cst_454 = arith.constant 0.000000e+00 : f32
    %1373 = vector.broadcast %cst_454 : f32 to vector<16x16xf32>
    %1374 = arith.maximumf %1357, %1373 : vector<16x16xf32>
    %c0_455 = arith.constant 0 : index
    %c3_456 = arith.constant 3 : index
    %c0_457 = arith.constant 0 : index
    %c0_458 = arith.constant 0 : index
    %1375 = vector.load %arg8[%c0_455, %c3_456, %c0_457, %c0_458] : memref<1x4x16x16xf32, #tpu.memory_space<vmem>>, vector<1x1x16x16xf32>
    %1376 = vector.shape_cast %1375 : vector<1x1x16x16xf32> to vector<16x16xf32>
    %1377 = vector.shape_cast %1374 : vector<16x16xf32> to vector<1x1x16x16xf32>
    tpu.vector_store %arg8[%c0_455, %c3_456, %c0_457, %c0_458], %1377 {strides = array<i32>} : memref<1x4x16x16xf32, #tpu.memory_space<vmem>>, vector<1x1x16x16xf32>,
    return
  }
  func.func @transform_0(%arg0: i32) -> (i32, i32, i32, i32) {
    %c0_i32 = arith.constant 0 : i32
    %c0_i32_0 = arith.constant 0 : i32
    %c0_i32_1 = arith.constant 0 : i32
    %c0_i32_2 = arith.constant 0 : i32
    return %arg0, %c0_i32, %c0_i32_0, %c0_i32_1 : i32, i32, i32, i32
  }
  func.func @transform_1(%arg0: i32) -> (i32, i32, i32, i32) {
    %c0_i32 = arith.constant 0 : i32
    %c0_i32_0 = arith.constant 0 : i32
    %c0_i32_1 = arith.constant 0 : i32
    %c0_i32_2 = arith.constant 0 : i32
    return %arg0, %c0_i32, %c0_i32_0, %c0_i32_1 : i32, i32, i32, i32
  }
  func.func @transform_2(%arg0: i32) -> (i32, i32) {
    %c0_i32 = arith.constant 0 : i32
    %c0_i32_0 = arith.constant 0 : i32
    %c0_i32_1 = arith.constant 0 : i32
    return %c0_i32, %c0_i32_0 : i32, i32
  }
  func.func @transform_3(%arg0: i32) -> (i32, i32) {
    %c0_i32 = arith.constant 0 : i32
    %c0_i32_0 = arith.constant 0 : i32
    %c0_i32_1 = arith.constant 0 : i32
    return %c0_i32, %c0_i32_0 : i32, i32
  }
  func.func @transform_4(%arg0: i32) -> i32 {
    %c0_i32 = arith.constant 0 : i32
    %c0_i32_0 = arith.constant 0 : i32
    return %c0_i32 : i32
  }
  func.func @transform_5(%arg0: i32) -> i32 {
    %c0_i32 = arith.constant 0 : i32
    %c0_i32_0 = arith.constant 0 : i32
    return %c0_i32 : i32
  }
  func.func @transform_6(%arg0: i32) -> i32 {
    %c0_i32 = arith.constant 0 : i32
    %c0_i32_0 = arith.constant 0 : i32
    return %c0_i32 : i32
  }
  func.func @transform_7(%arg0: i32) -> (i32, i32, i32, i32) {
    %c0_i32 = arith.constant 0 : i32
    %c0_i32_0 = arith.constant 0 : i32
    %c0_i32_1 = arith.constant 0 : i32
    %c0_i32_2 = arith.constant 0 : i32
    return %arg0, %c0_i32, %c0_i32_0, %c0_i32_1 : i32, i32, i32, i32
  }
}

</mosaic_0001>

<llo_original>
// kernel: tpu_custom_call.1
$region0: #{tpu_custom_call.1}
  #allocation0 [shape = 'u32[]', space=smem, size = 0x4, offset = 0x4, fixed_abs, tag = 'smem constant byte address 0x4 - core index']
  #allocation1 [shape = 'u32[72,128]{1,0:T(1,128)}', space=vmem, size = 0x9000, scoped, tag = 'internal scratch']
  #allocation2 [shape = 'f32[4,18,18]{2,1,0:T(8,128)}', space=vmem, size = 0xc000, scoped, tag = 'scratch operand']
  #allocation3 [shape = 'f32[4,18,18]{2,1,0:T(8,128)}', space=vmem, size = 0xc000, scoped, tag = 'scratch operand']
  %s0 = inlined_call_operand.hbm [shape: f32[2,4,8,8], index: 0, kind: input, shape index: {}]
  %s1 = inlined_call_operand.hbm [shape: f32[2,4,16,16], index: 1, kind: input, shape index: {}]
  %s2 = inlined_call_operand.vmem [shape: f32[16,8], index: 2, kind: input, shape index: {}]
  %s3 = inlined_call_operand.vmem [shape: f32[8,16], index: 3, kind: input, shape index: {}]
  %s4 = inlined_call_operand.vmem [shape: f32[144], index: 4, kind: input, shape index: {}]
  %s5 = inlined_call_operand.vmem [shape: f32[144], index: 5, kind: input, shape index: {}]
  %s6 = inlined_call_operand.vmem [shape: f32[4], index: 6, kind: input, shape index: {}]
  %s7 = inlined_call_operand.hbm [shape: f32[2,4,16,16], index: 7, kind: output, shape index: {}]
  %s8 = sld [smem:[#allocation0]]
  $region81: #{tpu_custom_call.1} parent=0
    _
  %s10 = ssub.s32 1, %s8
  %s11 = scalar_select 0, %s10, %s8
  $region1: #{tpu_custom_call.1} parent=0
    #allocation4 [shape = 'u8[32768]{0}', space=vmem, size = 0x8000, scoped, tag = 'input window, operand 0']
    #allocation5 [shape = 's32[2]{0}', space=sflag, size = 0x8, scoped, tag = 'scoped memory for tpu_custom_call.1']
    #allocation6 [shape = 's32[2]{0}', space=sflag, size = 0x8, scoped, tag = 'scoped memory for tpu_custom_call.1']
    #allocation7 [shape = 's32[2]{0}', space=sflag, size = 0x8, scoped, tag = 'scoped memory for tpu_custom_call.1']
    #allocation8 [shape = 'u8[65536]{0}', space=vmem, size = 0x10000, scoped, tag = 'input window, operand 1']
    #allocation9 [shape = 's32[2]{0}', space=sflag, size = 0x8, scoped, tag = 'scoped memory for tpu_custom_call.1']
    #allocation10 [shape = 'u8[1024]{0}', space=smem, size = 0x400, scoped, tag = 'input window, operand 4, single buffered']
    #allocation11 [shape = 'u8[1024]{0}', space=smem, size = 0x400, scoped, tag = 'input window, operand 5, single buffered']
    #allocation12 [shape = 's32[1]{0}', space=sflag, size = 0x4, scoped, tag = 'scoped memory for tpu_custom_call.1']
    #allocation13 [shape = 'u8[512]{0}', space=smem, size = 0x200, scoped, tag = 'input window, operand 6, single buffered']
    #allocation14 [shape = 'u8[65536]{0}', space=vmem, size = 0x10000, scoped, tag = 'output window, operand 0']
    %12 = vsyncpa [#allocation5], 0
    %s13 = scalar_lea.sflag [#allocation5], 1
    %14 = vsyncpa %s13, 0
    %15 = vsyncpa [#allocation9], 0
    %s16 = scalar_lea.sflag [#allocation9], 1
    %17 = vsyncpa %s16, 0
    %18 = vsyncpa [#allocation7], 0
    %19 = vsyncpa [#allocation12], 0
    %20 = vsyncpa [#allocation6], 0
    %s21 = scalar_lea.sflag [#allocation6], 1
    %22 = vsyncpa %s21, 0
    loop: start=0, step=1, limit=4
    $region2: #{tpu_custom_call.1} parent=1 // loop_pre_header
      _
    $region3: #{tpu_custom_call.1} parent=1 // loop_header
      %s24 = sphi 0, %s28
      %p25 = scmp.ge.s32.totalorder %s24, 4
      %s34 = sphi 0, %s36
      %s37 = sphi 0, %s34
      %s38 = sphi 0, %s37
      %s54 = sphi 0, %s38
      %s60 = sphi 0, %s62
      %s63 = sphi 0, %s60
      %s64 = sphi 0, %s63
      %s80 = sphi 0, %s64
      %s84 = sphi 0, %s84
      %s86 = sphi 0, %s84
      %s87 = sphi 0, %s86
      %s101 = sphi 0, %s87
      %s105 = sphi 0, %s105
      %s107 = sphi 0, %s105
      %s108 = sphi 0, %s107
      %s122 = sphi 0, %s108
      %s126 = sphi 0, %s126
      %s128 = sphi 0, %s126
      %s129 = sphi 0, %s128
      %s143 = sphi 0, %s129
      %s147 = sphi 0, %s147
      %s149 = sphi 0, %s147
      %s150 = sphi 0, %s149
      %s164 = sphi 0, %s150
      %s168 = sphi 0, %s168
      %s170 = sphi 0, %s168
      %s171 = sphi 0, %s170
      %s185 = sphi 0, %s171
      %s191 = sphi 0, %s193
      %s194 = sphi 0, %s191
      %s195 = sphi 0, %s194
      %s211 = sphi 0, %s195
    $region4: #{tpu_custom_call.1} parent=1 // loop_header_branch
      %27 = sbr.rel (%p25) target = $region8
    $region5: #{tpu_custom_call.1} parent=1 // loop_body
      %s29 = ssub.s32 %s24, 1
      %s30 = ssub.s32 %s24, 2
      %s31 = sadd.s32 %s24, 1
      %s32 = ssub.s32 %s24, %s31
      %p33 = scmp.eq.s32.totalorder %s32, 0
      %s35 = sadd.s32 %s34, 1
      %s36 = scalar_select %p33, %s34, %s35
      %p39 = pneg %p33
      %p40 = scmp.eq.s32.totalorder %s24, 1
      %p41 = por %p39, %p40
      %p42 = scmp.ne.s32.totalorder %s34, %s37
      %p43 = scmp.eq.s32.totalorder %s24, 0
      %p44 = por %p42, %p43
      %p45 = scmp.ne.s32.totalorder %s34, %s37
      %p46 = scmp.eq.s32.totalorder %s29, 1
      %p47 = por %p45, %p46
      %p48 = scmp.ne.s32.totalorder %s37, %s38
      %p49 = scmp.eq.s32.totalorder %s29, 0
      %p50 = por %p48, %p49
      %p51 = scmp.ne.s32.totalorder %s37, %s38
      %p52 = scmp.eq.s32.totalorder %s30, 1
      %p53 = por %p51, %p52
      %p55 = scmp.ne.s32.totalorder %s38, %s54
      %p56 = scmp.eq.s32.totalorder %s30, 0
      %p57 = por %p55, %p56
      %s58 = ssub.s32 %s24, %s31
      %p59 = scmp.eq.s32.totalorder %s58, 0
      %s61 = sadd.s32 %s60, 1
      %s62 = scalar_select %p59, %s60, %s61
      %p65 = pneg %p59
      %p66 = scmp.eq.s32.totalorder %s24, 1
      %p67 = por %p65, %p66
      %p68 = scmp.ne.s32.totalorder %s60, %s63
      %p69 = scmp.eq.s32.totalorder %s24, 0
      %p70 = por %p68, %p69
      %p71 = scmp.ne.s32.totalorder %s60, %s63
      %p72 = scmp.eq.s32.totalorder %s29, 1
      %p73 = por %p71, %p72
      %p74 = scmp.ne.s32.totalorder %s63, %s64
      %p75 = scmp.eq.s32.totalorder %s29, 0
      %p76 = por %p74, %p75
      %p77 = scmp.ne.s32.totalorder %s63, %s64
      %p78 = scmp.eq.s32.totalorder %s30, 1
      %p79 = por %p77, %p78
      %p81 = scmp.ne.s32.totalorder %s64, %s80
      %p82 = scmp.eq.s32.totalorder %s30, 0
      %p83 = por %p81, %p82
      %s85 = sadd.s32 %s84, 1
      %p88 = scmp.eq.s32.totalorder %s24, 1
      %p89 = scmp.ne.s32.totalorder %s84, %s86
      %p90 = scmp.eq.s32.totalorder %s24, 0
      %p91 = por %p89, %p90
      %p92 = scmp.ne.s32.totalorder %s84, %s86
      %p93 = scmp.eq.s32.totalorder %s29, 1
      %p94 = por %p92, %p93
      %p95 = scmp.ne.s32.totalorder %s86, %s87
      %p96 = scmp.eq.s32.totalorder %s29, 0
      %p97 = por %p95, %p96
      %p98 = scmp.ne.s32.totalorder %s86, %s87
      %p99 = scmp.eq.s32.totalorder %s30, 1
      %p100 = por %p98, %p99
      %p102 = scmp.ne.s32.totalorder %s87, %s101
      %p103 = scmp.eq.s32.totalorder %s30, 0
      %p104 = por %p102, %p103
      %s106 = sadd.s32 %s105, 1
      %p109 = scmp.eq.s32.totalorder %s24, 1
      %p110 = scmp.ne.s32.totalorder %s105, %s107
      %p111 = scmp.eq.s32.totalorder %s24, 0
      %p112 = por %p110, %p111
      %p113 = scmp.ne.s32.totalorder %s105, %s107
      %p114 = scmp.eq.s32.totalorder %s29, 1
      %p115 = por %p113, %p114
      %p116 = scmp.ne.s32.totalorder %s107, %s108
      %p117 = scmp.eq.s32.totalorder %s29, 0
      %p118 = por %p116, %p117
      %p119 = scmp.ne.s32.totalorder %s107, %s108
      %p120 = scmp.eq.s32.totalorder %s30, 1
      %p121 = por %p119, %p120
      %p123 = scmp.ne.s32.totalorder %s108, %s122
      %p124 = scmp.eq.s32.totalorder %s30, 0
      %p125 = por %p123, %p124
      %s127 = sadd.s32 %s126, 1
      %p130 = scmp.eq.s32.totalorder %s24, 1
      %p131 = scmp.ne.s32.totalorder %s126, %s128
      %p132 = scmp.eq.s32.totalorder %s24, 0
      %p133 = por %p131, %p132
      %p134 = scmp.ne.s32.totalorder %s126, %s128
      %p135 = scmp.eq.s32.totalorder %s29, 1
      %p136 = por %p134, %p135
      %p137 = scmp.ne.s32.totalorder %s128, %s129
      %p138 = scmp.eq.s32.totalorder %s29, 0
      %p139 = por %p137, %p138
      %p140 = scmp.ne.s32.totalorder %s128, %s129
      %p141 = scmp.eq.s32.totalorder %s30, 1
      %p142 = por %p140, %p141
      %p144 = scmp.ne.s32.totalorder %s129, %s143
      %p145 = scmp.eq.s32.totalorder %s30, 0
      %p146 = por %p144, %p145
      %s148 = sadd.s32 %s147, 1
      %p151 = scmp.eq.s32.totalorder %s24, 1
      %p152 = scmp.ne.s32.totalorder %s147, %s149
      %p153 = scmp.eq.s32.totalorder %s24, 0
      %p154 = por %p152, %p153
      %p155 = scmp.ne.s32.totalorder %s147, %s149
      %p156 = scmp.eq.s32.totalorder %s29, 1
      %p157 = por %p155, %p156
      %p158 = scmp.ne.s32.totalorder %s149, %s150
      %p159 = scmp.eq.s32.totalorder %s29, 0
      %p160 = por %p158, %p159
      %p161 = scmp.ne.s32.totalorder %s149, %s150
      %p162 = scmp.eq.s32.totalorder %s30, 1
      %p163 = por %p161, %p162
      %p165 = scmp.ne.s32.totalorder %s150, %s164
      %p166 = scmp.eq.s32.totalorder %s30, 0
      %p167 = por %p165, %p166
      %s169 = sadd.s32 %s168, 1
      %p172 = scmp.eq.s32.totalorder %s24, 1
      %p173 = scmp.ne.s32.totalorder %s168, %s170
      %p174 = scmp.eq.s32.totalorder %s24, 0
      %p175 = por %p173, %p174
      %p176 = scmp.ne.s32.totalorder %s168, %s170
      %p177 = scmp.eq.s32.totalorder %s29, 1
      %p178 = por %p176, %p177
      %p179 = scmp.ne.s32.totalorder %s170, %s171
      %p180 = scmp.eq.s32.totalorder %s29, 0
      %p181 = por %p179, %p180
      %p182 = scmp.ne.s32.totalorder %s170, %s171
      %p183 = scmp.eq.s32.totalorder %s30, 1
      %p184 = por %p182, %p183
      %p186 = scmp.ne.s32.totalorder %s171, %s185
      %p187 = scmp.eq.s32.totalorder %s30, 0
      %p188 = por %p186, %p187
      %s189 = ssub.s32 %s24, %s31
      %p190 = scmp.eq.s32.totalorder %s189, 0
      %s192 = sadd.s32 %s191, 1
      %s193 = scalar_select %p190, %s191, %s192
      %p196 = pneg %p190
      %p197 = scmp.eq.s32.totalorder %s24, 1
      %p198 = por %p196, %p197
      %p199 = scmp.ne.s32.totalorder %s191, %s194
      %p200 = scmp.eq.s32.totalorder %s24, 0
      %p201 = por %p199, %p200
      %p202 = scmp.ne.s32.totalorder %s191, %s194
      %p203 = scmp.eq.s32.totalorder %s29, 1
      %p204 = por %p202, %p203
      %p205 = scmp.ne.s32.totalorder %s194, %s195
      %p206 = scmp.eq.s32.totalorder %s29, 0
      %p207 = por %p205, %p206
      %p208 = scmp.ne.s32.totalorder %s194, %s195
      %p209 = scmp.eq.s32.totalorder %s30, 1
      %p210 = por %p208, %p209
      %p212 = scmp.ne.s32.totalorder %s195, %s211
      %p213 = scmp.eq.s32.totalorder %s30, 0
      %p214 = por %p212, %p213
      %p215 = scmp.le.s32.totalorder 1, %s24
      %p216 = scmp.lt.s32.totalorder %s24, 3
      %p217 = pnand %p215, %p216
      %p218 = pneg %p217
      // Predicated region
      $region9: #{tpu_custom_call.1} parent=5 // pred_check
        _
      $region10: #{tpu_custom_call.1} parent=5 // pred_check_branch
        %220 = sbr.rel (%p217) target = $region12
      $region11: #{tpu_custom_call.1} parent=5 // pred_region
        %s221 = ssub.s32 %s24, 1
        // Predicated region
        $region13: #{tpu_custom_call.1} parent=11 // pred_check
          %p222 = pneg %p97
        $region14: #{tpu_custom_call.1} parent=11 // pred_check_branch
          %224 = sbr.rel (%p222) target = $region16
        $region15: #{tpu_custom_call.1} parent=11 // pred_region
          _
        $region16: #{tpu_custom_call.1} parent=11 // pred_fallthru
          _
        // Predicated region
        $region17: #{tpu_custom_call.1} parent=11 // pred_check
          %p225 = pneg %p118
        $region18: #{tpu_custom_call.1} parent=11 // pred_check_branch
          %227 = sbr.rel (%p225) target = $region20
        $region19: #{tpu_custom_call.1} parent=11 // pred_region
          _
        $region20: #{tpu_custom_call.1} parent=11 // pred_fallthru
          _
        // Predicated region
        $region21: #{tpu_custom_call.1} parent=11 // pred_check
          %p228 = pneg %p139
        $region22: #{tpu_custom_call.1} parent=11 // pred_check_branch
          %230 = sbr.rel (%p228) target = $region24
        $region23: #{tpu_custom_call.1} parent=11 // pred_region
          %232 = vsyncadd [#allocation7], 0
          %s234 = sshll.u32 %s4, 4
          %s235 = int_to_ptr.vmem [resolvable:$true] %s234
          %237 = dma.vmem_to_smem %s235, 32, [#allocation10], [#allocation7]
        $region24: #{tpu_custom_call.1} parent=11 // pred_fallthru
          _
        // Predicated region
        $region25: #{tpu_custom_call.1} parent=11 // pred_check
          %p238 = pneg %p160
        $region26: #{tpu_custom_call.1} parent=11 // pred_check_branch
          %240 = sbr.rel (%p238) target = $region28
        $region27: #{tpu_custom_call.1} parent=11 // pred_region
          %242 = vsyncadd [#allocation12], 0
          %s244 = sshll.u32 %s5, 4
          %s245 = int_to_ptr.vmem [resolvable:$true] %s244
          %247 = dma.vmem_to_smem %s245, 32, [#allocation11], [#allocation12]
        $region28: #{tpu_custom_call.1} parent=11 // pred_fallthru
          _
        // Predicated region
        $region29: #{tpu_custom_call.1} parent=11 // pred_check
          %p248 = pneg %p181
        $region30: #{tpu_custom_call.1} parent=11 // pred_check_branch
          %250 = sbr.rel (%p248) target = $region32
        $region31: #{tpu_custom_call.1} parent=11 // pred_region
          %252 = vsyncadd [#allocation12], 0
          %s254 = sshll.u32 %s6, 4
          %s255 = int_to_ptr.vmem [resolvable:$true] %s254
          %257 = dma.vmem_to_smem %s255, 16, [#allocation13], [#allocation12]
        $region32: #{tpu_custom_call.1} parent=11 // pred_fallthru
          _
      $region12: #{tpu_custom_call.1} parent=5 // pred_fallthru
        _
      %p258 = scmp.lt.s32.totalorder %s24, 2
      // Predicated region
      $region33: #{tpu_custom_call.1} parent=5 // pred_check
        %p259 = pneg %p258
      $region34: #{tpu_custom_call.1} parent=5 // pred_check_branch
        %261 = sbr.rel (%p259) target = $region36
      $region35: #{tpu_custom_call.1} parent=5 // pred_region
        // Predicated region
        $region37: #{tpu_custom_call.1} parent=35 // pred_check
          %p262 = pneg %p44
        $region38: #{tpu_custom_call.1} parent=35 // pred_check_branch
          %264 = sbr.rel (%p262) target = $region40
        $region39: #{tpu_custom_call.1} parent=35 // pred_region
          %s265 = sand.u32 %s34, 1
          %s266 = scalar_lea.sflag [#allocation5], %s265
          %s267 = sand.u32 %s34, 1
          %s268 = smul.addr %s267, 32
          %s269 = scalar_lea.vmem [#allocation4], %s268
          %271 = vsyncadd %s266, 0
          %s272 = smul.addr %s24, 4
          %s273 = smul.addr %s272, 8
          %s274 = scalar_lea.hbm %s0, %s273
          %s275 = sshll.u32 %s274, 4
          %s276 = int_to_ptr.hbm [resolvable:$true] %s275
          %s277 = sshll.u32 %s269, 4
          %s278 = int_to_ptr.vmem [resolvable:$true] %s277
          %283 = dma.hbm_to_vmem [thread:$0]  %s276, 512, %s278, %s266, 128, 128, 8
        $region40: #{tpu_custom_call.1} parent=35 // pred_fallthru
          _
        // Predicated region
        $region41: #{tpu_custom_call.1} parent=35 // pred_check
          %p284 = pneg %p70
        $region42: #{tpu_custom_call.1} parent=35 // pred_check_branch
          %286 = sbr.rel (%p284) target = $region44
        $region43: #{tpu_custom_call.1} parent=35 // pred_region
          %s287 = sand.u32 %s60, 1
          %s288 = scalar_lea.sflag [#allocation9], %s287
          %s289 = sand.u32 %s60, 1
          %s290 = smul.addr %s289, 64
          %s291 = scalar_lea.vmem [#allocation8], %s290
          %293 = vsyncadd %s288, 0
          %s294 = smul.addr %s24, 8
          %s295 = smul.addr %s294, 8
          %s296 = scalar_lea.hbm %s1, %s295
          %s297 = sshll.u32 %s296, 4
          %s298 = int_to_ptr.hbm [resolvable:$true] %s297
          %s299 = sshll.u32 %s291, 4
          %s300 = int_to_ptr.vmem [resolvable:$true] %s299
          %305 = dma.hbm_to_vmem [thread:$0]  %s298, 1024, %s300, %s288, 128, 128, 8
        $region44: #{tpu_custom_call.1} parent=35 // pred_fallthru
          _
      $region36: #{tpu_custom_call.1} parent=5 // pred_fallthru
        _
      %p306 = scmp.le.s32.totalorder 1, %s24
      %p307 = scmp.lt.s32.totalorder %s24, 3
      %p308 = pnand %p306, %p307
      %p309 = pneg %p308
      // Predicated region
      $region45: #{tpu_custom_call.1} parent=5 // pred_check
        _
      $region46: #{tpu_custom_call.1} parent=5 // pred_check_branch
        %311 = sbr.rel (%p308) target = $region48
      $region47: #{tpu_custom_call.1} parent=5 // pred_region
        %s312 = ssub.s32 %s24, 1
        %s313 = sand.u32 %s37, 1
        %s314 = scalar_lea.sflag [#allocation5], %s313
        %s315 = sand.u32 %s37, 1
        %s316 = smul.addr %s315, 32
        %s317 = scalar_lea.vmem [#allocation4], %s316
        // Predicated region
        $region49: #{tpu_custom_call.1} parent=47 // pred_check
          %p318 = pneg %p50
        $region50: #{tpu_custom_call.1} parent=47 // pred_check_branch
          %320 = sbr.rel (%p318) target = $region52
        $region51: #{tpu_custom_call.1} parent=47 // pred_region
          %322 = dma.done %s314, 512
        $region52: #{tpu_custom_call.1} parent=47 // pred_fallthru
          _
        %s323 = sand.u32 %s63, 1
        %s324 = scalar_lea.sflag [#allocation9], %s323
        %s325 = sand.u32 %s63, 1
        %s326 = smul.addr %s325, 64
        %s327 = scalar_lea.vmem [#allocation8], %s326
        // Predicated region
        $region53: #{tpu_custom_call.1} parent=47 // pred_check
          %p328 = pneg %p76
        $region54: #{tpu_custom_call.1} parent=47 // pred_check_branch
          %330 = sbr.rel (%p328) target = $region56
        $region55: #{tpu_custom_call.1} parent=47 // pred_region
          %332 = dma.done %s324, 1024
        $region56: #{tpu_custom_call.1} parent=47 // pred_fallthru
          _
        // Predicated region
        $region57: #{tpu_custom_call.1} parent=47 // pred_check
          %p333 = pneg %p139
        $region58: #{tpu_custom_call.1} parent=47 // pred_check_branch
          %335 = sbr.rel (%p333) target = $region60
        $region59: #{tpu_custom_call.1} parent=47 // pred_region
          %337 = dma.done [#allocation7], 32
        $region60: #{tpu_custom_call.1} parent=47 // pred_fallthru
          _
        // Predicated region
        $region61: #{tpu_custom_call.1} parent=47 // pred_check
          %p338 = pneg %p160
        $region62: #{tpu_custom_call.1} parent=47 // pred_check_branch
          %340 = sbr.rel (%p338) target = $region64
        $region63: #{tpu_custom_call.1} parent=47 // pred_region
          %342 = dma.done [#allocation12], 32
        $region64: #{tpu_custom_call.1} parent=47 // pred_fallthru
          _
        // Predicated region
        $region65: #{tpu_custom_call.1} parent=47 // pred_check
          %p343 = pneg %p181
        $region66: #{tpu_custom_call.1} parent=47 // pred_check_branch
          %345 = sbr.rel (%p343) target = $region68
        $region67: #{tpu_custom_call.1} parent=47 // pred_region
          %347 = dma.done [#allocation12], 16
        $region68: #{tpu_custom_call.1} parent=47 // pred_fallthru
          _
        %348 = sfence
        %s349 = sand.u32 %s37, 1
        %s350 = scalar_lea.sflag [#allocation5], %s349
        %s351 = sand.u32 %s37, 1
        %s352 = smul.addr %s351, 32
        %s353 = scalar_lea.vmem [#allocation4], %s352
        %p354 = pneg %p50
        %p355 = pneg %p47
        %s356 = sand.u32 %s63, 1
        %s357 = scalar_lea.sflag [#allocation9], %s356
        %s358 = sand.u32 %s63, 1
        %s359 = smul.addr %s358, 64
        %s360 = scalar_lea.vmem [#allocation8], %s359
        %p361 = pneg %p76
        %p362 = pneg %p73
        %p363 = pneg %p97
        %p364 = pneg %p94
        %p365 = pneg %p118
        %p366 = pneg %p115
        %p367 = pneg %p139
        %p368 = pneg %p136
        %p369 = pneg %p160
        %p370 = pneg %p157
        %p371 = pneg %p181
        %p372 = pneg %p178
        %p373 = pneg %p207
        %p374 = pneg %p204
        %s375 = sand.u32 %s194, 1
        %s376 = scalar_lea.sflag [#allocation6], %s375
        %s377 = sand.u32 %s194, 1
        %s378 = smul.addr %s377, 64
        %s379 = scalar_lea.vmem [#allocation14], %s378
        %vm380 = vcmask 146432
        %381 = vst.msk [vmem:[#allocation2] sm:$0xff] %vm380, 0.0
        %382 = vst.msk [vmem:[#allocation2 + $0x8] sm:$0xff] %vm380, 0.0
        %vm383 = vcmask 140288
        %384 = vst.msk [vmem:[#allocation2 + $0x10] sm:$0x3] %vm383, 0.0
        %385 = vst.msk [vmem:[#allocation2 + $0x18] sm:$0xff] %vm380, 0.0
        %386 = vst.msk [vmem:[#allocation2 + $0x20] sm:$0xff] %vm380, 0.0
        %387 = vst.msk [vmem:[#allocation2 + $0x28] sm:$0x3] %vm383, 0.0
        %388 = vst.msk [vmem:[#allocation2 + $0x30] sm:$0xff] %vm380, 0.0
        %389 = vst.msk [vmem:[#allocation2 + $0x38] sm:$0xff] %vm380, 0.0
        %390 = vst.msk [vmem:[#allocation2 + $0x40] sm:$0x3] %vm383, 0.0
        %391 = vst.msk [vmem:[#allocation2 + $0x48] sm:$0xff] %vm380, 0.0
        %392 = vst.msk [vmem:[#allocation2 + $0x50] sm:$0xff] %vm380, 0.0
        %393 = vst.msk [vmem:[#allocation2 + $0x58] sm:$0x3] %vm383, 0.0
        %394 = vst.msk [vmem:[#allocation3] sm:$0xff] %vm380, 0.0
        %395 = vst.msk [vmem:[#allocation3 + $0x8] sm:$0xff] %vm380, 0.0
        %396 = vst.msk [vmem:[#allocation3 + $0x10] sm:$0x3] %vm383, 0.0
        %397 = vst.msk [vmem:[#allocation3 + $0x18] sm:$0xff] %vm380, 0.0
        %398 = vst.msk [vmem:[#allocation3 + $0x20] sm:$0xff] %vm380, 0.0
        %399 = vst.msk [vmem:[#allocation3 + $0x28] sm:$0x3] %vm383, 0.0
        %400 = vst.msk [vmem:[#allocation3 + $0x30] sm:$0xff] %vm380, 0.0
        %401 = vst.msk [vmem:[#allocation3 + $0x38] sm:$0xff] %vm380, 0.0
        %402 = vst.msk [vmem:[#allocation3 + $0x40] sm:$0x3] %vm383, 0.0
        %403 = vst.msk [vmem:[#allocation3 + $0x48] sm:$0xff] %vm380, 0.0
        %404 = vst.msk [vmem:[#allocation3 + $0x50] sm:$0xff] %vm380, 0.0
        %405 = vst.msk [vmem:[#allocation3 + $0x58] sm:$0x3] %vm383, 0.0
        %v406 = vld [vmem:[%s327] sm:$0xff]
        %v407 = vld [vmem:[%s327 + $0x8] sm:$0xff]
        %410 = vrot.lane.b32.xlu0 %v406, 1
        %v411 = vpop.permute.xlu0 %410
        %412 = vrot.lane.b32.xlu0 %v407, 1
        %v413 = vpop.permute.xlu0 %412
        %vm416 = vcmask 138248
        %417 = vst.msk [vmem:[#allocation2 + $0x1] sm:$0xff] %vm416, %v411
        %418 = vst.msk [vmem:[#allocation2 + $0x9] sm:$0xff] %vm416, %v413
        %s419 = scalar_lea.vmem %s327, 16 [#allocation8]
        %v420 = vld [vmem:[%s419] sm:$0xff]
        %v421 = vld [vmem:[%s419 + $0x8] sm:$0xff]
        %424 = vrot.lane.b32.xlu0 %v420, 1
        %v425 = vpop.permute.xlu0 %424
        %426 = vrot.lane.b32.xlu0 %v421, 1
        %v427 = vpop.permute.xlu0 %426
        %s430 = scalar_lea.vmem [#allocation2], 24
        %431 = vst.msk [vmem:[%s430 + $0x1] sm:$0xff] %vm416, %v425
        %432 = vst.msk [vmem:[%s430 + $0x9] sm:$0xff] %vm416, %v427
        %s433 = scalar_lea.vmem %s327, 32 [#allocation8]
        %v434 = vld [vmem:[%s433] sm:$0xff]
        %v435 = vld [vmem:[%s433 + $0x8] sm:$0xff]
        %438 = vrot.lane.b32.xlu0 %v434, 1
        %v439 = vpop.permute.xlu0 %438
        %440 = vrot.lane.b32.xlu0 %v435, 1
        %v441 = vpop.permute.xlu0 %440
        %s444 = scalar_lea.vmem [#allocation2], 48
        %445 = vst.msk [vmem:[%s444 + $0x1] sm:$0xff] %vm416, %v439
        %446 = vst.msk [vmem:[%s444 + $0x9] sm:$0xff] %vm416, %v441
        %s447 = scalar_lea.vmem %s327, 48 [#allocation8]
        %v448 = vld [vmem:[%s447] sm:$0xff]
        %v449 = vld [vmem:[%s447 + $0x8] sm:$0xff]
        %452 = vrot.lane.b32.xlu0 %v448, 1
        %v453 = vpop.permute.xlu0 %452
        %454 = vrot.lane.b32.xlu0 %v449, 1
        %v455 = vpop.permute.xlu0 %454
        %s458 = scalar_lea.vmem [#allocation2], 72
        %459 = vst.msk [vmem:[%s458 + $0x1] sm:$0xff] %vm416, %v453
        %460 = vst.msk [vmem:[%s458 + $0x9] sm:$0xff] %vm416, %v455
        %v461 = vld [vmem:[%s2] sm:$0xff]
        %v462 = vld [vmem:[%s2 + $0x8] sm:$0xff]
        %v463 = vld [vmem:[%s3] sm:$0xff]
        %v464 = vld [vmem:[%s317] sm:$0xff]
        %vm465 = vcmask 64512
        %v467 = vsel %vm465, %v464, 0
        %469 = vmatpush.msra.mxu0 0.0
        %470 = vmatpush.msra.mxu0 0.0
        %471 = vmatpush.msra.mxu0 0.0
        %472 = vmatpush.msra.mxu0 0.0
        %473 = vmatpush.msra.mxu0 0.0
        %474 = vmatpush.msra.mxu0 0.0
        %475 = vmatpush.msra.mxu0 0.0
        %476 = vmatpush.msra.mxu0 0.0
        %477 = vmatpush.msra.mxu0 0.0
        %478 = vmatpush.msra.mxu0 0.0
        %479 = vmatpush.msra.mxu0 0.0
        %480 = vmatpush.msra.mxu0 0.0
        %481 = vmatpush.msra.mxu0 0.0
        %482 = vmatpush.msra.mxu0 0.0
        %483 = vmatpush.msra.mxu0 0.0
        %484 = vmatpush.msra.mxu0 %v463
        %485 = vmatmul.f32.gmra.mxu0 %v467
        %v486 = vpop.f32.mrf.mxu0
        %v487 = vadd.f32 0.0, %v486
        %488 = vdwg.mxu0
        %v490 = vsel %vm465, %v461, 0
        %v493 = vsel %vm465, %v462, 0
        %495 = vmatpush.msra.mxu0 0.0
        %496 = vmatpush.msra.mxu0 0.0
        %497 = vmatpush.msra.mxu0 0.0
        %498 = vmatpush.msra.mxu0 0.0
        %499 = vmatpush.msra.mxu0 0.0
        %500 = vmatpush.msra.mxu0 0.0
        %501 = vmatpush.msra.mxu0 0.0
        %502 = vmatpush.msra.mxu0 0.0
        %503 = vmatpush.msra.mxu0 0.0
        %504 = vmatpush.msra.mxu0 0.0
        %505 = vmatpush.msra.mxu0 0.0
        %506 = vmatpush.msra.mxu0 0.0
        %507 = vmatpush.msra.mxu0 0.0
        %508 = vmatpush.msra.mxu0 0.0
        %509 = vmatpush.msra.mxu0 0.0
        %510 = vmatpush.msra.mxu0 %v487
        %511 = vmatmul.f32.gmra.mxu0 %v490
        %v512 = vpop.f32.mrf.mxu0
        %v513 = vadd.f32 0.0, %v512
        %514 = vmatmul.f32.gmra.mxu0 %v493
        %v515 = vpop.f32.mrf.mxu0
        %v516 = vadd.f32 0.0, %v515
        %517 = vdwg.mxu0
        %520 = vrot.lane.b32.xlu0 %v513, 1
        %v521 = vpop.permute.xlu0 %520
        %522 = vrot.lane.b32.xlu0 %v516, 1
        %v523 = vpop.permute.xlu0 %522
        %526 = vst.msk [vmem:[#allocation3 + $0x1] sm:$0xff] %vm416, %v521
        %527 = vst.msk [vmem:[#allocation3 + $0x9] sm:$0xff] %vm416, %v523
        %s528 = scalar_lea.vmem %s317, 8 [#allocation4]
        %v529 = vld [vmem:[%s528] sm:$0xff]
        %v531 = vsel %vm465, %v529, 0
        %533 = vmatpush.msra.mxu0 0.0
        %534 = vmatpush.msra.mxu0 0.0
        %535 = vmatpush.msra.mxu0 0.0
        %536 = vmatpush.msra.mxu0 0.0
        %537 = vmatpush.msra.mxu0 0.0
        %538 = vmatpush.msra.mxu0 0.0
        %539 = vmatpush.msra.mxu0 0.0
        %540 = vmatpush.msra.mxu0 0.0
        %541 = vmatpush.msra.mxu0 0.0
        %542 = vmatpush.msra.mxu0 0.0
        %543 = vmatpush.msra.mxu0 0.0
        %544 = vmatpush.msra.mxu0 0.0
        %545 = vmatpush.msra.mxu0 0.0
        %546 = vmatpush.msra.mxu0 0.0
        %547 = vmatpush.msra.mxu0 0.0
        %548 = vmatpush.msra.mxu0 %v463
        %549 = vmatmul.f32.gmra.mxu0 %v531
        %v550 = vpop.f32.mrf.mxu0
        %v551 = vadd.f32 0.0, %v550
        %552 = vdwg.mxu0
        %553 = vmatpush.msra.mxu0 0.0
        %554 = vmatpush.msra.mxu0 0.0
        %555 = vmatpush.msra.mxu0 0.0
        %556 = vmatpush.msra.mxu0 0.0
        %557 = vmatpush.msra.mxu0 0.0
        %558 = vmatpush.msra.mxu0 0.0
        %559 = vmatpush.msra.mxu0 0.0
        %560 = vmatpush.msra.mxu0 0.0
        %561 = vmatpush.msra.mxu0 0.0
        %562 = vmatpush.msra.mxu0 0.0
        %563 = vmatpush.msra.mxu0 0.0
        %564 = vmatpush.msra.mxu0 0.0
        %565 = vmatpush.msra.mxu0 0.0
        %566 = vmatpush.msra.mxu0 0.0
        %567 = vmatpush.msra.mxu0 0.0
        %568 = vmatpush.msra.mxu0 %v551
        %569 = vmatmul.f32.gmra.mxu0 %v490
        %v570 = vpop.f32.mrf.mxu0
        %v571 = vadd.f32 0.0, %v570
        %572 = vmatmul.f32.gmra.mxu0 %v493
        %v573 = vpop.f32.mrf.mxu0
        %v574 = vadd.f32 0.0, %v573
        %575 = vdwg.mxu0
        %578 = vrot.lane.b32.xlu0 %v571, 1
        %v579 = vpop.permute.xlu0 %578
        %580 = vrot.lane.b32.xlu0 %v574, 1
        %v581 = vpop.permute.xlu0 %580
        %s584 = scalar_lea.vmem [#allocation3], 24
        %585 = vst.msk [vmem:[%s584 + $0x1] sm:$0xff] %vm416, %v579
        %586 = vst.msk [vmem:[%s584 + $0x9] sm:$0xff] %vm416, %v581
        %s587 = scalar_lea.vmem %s317, 16 [#allocation4]
        %v588 = vld [vmem:[%s587] sm:$0xff]
        %v590 = vsel %vm465, %v588, 0
        %592 = vmatpush.msra.mxu0 0.0
        %593 = vmatpush.msra.mxu0 0.0
        %594 = vmatpush.msra.mxu0 0.0
        %595 = vmatpush.msra.mxu0 0.0
        %596 = vmatpush.msra.mxu0 0.0
        %597 = vmatpush.msra.mxu0 0.0
        %598 = vmatpush.msra.mxu0 0.0
        %599 = vmatpush.msra.mxu0 0.0
        %600 = vmatpush.msra.mxu0 0.0
        %601 = vmatpush.msra.mxu0 0.0
        %602 = vmatpush.msra.mxu0 0.0
        %603 = vmatpush.msra.mxu0 0.0
        %604 = vmatpush.msra.mxu0 0.0
        %605 = vmatpush.msra.mxu0 0.0
        %606 = vmatpush.msra.mxu0 0.0
        %607 = vmatpush.msra.mxu0 %v463
        %608 = vmatmul.f32.gmra.mxu0 %v590
        %v609 = vpop.f32.mrf.mxu0
        %v610 = vadd.f32 0.0, %v609
        %611 = vdwg.mxu0
        %612 = vmatpush.msra.mxu0 0.0
        %613 = vmatpush.msra.mxu0 0.0
        %614 = vmatpush.msra.mxu0 0.0
        %615 = vmatpush.msra.mxu0 0.0
        %616 = vmatpush.msra.mxu0 0.0
        %617 = vmatpush.msra.mxu0 0.0
        %618 = vmatpush.msra.mxu0 0.0
        %619 = vmatpush.msra.mxu0 0.0
        %620 = vmatpush.msra.mxu0 0.0
        %621 = vmatpush.msra.mxu0 0.0
        %622 = vmatpush.msra.mxu0 0.0
        %623 = vmatpush.msra.mxu0 0.0
        %624 = vmatpush.msra.mxu0 0.0
        %625 = vmatpush.msra.mxu0 0.0
        %626 = vmatpush.msra.mxu0 0.0
        %627 = vmatpush.msra.mxu0 %v610
        %628 = vmatmul.f32.gmra.mxu0 %v490
        %v629 = vpop.f32.mrf.mxu0
        %v630 = vadd.f32 0.0, %v629
        %631 = vmatmul.f32.gmra.mxu0 %v493
        %v632 = vpop.f32.mrf.mxu0
        %v633 = vadd.f32 0.0, %v632
        %634 = vdwg.mxu0
        %637 = vrot.lane.b32.xlu0 %v630, 1
        %v638 = vpop.permute.xlu0 %637
        %639 = vrot.lane.b32.xlu0 %v633, 1
        %v640 = vpop.permute.xlu0 %639
        %s643 = scalar_lea.vmem [#allocation3], 48
        %644 = vst.msk [vmem:[%s643 + $0x1] sm:$0xff] %vm416, %v638
        %645 = vst.msk [vmem:[%s643 + $0x9] sm:$0xff] %vm416, %v640
        %s646 = scalar_lea.vmem %s317, 24 [#allocation4]
        %v647 = vld [vmem:[%s646] sm:$0xff]
        %v649 = vsel %vm465, %v647, 0
        %651 = vmatpush.msra.mxu0 0.0
        %652 = vmatpush.msra.mxu0 0.0
        %653 = vmatpush.msra.mxu0 0.0
        %654 = vmatpush.msra.mxu0 0.0
        %655 = vmatpush.msra.mxu0 0.0
        %656 = vmatpush.msra.mxu0 0.0
        %657 = vmatpush.msra.mxu0 0.0
        %658 = vmatpush.msra.mxu0 0.0
        %659 = vmatpush.msra.mxu0 0.0
        %660 = vmatpush.msra.mxu0 0.0
        %661 = vmatpush.msra.mxu0 0.0
        %662 = vmatpush.msra.mxu0 0.0
        %663 = vmatpush.msra.mxu0 0.0
        %664 = vmatpush.msra.mxu0 0.0
        %665 = vmatpush.msra.mxu0 0.0
        %666 = vmatpush.msra.mxu0 %v463
        %667 = vmatmul.f32.gmra.mxu0 %v649
        %v668 = vpop.f32.mrf.mxu0
        %v669 = vadd.f32 0.0, %v668
        %670 = vdwg.mxu0
        %671 = vmatpush.msra.mxu0 0.0
        %672 = vmatpush.msra.mxu0 0.0
        %673 = vmatpush.msra.mxu0 0.0
        %674 = vmatpush.msra.mxu0 0.0
        %675 = vmatpush.msra.mxu0 0.0
        %676 = vmatpush.msra.mxu0 0.0
        %677 = vmatpush.msra.mxu0 0.0
        %678 = vmatpush.msra.mxu0 0.0
        %679 = vmatpush.msra.mxu0 0.0
        %680 = vmatpush.msra.mxu0 0.0
        %681 = vmatpush.msra.mxu0 0.0
        %682 = vmatpush.msra.mxu0 0.0
        %683 = vmatpush.msra.mxu0 0.0
        %684 = vmatpush.msra.mxu0 0.0
        %685 = vmatpush.msra.mxu0 0.0
        %686 = vmatpush.msra.mxu0 %v669
        %687 = vmatmul.f32.gmra.mxu0 %v490
        %v688 = vpop.f32.mrf.mxu0
        %v689 = vadd.f32 0.0, %v688
        %690 = vmatmul.f32.gmra.mxu0 %v493
        %v691 = vpop.f32.mrf.mxu0
        %v692 = vadd.f32 0.0, %v691
        %693 = vdwg.mxu0
        %696 = vrot.lane.b32.xlu0 %v689, 1
        %v697 = vpop.permute.xlu0 %696
        %698 = vrot.lane.b32.xlu0 %v692, 1
        %v699 = vpop.permute.xlu0 %698
        %s702 = scalar_lea.vmem [#allocation3], 72
        %703 = vst.msk [vmem:[%s702 + $0x1] sm:$0xff] %vm416, %v697
        %704 = vst.msk [vmem:[%s702 + $0x9] sm:$0xff] %vm416, %v699
        %s705 = sld [smem:[#allocation13]]
        %v706 = vstv %s705
        %s707 = sld [smem:[#allocation13 + $0x1]]
        %v708 = vstv %s707
        %s709 = sld [smem:[#allocation13 + $0x2]]
        %v710 = vstv %s709
        %s711 = sld [smem:[#allocation13 + $0x3]]
        %v712 = vstv %s711
        %v713 = vld [vmem:[#allocation2] sm:$0xff]
        %v714 = vld [vmem:[#allocation2 + $0x8] sm:$0xff]
        %s715 = sld [smem:[#allocation10]]
        %v716 = vstv %s715
        %v717 = vmul.f32 %v716, %v713
        %v718 = vmul.f32 %v716, %v714
        %v719 = vadd.f32 %v706, %v717
        %v720 = vadd.f32 %v706, %v718
        %s721 = sld [smem:[#allocation10 + $0x24]]
        %v722 = vstv %s721
        %v723 = vmul.f32 %v722, %v713
        %v724 = vmul.f32 %v722, %v714
        %v725 = vadd.f32 %v708, %v723
        %v726 = vadd.f32 %v708, %v724
        %s727 = sld [smem:[#allocation10 + $0x48]]
        %v728 = vstv %s727
        %v729 = vmul.f32 %v728, %v713
        %v730 = vmul.f32 %v728, %v714
        %v731 = vadd.f32 %v710, %v729
        %v732 = vadd.f32 %v710, %v730
        %s733 = sld [smem:[#allocation10 + $0x6c]]
        %v734 = vstv %s733
        %v735 = vmul.f32 %v734, %v713
        %v736 = vmul.f32 %v734, %v714
        %v737 = vadd.f32 %v712, %v735
        %v738 = vadd.f32 %v712, %v736
        %s739 = sld [smem:[#allocation10 + $0x1]]
        %v740 = vstv %s739
        %v741 = vmul.f32 %v740, %v713
        %v742 = vmul.f32 %v740, %v714
        %745 = vrot.lane.b32.xlu0 %v741, 127
        %v746 = vpop.permute.xlu0 %745
        %747 = vrot.lane.b32.xlu0 %v742, 127
        %v748 = vpop.permute.xlu0 %747
        %v751 = vadd.f32 %v719, %v746
        %v752 = vadd.f32 %v720, %v748
        %s753 = sld [smem:[#allocation10 + $0x25]]
        %v754 = vstv %s753
        %v755 = vmul.f32 %v754, %v713
        %v756 = vmul.f32 %v754, %v714
        %759 = vrot.lane.b32.xlu0 %v755, 127
        %v760 = vpop.permute.xlu0 %759
        %761 = vrot.lane.b32.xlu0 %v756, 127
        %v762 = vpop.permute.xlu0 %761
        %v765 = vadd.f32 %v725, %v760
        %v766 = vadd.f32 %v726, %v762
        %s767 = sld [smem:[#allocation10 + $0x49]]
        %v768 = vstv %s767
        %v769 = vmul.f32 %v768, %v713
        %v770 = vmul.f32 %v768, %v714
        %773 = vrot.lane.b32.xlu0 %v769, 127
        %v774 = vpop.permute.xlu0 %773
        %775 = vrot.lane.b32.xlu0 %v770, 127
        %v776 = vpop.permute.xlu0 %775
        %v779 = vadd.f32 %v731, %v774
        %v780 = vadd.f32 %v732, %v776
        %s781 = sld [smem:[#allocation10 + $0x6d]]
        %v782 = vstv %s781
        %v783 = vmul.f32 %v782, %v713
        %v784 = vmul.f32 %v782, %v714
        %787 = vrot.lane.b32.xlu0 %v783, 127
        %v788 = vpop.permute.xlu0 %787
        %789 = vrot.lane.b32.xlu0 %v784, 127
        %v790 = vpop.permute.xlu0 %789
        %v793 = vadd.f32 %v737, %v788
        %v794 = vadd.f32 %v738, %v790
        %s795 = sld [smem:[#allocation10 + $0x2]]
        %v796 = vstv %s795
        %v797 = vmul.f32 %v796, %v713
        %v798 = vmul.f32 %v796, %v714
        %801 = vrot.lane.b32.xlu0 %v797, 126
        %v802 = vpop.permute.xlu0 %801
        %803 = vrot.lane.b32.xlu0 %v798, 126
        %v804 = vpop.permute.xlu0 %803
        %v807 = vadd.f32 %v751, %v802
        %v808 = vadd.f32 %v752, %v804
        %s809 = sld [smem:[#allocation10 + $0x26]]
        %v810 = vstv %s809
        %v811 = vmul.f32 %v810, %v713
        %v812 = vmul.f32 %v810, %v714
        %815 = vrot.lane.b32.xlu0 %v811, 126
        %v816 = vpop.permute.xlu0 %815
        %817 = vrot.lane.b32.xlu0 %v812, 126
        %v818 = vpop.permute.xlu0 %817
        %v821 = vadd.f32 %v765, %v816
        %v822 = vadd.f32 %v766, %v818
        %s823 = sld [smem:[#allocation10 + $0x4a]]
        %v824 = vstv %s823
        %v825 = vmul.f32 %v824, %v713
        %v826 = vmul.f32 %v824, %v714
        %829 = vrot.lane.b32.xlu0 %v825, 126
        %v830 = vpop.permute.xlu0 %829
        %831 = vrot.lane.b32.xlu0 %v826, 126
        %v832 = vpop.permute.xlu0 %831
        %v835 = vadd.f32 %v779, %v830
        %v836 = vadd.f32 %v780, %v832
        %s837 = sld [smem:[#allocation10 + $0x6e]]
        %v838 = vstv %s837
        %v839 = vmul.f32 %v838, %v713
        %v840 = vmul.f32 %v838, %v714
        %843 = vrot.lane.b32.xlu0 %v839, 126
        %v844 = vpop.permute.xlu0 %843
        %845 = vrot.lane.b32.xlu0 %v840, 126
        %v846 = vpop.permute.xlu0 %845
        %v849 = vadd.f32 %v793, %v844
        %v850 = vadd.f32 %v794, %v846
        %v851 = vld [vmem:[#allocation2 + $0x1] sm:$0xff]
        %v852 = vld [vmem:[#allocation2 + $0x9] sm:$0xff]
        %s853 = sld [smem:[#allocation10 + $0x3]]
        %v854 = vstv %s853
        %v855 = vmul.f32 %v854, %v851
        %v856 = vmul.f32 %v854, %v852
        %v857 = vadd.f32 %v807, %v855
        %v858 = vadd.f32 %v808, %v856
        %s859 = sld [smem:[#allocation10 + $0x27]]
        %v860 = vstv %s859
        %v861 = vmul.f32 %v860, %v851
        %v862 = vmul.f32 %v860, %v852
        %v863 = vadd.f32 %v821, %v861
        %v864 = vadd.f32 %v822, %v862
        %s865 = sld [smem:[#allocation10 + $0x4b]]
        %v866 = vstv %s865
        %v867 = vmul.f32 %v866, %v851
        %v868 = vmul.f32 %v866, %v852
        %v869 = vadd.f32 %v835, %v867
        %v870 = vadd.f32 %v836, %v868
        %s871 = sld [smem:[#allocation10 + $0x6f]]
        %v872 = vstv %s871
        %v873 = vmul.f32 %v872, %v851
        %v874 = vmul.f32 %v872, %v852
        %v875 = vadd.f32 %v849, %v873
        %v876 = vadd.f32 %v850, %v874
        %s877 = sld [smem:[#allocation10 + $0x4]]
        %v878 = vstv %s877
        %v879 = vmul.f32 %v878, %v851
        %v880 = vmul.f32 %v878, %v852
        %883 = vrot.lane.b32.xlu0 %v879, 127
        %v884 = vpop.permute.xlu0 %883
        %885 = vrot.lane.b32.xlu0 %v880, 127
        %v886 = vpop.permute.xlu0 %885
        %v889 = vadd.f32 %v857, %v884
        %v890 = vadd.f32 %v858, %v886
        %s891 = sld [smem:[#allocation10 + $0x28]]
        %v892 = vstv %s891
        %v893 = vmul.f32 %v892, %v851
        %v894 = vmul.f32 %v892, %v852
        %897 = vrot.lane.b32.xlu0 %v893, 127
        %v898 = vpop.permute.xlu0 %897
        %899 = vrot.lane.b32.xlu0 %v894, 127
        %v900 = vpop.permute.xlu0 %899
        %v903 = vadd.f32 %v863, %v898
        %v904 = vadd.f32 %v864, %v900
        %s905 = sld [smem:[#allocation10 + $0x4c]]
        %v906 = vstv %s905
        %v907 = vmul.f32 %v906, %v851
        %v908 = vmul.f32 %v906, %v852
        %911 = vrot.lane.b32.xlu0 %v907, 127
        %v912 = vpop.permute.xlu0 %911
        %913 = vrot.lane.b32.xlu0 %v908, 127
        %v914 = vpop.permute.xlu0 %913
        %v917 = vadd.f32 %v869, %v912
        %v918 = vadd.f32 %v870, %v914
        %s919 = sld [smem:[#allocation10 + $0x70]]
        %v920 = vstv %s919
        %v921 = vmul.f32 %v920, %v851
        %v922 = vmul.f32 %v920, %v852
        %925 = vrot.lane.b32.xlu0 %v921, 127
        %v926 = vpop.permute.xlu0 %925
        %927 = vrot.lane.b32.xlu0 %v922, 127
        %v928 = vpop.permute.xlu0 %927
        %v931 = vadd.f32 %v875, %v926
        %v932 = vadd.f32 %v876, %v928
        %s933 = sld [smem:[#allocation10 + $0x5]]
        %v934 = vstv %s933
        %v935 = vmul.f32 %v934, %v851
        %v936 = vmul.f32 %v934, %v852
        %939 = vrot.lane.b32.xlu0 %v935, 126
        %v940 = vpop.permute.xlu0 %939
        %941 = vrot.lane.b32.xlu0 %v936, 126
        %v942 = vpop.permute.xlu0 %941
        %v945 = vadd.f32 %v889, %v940
        %v946 = vadd.f32 %v890, %v942
        %s947 = sld [smem:[#allocation10 + $0x29]]
        %v948 = vstv %s947
        %v949 = vmul.f32 %v948, %v851
        %v950 = vmul.f32 %v948, %v852
        %953 = vrot.lane.b32.xlu0 %v949, 126
        %v954 = vpop.permute.xlu0 %953
        %955 = vrot.lane.b32.xlu0 %v950, 126
        %v956 = vpop.permute.xlu0 %955
        %v959 = vadd.f32 %v903, %v954
        %v960 = vadd.f32 %v904, %v956
        %s961 = sld [smem:[#allocation10 + $0x4d]]
        %v962 = vstv %s961
        %v963 = vmul.f32 %v962, %v851
        %v964 = vmul.f32 %v962, %v852
        %967 = vrot.lane.b32.xlu0 %v963, 126
        %v968 = vpop.permute.xlu0 %967
        %969 = vrot.lane.b32.xlu0 %v964, 126
        %v970 = vpop.permute.xlu0 %969
        %v973 = vadd.f32 %v917, %v968
        %v974 = vadd.f32 %v918, %v970
        %s975 = sld [smem:[#allocation10 + $0x71]]
        %v976 = vstv %s975
        %v977 = vmul.f32 %v976, %v851
        %v978 = vmul.f32 %v976, %v852
        %981 = vrot.lane.b32.xlu0 %v977, 126
        %v982 = vpop.permute.xlu0 %981
        %983 = vrot.lane.b32.xlu0 %v978, 126
        %v984 = vpop.permute.xlu0 %983
        %v987 = vadd.f32 %v931, %v982
        %v988 = vadd.f32 %v932, %v984
        %v989 = vld [vmem:[#allocation2 + $0x2] sm:$0xff]
        %v990 = vld [vmem:[#allocation2 + $0xa] sm:$0xff]
        %s991 = sld [smem:[#allocation10 + $0x6]]
        %v992 = vstv %s991
        %v993 = vmul.f32 %v992, %v989
        %v994 = vmul.f32 %v992, %v990
        %v995 = vadd.f32 %v945, %v993
        %v996 = vadd.f32 %v946, %v994
        %s997 = sld [smem:[#allocation10 + $0x2a]]
        %v998 = vstv %s997
        %v999 = vmul.f32 %v998, %v989
        %v1000 = vmul.f32 %v998, %v990
        %v1001 = vadd.f32 %v959, %v999
        %v1002 = vadd.f32 %v960, %v1000
        %s1003 = sld [smem:[#allocation10 + $0x4e]]
        %v1004 = vstv %s1003
        %v1005 = vmul.f32 %v1004, %v989
        %v1006 = vmul.f32 %v1004, %v990
        %v1007 = vadd.f32 %v973, %v1005
        %v1008 = vadd.f32 %v974, %v1006
        %s1009 = sld [smem:[#allocation10 + $0x72]]
        %v1010 = vstv %s1009
        %v1011 = vmul.f32 %v1010, %v989
        %v1012 = vmul.f32 %v1010, %v990
        %v1013 = vadd.f32 %v987, %v1011
        %v1014 = vadd.f32 %v988, %v1012
        %s1015 = sld [smem:[#allocation10 + $0x7]]
        %v1016 = vstv %s1015
        %v1017 = vmul.f32 %v1016, %v989
        %v1018 = vmul.f32 %v1016, %v990
        %1021 = vrot.lane.b32.xlu0 %v1017, 127
        %v1022 = vpop.permute.xlu0 %1021
        %1023 = vrot.lane.b32.xlu0 %v1018, 127
        %v1024 = vpop.permute.xlu0 %1023
        %v1027 = vadd.f32 %v995, %v1022
        %v1028 = vadd.f32 %v996, %v1024
        %s1029 = sld [smem:[#allocation10 + $0x2b]]
        %v1030 = vstv %s1029
        %v1031 = vmul.f32 %v1030, %v989
        %v1032 = vmul.f32 %v1030, %v990
        %1035 = vrot.lane.b32.xlu0 %v1031, 127
        %v1036 = vpop.permute.xlu0 %1035
        %1037 = vrot.lane.b32.xlu0 %v1032, 127
        %v1038 = vpop.permute.xlu0 %1037
        %v1041 = vadd.f32 %v1001, %v1036
        %v1042 = vadd.f32 %v1002, %v1038
        %s1043 = sld [smem:[#allocation10 + $0x4f]]
        %v1044 = vstv %s1043
        %v1045 = vmul.f32 %v1044, %v989
        %v1046 = vmul.f32 %v1044, %v990
        %1049 = vrot.lane.b32.xlu0 %v1045, 127
        %v1050 = vpop.permute.xlu0 %1049
        %1051 = vrot.lane.b32.xlu0 %v1046, 127
        %v1052 = vpop.permute.xlu0 %1051
        %v1055 = vadd.f32 %v1007, %v1050
        %v1056 = vadd.f32 %v1008, %v1052
        %s1057 = sld [smem:[#allocation10 + $0x73]]
        %v1058 = vstv %s1057
        %v1059 = vmul.f32 %v1058, %v989
        %v1060 = vmul.f32 %v1058, %v990
        %1063 = vrot.lane.b32.xlu0 %v1059, 127
        %v1064 = vpop.permute.xlu0 %1063
        %1065 = vrot.lane.b32.xlu0 %v1060, 127
        %v1066 = vpop.permute.xlu0 %1065
        %v1069 = vadd.f32 %v1013, %v1064
        %v1070 = vadd.f32 %v1014, %v1066
        %s1071 = sld [smem:[#allocation10 + $0x8]]
        %v1072 = vstv %s1071
        %v1073 = vmul.f32 %v1072, %v989
        %v1074 = vmul.f32 %v1072, %v990
        %1077 = vrot.lane.b32.xlu0 %v1073, 126
        %v1078 = vpop.permute.xlu0 %1077
        %1079 = vrot.lane.b32.xlu0 %v1074, 126
        %v1080 = vpop.permute.xlu0 %1079
        %v1083 = vadd.f32 %v1027, %v1078
        %v1084 = vadd.f32 %v1028, %v1080
        %s1085 = sld [smem:[#allocation10 + $0x2c]]
        %v1086 = vstv %s1085
        %v1087 = vmul.f32 %v1086, %v989
        %v1088 = vmul.f32 %v1086, %v990
        %1091 = vrot.lane.b32.xlu0 %v1087, 126
        %v1092 = vpop.permute.xlu0 %1091
        %1093 = vrot.lane.b32.xlu0 %v1088, 126
        %v1094 = vpop.permute.xlu0 %1093
        %v1097 = vadd.f32 %v1041, %v1092
        %v1098 = vadd.f32 %v1042, %v1094
        %s1099 = sld [smem:[#allocation10 + $0x50]]
        %v1100 = vstv %s1099
        %v1101 = vmul.f32 %v1100, %v989
        %v1102 = vmul.f32 %v1100, %v990
        %1105 = vrot.lane.b32.xlu0 %v1101, 126
        %v1106 = vpop.permute.xlu0 %1105
        %1107 = vrot.lane.b32.xlu0 %v1102, 126
        %v1108 = vpop.permute.xlu0 %1107
        %v1111 = vadd.f32 %v1055, %v1106
        %v1112 = vadd.f32 %v1056, %v1108
        %s1113 = sld [smem:[#allocation10 + $0x74]]
        %v1114 = vstv %s1113
        %v1115 = vmul.f32 %v1114, %v989
        %v1116 = vmul.f32 %v1114, %v990
        %1119 = vrot.lane.b32.xlu0 %v1115, 126
        %v1120 = vpop.permute.xlu0 %1119
        %1121 = vrot.lane.b32.xlu0 %v1116, 126
        %v1122 = vpop.permute.xlu0 %1121
        %v1125 = vadd.f32 %v1069, %v1120
        %v1126 = vadd.f32 %v1070, %v1122
        %v1127 = vld [vmem:[%s430] sm:$0xff]
        %v1128 = vld [vmem:[%s430 + $0x8] sm:$0xff]
        %s1129 = sld [smem:[#allocation10 + $0x9]]
        %v1130 = vstv %s1129
        %v1131 = vmul.f32 %v1130, %v1127
        %v1132 = vmul.f32 %v1130, %v1128
        %v1133 = vadd.f32 %v1083, %v1131
        %v1134 = vadd.f32 %v1084, %v1132
        %s1135 = sld [smem:[#allocation10 + $0x2d]]
        %v1136 = vstv %s1135
        %v1137 = vmul.f32 %v1136, %v1127
        %v1138 = vmul.f32 %v1136, %v1128
        %v1139 = vadd.f32 %v1097, %v1137
        %v1140 = vadd.f32 %v1098, %v1138
        %s1141 = sld [smem:[#allocation10 + $0x51]]
        %v1142 = vstv %s1141
        %v1143 = vmul.f32 %v1142, %v1127
        %v1144 = vmul.f32 %v1142, %v1128
        %v1145 = vadd.f32 %v1111, %v1143
        %v1146 = vadd.f32 %v1112, %v1144
        %s1147 = sld [smem:[#allocation10 + $0x75]]
        %v1148 = vstv %s1147
        %v1149 = vmul.f32 %v1148, %v1127
        %v1150 = vmul.f32 %v1148, %v1128
        %v1151 = vadd.f32 %v1125, %v1149
        %v1152 = vadd.f32 %v1126, %v1150
        %s1153 = sld [smem:[#allocation10 + $0xa]]
        %v1154 = vstv %s1153
        %v1155 = vmul.f32 %v1154, %v1127
        %v1156 = vmul.f32 %v1154, %v1128
        %1159 = vrot.lane.b32.xlu0 %v1155, 127
        %v1160 = vpop.permute.xlu0 %1159
        %1161 = vrot.lane.b32.xlu0 %v1156, 127
        %v1162 = vpop.permute.xlu0 %1161
        %v1165 = vadd.f32 %v1133, %v1160
        %v1166 = vadd.f32 %v1134, %v1162
        %s1167 = sld [smem:[#allocation10 + $0x2e]]
        %v1168 = vstv %s1167
        %v1169 = vmul.f32 %v1168, %v1127
        %v1170 = vmul.f32 %v1168, %v1128
        %1173 = vrot.lane.b32.xlu0 %v1169, 127
        %v1174 = vpop.permute.xlu0 %1173
        %1175 = vrot.lane.b32.xlu0 %v1170, 127
        %v1176 = vpop.permute.xlu0 %1175
        %v1179 = vadd.f32 %v1139, %v1174
        %v1180 = vadd.f32 %v1140, %v1176
        %s1181 = sld [smem:[#allocation10 + $0x52]]
        %v1182 = vstv %s1181
        %v1183 = vmul.f32 %v1182, %v1127
        %v1184 = vmul.f32 %v1182, %v1128
        %1187 = vrot.lane.b32.xlu0 %v1183, 127
        %v1188 = vpop.permute.xlu0 %1187
        %1189 = vrot.lane.b32.xlu0 %v1184, 127
        %v1190 = vpop.permute.xlu0 %1189
        %v1193 = vadd.f32 %v1145, %v1188
        %v1194 = vadd.f32 %v1146, %v1190
        %s1195 = sld [smem:[#allocation10 + $0x76]]
        %v1196 = vstv %s1195
        %v1197 = vmul.f32 %v1196, %v1127
        %v1198 = vmul.f32 %v1196, %v1128
        %1201 = vrot.lane.b32.xlu0 %v1197, 127
        %v1202 = vpop.permute.xlu0 %1201
        %1203 = vrot.lane.b32.xlu0 %v1198, 127
        %v1204 = vpop.permute.xlu0 %1203
        %v1207 = vadd.f32 %v1151, %v1202
        %v1208 = vadd.f32 %v1152, %v1204
        %s1209 = sld [smem:[#allocation10 + $0xb]]
        %v1210 = vstv %s1209
        %v1211 = vmul.f32 %v1210, %v1127
        %v1212 = vmul.f32 %v1210, %v1128
        %1215 = vrot.lane.b32.xlu0 %v1211, 126
        %v1216 = vpop.permute.xlu0 %1215
        %1217 = vrot.lane.b32.xlu0 %v1212, 126
        %v1218 = vpop.permute.xlu0 %1217
        %v1221 = vadd.f32 %v1165, %v1216
        %v1222 = vadd.f32 %v1166, %v1218
        %s1223 = sld [smem:[#allocation10 + $0x2f]]
        %v1224 = vstv %s1223
        %v1225 = vmul.f32 %v1224, %v1127
        %v1226 = vmul.f32 %v1224, %v1128
        %1229 = vrot.lane.b32.xlu0 %v1225, 126
        %v1230 = vpop.permute.xlu0 %1229
        %1231 = vrot.lane.b32.xlu0 %v1226, 126
        %v1232 = vpop.permute.xlu0 %1231
        %v1235 = vadd.f32 %v1179, %v1230
        %v1236 = vadd.f32 %v1180, %v1232
        %s1237 = sld [smem:[#allocation10 + $0x53]]
        %v1238 = vstv %s1237
        %v1239 = vmul.f32 %v1238, %v1127
        %v1240 = vmul.f32 %v1238, %v1128
        %1243 = vrot.lane.b32.xlu0 %v1239, 126
        %v1244 = vpop.permute.xlu0 %1243
        %1245 = vrot.lane.b32.xlu0 %v1240, 126
        %v1246 = vpop.permute.xlu0 %1245
        %v1249 = vadd.f32 %v1193, %v1244
        %v1250 = vadd.f32 %v1194, %v1246
        %s1251 = sld [smem:[#allocation10 + $0x77]]
        %v1252 = vstv %s1251
        %v1253 = vmul.f32 %v1252, %v1127
        %v1254 = vmul.f32 %v1252, %v1128
        %1257 = vrot.lane.b32.xlu0 %v1253, 126
        %v1258 = vpop.permute.xlu0 %1257
        %1259 = vrot.lane.b32.xlu0 %v1254, 126
        %v1260 = vpop.permute.xlu0 %1259
        %v1263 = vadd.f32 %v1207, %v1258
        %v1264 = vadd.f32 %v1208, %v1260
        %v1265 = vld [vmem:[%s430 + $0x1] sm:$0xff]
        %v1266 = vld [vmem:[%s430 + $0x9] sm:$0xff]
        %s1267 = sld [smem:[#allocation10 + $0xc]]
        %v1268 = vstv %s1267
        %v1269 = vmul.f32 %v1268, %v1265
        %v1270 = vmul.f32 %v1268, %v1266
        %v1271 = vadd.f32 %v1221, %v1269
        %v1272 = vadd.f32 %v1222, %v1270
        %s1273 = sld [smem:[#allocation10 + $0x30]]
        %v1274 = vstv %s1273
        %v1275 = vmul.f32 %v1274, %v1265
        %v1276 = vmul.f32 %v1274, %v1266
        %v1277 = vadd.f32 %v1235, %v1275
        %v1278 = vadd.f32 %v1236, %v1276
        %s1279 = sld [smem:[#allocation10 + $0x54]]
        %v1280 = vstv %s1279
        %v1281 = vmul.f32 %v1280, %v1265
        %v1282 = vmul.f32 %v1280, %v1266
        %v1283 = vadd.f32 %v1249, %v1281
        %v1284 = vadd.f32 %v1250, %v1282
        %s1285 = sld [smem:[#allocation10 + $0x78]]
        %v1286 = vstv %s1285
        %v1287 = vmul.f32 %v1286, %v1265
        %v1288 = vmul.f32 %v1286, %v1266
        %v1289 = vadd.f32 %v1263, %v1287
        %v1290 = vadd.f32 %v1264, %v1288
        %s1291 = sld [smem:[#allocation10 + $0xd]]
        %v1292 = vstv %s1291
        %v1293 = vmul.f32 %v1292, %v1265
        %v1294 = vmul.f32 %v1292, %v1266
        %1297 = vrot.lane.b32.xlu0 %v1293, 127
        %v1298 = vpop.permute.xlu0 %1297
        %1299 = vrot.lane.b32.xlu0 %v1294, 127
        %v1300 = vpop.permute.xlu0 %1299
        %v1303 = vadd.f32 %v1271, %v1298
        %v1304 = vadd.f32 %v1272, %v1300
        %s1305 = sld [smem:[#allocation10 + $0x31]]
        %v1306 = vstv %s1305
        %v1307 = vmul.f32 %v1306, %v1265
        %v1308 = vmul.f32 %v1306, %v1266
        %1311 = vrot.lane.b32.xlu0 %v1307, 127
        %v1312 = vpop.permute.xlu0 %1311
        %1313 = vrot.lane.b32.xlu0 %v1308, 127
        %v1314 = vpop.permute.xlu0 %1313
        %v1317 = vadd.f32 %v1277, %v1312
        %v1318 = vadd.f32 %v1278, %v1314
        %s1319 = sld [smem:[#allocation10 + $0x55]]
        %v1320 = vstv %s1319
        %v1321 = vmul.f32 %v1320, %v1265
        %v1322 = vmul.f32 %v1320, %v1266
        %1325 = vrot.lane.b32.xlu0 %v1321, 127
        %v1326 = vpop.permute.xlu0 %1325
        %1327 = vrot.lane.b32.xlu0 %v1322, 127
        %v1328 = vpop.permute.xlu0 %1327
        %v1331 = vadd.f32 %v1283, %v1326
        %v1332 = vadd.f32 %v1284, %v1328
        %s1333 = sld [smem:[#allocation10 + $0x79]]
        %v1334 = vstv %s1333
        %v1335 = vmul.f32 %v1334, %v1265
        %v1336 = vmul.f32 %v1334, %v1266
        %1339 = vrot.lane.b32.xlu0 %v1335, 127
        %v1340 = vpop.permute.xlu0 %1339
        %1341 = vrot.lane.b32.xlu0 %v1336, 127
        %v1342 = vpop.permute.xlu0 %1341
        %v1345 = vadd.f32 %v1289, %v1340
        %v1346 = vadd.f32 %v1290, %v1342
        %s1347 = sld [smem:[#allocation10 + $0xe]]
        %v1348 = vstv %s1347
        %v1349 = vmul.f32 %v1348, %v1265
        %v1350 = vmul.f32 %v1348, %v1266
        %1353 = vrot.lane.b32.xlu0 %v1349, 126
        %v1354 = vpop.permute.xlu0 %1353
        %1355 = vrot.lane.b32.xlu0 %v1350, 126
        %v1356 = vpop.permute.xlu0 %1355
        %v1359 = vadd.f32 %v1303, %v1354
        %v1360 = vadd.f32 %v1304, %v1356
        %s1361 = sld [smem:[#allocation10 + $0x32]]
        %v1362 = vstv %s1361
        %v1363 = vmul.f32 %v1362, %v1265
        %v1364 = vmul.f32 %v1362, %v1266
        %1367 = vrot.lane.b32.xlu0 %v1363, 126
        %v1368 = vpop.permute.xlu0 %1367
        %1369 = vrot.lane.b32.xlu0 %v1364, 126
        %v1370 = vpop.permute.xlu0 %1369
        %v1373 = vadd.f32 %v1317, %v1368
        %v1374 = vadd.f32 %v1318, %v1370
        %s1375 = sld [smem:[#allocation10 + $0x56]]
        %v1376 = vstv %s1375
        %v1377 = vmul.f32 %v1376, %v1265
        %v1378 = vmul.f32 %v1376, %v1266
        %1381 = vrot.lane.b32.xlu0 %v1377, 126
        %v1382 = vpop.permute.xlu0 %1381
        %1383 = vrot.lane.b32.xlu0 %v1378, 126
        %v1384 = vpop.permute.xlu0 %1383
        %v1387 = vadd.f32 %v1331, %v1382
        %v1388 = vadd.f32 %v1332, %v1384
        %s1389 = sld [smem:[#allocation10 + $0x7a]]
        %v1390 = vstv %s1389
        %v1391 = vmul.f32 %v1390, %v1265
        %v1392 = vmul.f32 %v1390, %v1266
        %1395 = vrot.lane.b32.xlu0 %v1391, 126
        %v1396 = vpop.permute.xlu0 %1395
        %1397 = vrot.lane.b32.xlu0 %v1392, 126
        %v1398 = vpop.permute.xlu0 %1397
        %v1401 = vadd.f32 %v1345, %v1396
        %v1402 = vadd.f32 %v1346, %v1398
        %v1403 = vld [vmem:[%s430 + $0x2] sm:$0xff]
        %v1404 = vld [vmem:[%s430 + $0xa] sm:$0xff]
        %s1405 = sld [smem:[#allocation10 + $0xf]]
        %v1406 = vstv %s1405
        %v1407 = vmul.f32 %v1406, %v1403
        %v1408 = vmul.f32 %v1406, %v1404
        %v1409 = vadd.f32 %v1359, %v1407
        %v1410 = vadd.f32 %v1360, %v1408
        %s1411 = sld [smem:[#allocation10 + $0x33]]
        %v1412 = vstv %s1411
        %v1413 = vmul.f32 %v1412, %v1403
        %v1414 = vmul.f32 %v1412, %v1404
        %v1415 = vadd.f32 %v1373, %v1413
        %v1416 = vadd.f32 %v1374, %v1414
        %s1417 = sld [smem:[#allocation10 + $0x57]]
        %v1418 = vstv %s1417
        %v1419 = vmul.f32 %v1418, %v1403
        %v1420 = vmul.f32 %v1418, %v1404
        %v1421 = vadd.f32 %v1387, %v1419
        %v1422 = vadd.f32 %v1388, %v1420
        %s1423 = sld [smem:[#allocation10 + $0x7b]]
        %v1424 = vstv %s1423
        %v1425 = vmul.f32 %v1424, %v1403
        %v1426 = vmul.f32 %v1424, %v1404
        %v1427 = vadd.f32 %v1401, %v1425
        %v1428 = vadd.f32 %v1402, %v1426
        %s1429 = sld [smem:[#allocation10 + $0x10]]
        %v1430 = vstv %s1429
        %v1431 = vmul.f32 %v1430, %v1403
        %v1432 = vmul.f32 %v1430, %v1404
        %1435 = vrot.lane.b32.xlu0 %v1431, 127
        %v1436 = vpop.permute.xlu0 %1435
        %1437 = vrot.lane.b32.xlu0 %v1432, 127
        %v1438 = vpop.permute.xlu0 %1437
        %v1441 = vadd.f32 %v1409, %v1436
        %v1442 = vadd.f32 %v1410, %v1438
        %s1443 = sld [smem:[#allocation10 + $0x34]]
        %v1444 = vstv %s1443
        %v1445 = vmul.f32 %v1444, %v1403
        %v1446 = vmul.f32 %v1444, %v1404
        %1449 = vrot.lane.b32.xlu0 %v1445, 127
        %v1450 = vpop.permute.xlu0 %1449
        %1451 = vrot.lane.b32.xlu0 %v1446, 127
        %v1452 = vpop.permute.xlu0 %1451
        %v1455 = vadd.f32 %v1415, %v1450
        %v1456 = vadd.f32 %v1416, %v1452
        %s1457 = sld [smem:[#allocation10 + $0x58]]
        %v1458 = vstv %s1457
        %v1459 = vmul.f32 %v1458, %v1403
        %v1460 = vmul.f32 %v1458, %v1404
        %1463 = vrot.lane.b32.xlu0 %v1459, 127
        %v1464 = vpop.permute.xlu0 %1463
        %1465 = vrot.lane.b32.xlu0 %v1460, 127
        %v1466 = vpop.permute.xlu0 %1465
        %v1469 = vadd.f32 %v1421, %v1464
        %v1470 = vadd.f32 %v1422, %v1466
        %s1471 = sld [smem:[#allocation10 + $0x7c]]
        %v1472 = vstv %s1471
        %v1473 = vmul.f32 %v1472, %v1403
        %v1474 = vmul.f32 %v1472, %v1404
        %1477 = vrot.lane.b32.xlu0 %v1473, 127
        %v1478 = vpop.permute.xlu0 %1477
        %1479 = vrot.lane.b32.xlu0 %v1474, 127
        %v1480 = vpop.permute.xlu0 %1479
        %v1483 = vadd.f32 %v1427, %v1478
        %v1484 = vadd.f32 %v1428, %v1480
        %s1485 = sld [smem:[#allocation10 + $0x11]]
        %v1486 = vstv %s1485
        %v1487 = vmul.f32 %v1486, %v1403
        %v1488 = vmul.f32 %v1486, %v1404
        %1491 = vrot.lane.b32.xlu0 %v1487, 126
        %v1492 = vpop.permute.xlu0 %1491
        %1493 = vrot.lane.b32.xlu0 %v1488, 126
        %v1494 = vpop.permute.xlu0 %1493
        %v1497 = vadd.f32 %v1441, %v1492
        %v1498 = vadd.f32 %v1442, %v1494
        %s1499 = sld [smem:[#allocation10 + $0x35]]
        %v1500 = vstv %s1499
        %v1501 = vmul.f32 %v1500, %v1403
        %v1502 = vmul.f32 %v1500, %v1404
        %1505 = vrot.lane.b32.xlu0 %v1501, 126
        %v1506 = vpop.permute.xlu0 %1505
        %1507 = vrot.lane.b32.xlu0 %v1502, 126
        %v1508 = vpop.permute.xlu0 %1507
        %v1511 = vadd.f32 %v1455, %v1506
        %v1512 = vadd.f32 %v1456, %v1508
        %s1513 = sld [smem:[#allocation10 + $0x59]]
        %v1514 = vstv %s1513
        %v1515 = vmul.f32 %v1514, %v1403
        %v1516 = vmul.f32 %v1514, %v1404
        %1519 = vrot.lane.b32.xlu0 %v1515, 126
        %v1520 = vpop.permute.xlu0 %1519
        %1521 = vrot.lane.b32.xlu0 %v1516, 126
        %v1522 = vpop.permute.xlu0 %1521
        %v1525 = vadd.f32 %v1469, %v1520
        %v1526 = vadd.f32 %v1470, %v1522
        %s1527 = sld [smem:[#allocation10 + $0x7d]]
        %v1528 = vstv %s1527
        %v1529 = vmul.f32 %v1528, %v1403
        %v1530 = vmul.f32 %v1528, %v1404
        %1533 = vrot.lane.b32.xlu0 %v1529, 126
        %v1534 = vpop.permute.xlu0 %1533
        %1535 = vrot.lane.b32.xlu0 %v1530, 126
        %v1536 = vpop.permute.xlu0 %1535
        %v1539 = vadd.f32 %v1483, %v1534
        %v1540 = vadd.f32 %v1484, %v1536
        %v1541 = vld [vmem:[%s444] sm:$0xff]
        %v1542 = vld [vmem:[%s444 + $0x8] sm:$0xff]
        %s1543 = sld [smem:[#allocation10 + $0x12]]
        %v1544 = vstv %s1543
        %v1545 = vmul.f32 %v1544, %v1541
        %v1546 = vmul.f32 %v1544, %v1542
        %v1547 = vadd.f32 %v1497, %v1545
        %v1548 = vadd.f32 %v1498, %v1546
        %s1549 = sld [smem:[#allocation10 + $0x36]]
        %v1550 = vstv %s1549
        %v1551 = vmul.f32 %v1550, %v1541
        %v1552 = vmul.f32 %v1550, %v1542
        %v1553 = vadd.f32 %v1511, %v1551
        %v1554 = vadd.f32 %v1512, %v1552
        %s1555 = sld [smem:[#allocation10 + $0x5a]]
        %v1556 = vstv %s1555
        %v1557 = vmul.f32 %v1556, %v1541
        %v1558 = vmul.f32 %v1556, %v1542
        %v1559 = vadd.f32 %v1525, %v1557
        %v1560 = vadd.f32 %v1526, %v1558
        %s1561 = sld [smem:[#allocation10 + $0x7e]]
        %v1562 = vstv %s1561
        %v1563 = vmul.f32 %v1562, %v1541
        %v1564 = vmul.f32 %v1562, %v1542
        %v1565 = vadd.f32 %v1539, %v1563
        %v1566 = vadd.f32 %v1540, %v1564
        %s1567 = sld [smem:[#allocation10 + $0x13]]
        %v1568 = vstv %s1567
        %v1569 = vmul.f32 %v1568, %v1541
        %v1570 = vmul.f32 %v1568, %v1542
        %1573 = vrot.lane.b32.xlu0 %v1569, 127
        %v1574 = vpop.permute.xlu0 %1573
        %1575 = vrot.lane.b32.xlu0 %v1570, 127
        %v1576 = vpop.permute.xlu0 %1575
        %v1579 = vadd.f32 %v1547, %v1574
        %v1580 = vadd.f32 %v1548, %v1576
        %s1581 = sld [smem:[#allocation10 + $0x37]]
        %v1582 = vstv %s1581
        %v1583 = vmul.f32 %v1582, %v1541
        %v1584 = vmul.f32 %v1582, %v1542
        %1587 = vrot.lane.b32.xlu0 %v1583, 127
        %v1588 = vpop.permute.xlu0 %1587
        %1589 = vrot.lane.b32.xlu0 %v1584, 127
        %v1590 = vpop.permute.xlu0 %1589
        %v1593 = vadd.f32 %v1553, %v1588
        %v1594 = vadd.f32 %v1554, %v1590
        %s1595 = sld [smem:[#allocation10 + $0x5b]]
        %v1596 = vstv %s1595
        %v1597 = vmul.f32 %v1596, %v1541
        %v1598 = vmul.f32 %v1596, %v1542
        %1601 = vrot.lane.b32.xlu0 %v1597, 127
        %v1602 = vpop.permute.xlu0 %1601
        %1603 = vrot.lane.b32.xlu0 %v1598, 127
        %v1604 = vpop.permute.xlu0 %1603
        %v1607 = vadd.f32 %v1559, %v1602
        %v1608 = vadd.f32 %v1560, %v1604
        %s1609 = sld [smem:[#allocation10 + $0x7f]]
        %v1610 = vstv %s1609
        %v1611 = vmul.f32 %v1610, %v1541
        %v1612 = vmul.f32 %v1610, %v1542
        %1615 = vrot.lane.b32.xlu0 %v1611, 127
        %v1616 = vpop.permute.xlu0 %1615
        %1617 = vrot.lane.b32.xlu0 %v1612, 127
        %v1618 = vpop.permute.xlu0 %1617
        %v1621 = vadd.f32 %v1565, %v1616
        %v1622 = vadd.f32 %v1566, %v1618
        %s1623 = sld [smem:[#allocation10 + $0x14]]
        %v1624 = vstv %s1623
        %v1625 = vmul.f32 %v1624, %v1541
        %v1626 = vmul.f32 %v1624, %v1542
        %1629 = vrot.lane.b32.xlu0 %v1625, 126
        %v1630 = vpop.permute.xlu0 %1629
        %1631 = vrot.lane.b32.xlu0 %v1626, 126
        %v1632 = vpop.permute.xlu0 %1631
        %v1635 = vadd.f32 %v1579, %v1630
        %v1636 = vadd.f32 %v1580, %v1632
        %s1637 = sld [smem:[#allocation10 + $0x38]]
        %v1638 = vstv %s1637
        %v1639 = vmul.f32 %v1638, %v1541
        %v1640 = vmul.f32 %v1638, %v1542
        %1643 = vrot.lane.b32.xlu0 %v1639, 126
        %v1644 = vpop.permute.xlu0 %1643
        %1645 = vrot.lane.b32.xlu0 %v1640, 126
        %v1646 = vpop.permute.xlu0 %1645
        %v1649 = vadd.f32 %v1593, %v1644
        %v1650 = vadd.f32 %v1594, %v1646
        %s1651 = sld [smem:[#allocation10 + $0x5c]]
        %v1652 = vstv %s1651
        %v1653 = vmul.f32 %v1652, %v1541
        %v1654 = vmul.f32 %v1652, %v1542
        %1657 = vrot.lane.b32.xlu0 %v1653, 126
        %v1658 = vpop.permute.xlu0 %1657
        %1659 = vrot.lane.b32.xlu0 %v1654, 126
        %v1660 = vpop.permute.xlu0 %1659
        %v1663 = vadd.f32 %v1607, %v1658
        %v1664 = vadd.f32 %v1608, %v1660
        %s1665 = sld [smem:[#allocation10 + $0x80]]
        %v1666 = vstv %s1665
        %v1667 = vmul.f32 %v1666, %v1541
        %v1668 = vmul.f32 %v1666, %v1542
        %1671 = vrot.lane.b32.xlu0 %v1667, 126
        %v1672 = vpop.permute.xlu0 %1671
        %1673 = vrot.lane.b32.xlu0 %v1668, 126
        %v1674 = vpop.permute.xlu0 %1673
        %v1677 = vadd.f32 %v1621, %v1672
        %v1678 = vadd.f32 %v1622, %v1674
        %v1679 = vld [vmem:[%s444 + $0x1] sm:$0xff]
        %v1680 = vld [vmem:[%s444 + $0x9] sm:$0xff]
        %s1681 = sld [smem:[#allocation10 + $0x15]]
        %v1682 = vstv %s1681
        %v1683 = vmul.f32 %v1682, %v1679
        %v1684 = vmul.f32 %v1682, %v1680
        %v1685 = vadd.f32 %v1635, %v1683
        %v1686 = vadd.f32 %v1636, %v1684
        %s1687 = sld [smem:[#allocation10 + $0x39]]
        %v1688 = vstv %s1687
        %v1689 = vmul.f32 %v1688, %v1679
        %v1690 = vmul.f32 %v1688, %v1680
        %v1691 = vadd.f32 %v1649, %v1689
        %v1692 = vadd.f32 %v1650, %v1690
        %s1693 = sld [smem:[#allocation10 + $0x5d]]
        %v1694 = vstv %s1693
        %v1695 = vmul.f32 %v1694, %v1679
        %v1696 = vmul.f32 %v1694, %v1680
        %v1697 = vadd.f32 %v1663, %v1695
        %v1698 = vadd.f32 %v1664, %v1696
        %s1699 = sld [smem:[#allocation10 + $0x81]]
        %v1700 = vstv %s1699
        %v1701 = vmul.f32 %v1700, %v1679
        %v1702 = vmul.f32 %v1700, %v1680
        %v1703 = vadd.f32 %v1677, %v1701
        %v1704 = vadd.f32 %v1678, %v1702
        %s1705 = sld [smem:[#allocation10 + $0x16]]
        %v1706 = vstv %s1705
        %v1707 = vmul.f32 %v1706, %v1679
        %v1708 = vmul.f32 %v1706, %v1680
        %1711 = vrot.lane.b32.xlu0 %v1707, 127
        %v1712 = vpop.permute.xlu0 %1711
        %1713 = vrot.lane.b32.xlu0 %v1708, 127
        %v1714 = vpop.permute.xlu0 %1713
        %v1717 = vadd.f32 %v1685, %v1712
        %v1718 = vadd.f32 %v1686, %v1714
        %s1719 = sld [smem:[#allocation10 + $0x3a]]
        %v1720 = vstv %s1719
        %v1721 = vmul.f32 %v1720, %v1679
        %v1722 = vmul.f32 %v1720, %v1680
        %1725 = vrot.lane.b32.xlu0 %v1721, 127
        %v1726 = vpop.permute.xlu0 %1725
        %1727 = vrot.lane.b32.xlu0 %v1722, 127
        %v1728 = vpop.permute.xlu0 %1727
        %v1731 = vadd.f32 %v1691, %v1726
        %v1732 = vadd.f32 %v1692, %v1728
        %s1733 = sld [smem:[#allocation10 + $0x5e]]
        %v1734 = vstv %s1733
        %v1735 = vmul.f32 %v1734, %v1679
        %v1736 = vmul.f32 %v1734, %v1680
        %1739 = vrot.lane.b32.xlu0 %v1735, 127
        %v1740 = vpop.permute.xlu0 %1739
        %1741 = vrot.lane.b32.xlu0 %v1736, 127
        %v1742 = vpop.permute.xlu0 %1741
        %v1745 = vadd.f32 %v1697, %v1740
        %v1746 = vadd.f32 %v1698, %v1742
        %s1747 = sld [smem:[#allocation10 + $0x82]]
        %v1748 = vstv %s1747
        %v1749 = vmul.f32 %v1748, %v1679
        %v1750 = vmul.f32 %v1748, %v1680
        %1753 = vrot.lane.b32.xlu0 %v1749, 127
        %v1754 = vpop.permute.xlu0 %1753
        %1755 = vrot.lane.b32.xlu0 %v1750, 127
        %v1756 = vpop.permute.xlu0 %1755
        %v1759 = vadd.f32 %v1703, %v1754
        %v1760 = vadd.f32 %v1704, %v1756
        %s1761 = sld [smem:[#allocation10 + $0x17]]
        %v1762 = vstv %s1761
        %v1763 = vmul.f32 %v1762, %v1679
        %v1764 = vmul.f32 %v1762, %v1680
        %1767 = vrot.lane.b32.xlu0 %v1763, 126
        %v1768 = vpop.permute.xlu0 %1767
        %1769 = vrot.lane.b32.xlu0 %v1764, 126
        %v1770 = vpop.permute.xlu0 %1769
        %v1773 = vadd.f32 %v1717, %v1768
        %v1774 = vadd.f32 %v1718, %v1770
        %s1775 = sld [smem:[#allocation10 + $0x3b]]
        %v1776 = vstv %s1775
        %v1777 = vmul.f32 %v1776, %v1679
        %v1778 = vmul.f32 %v1776, %v1680
        %1781 = vrot.lane.b32.xlu0 %v1777, 126
        %v1782 = vpop.permute.xlu0 %1781
        %1783 = vrot.lane.b32.xlu0 %v1778, 126
        %v1784 = vpop.permute.xlu0 %1783
        %v1787 = vadd.f32 %v1731, %v1782
        %v1788 = vadd.f32 %v1732, %v1784
        %s1789 = sld [smem:[#allocation10 + $0x5f]]
        %v1790 = vstv %s1789
        %v1791 = vmul.f32 %v1790, %v1679
        %v1792 = vmul.f32 %v1790, %v1680
        %1795 = vrot.lane.b32.xlu0 %v1791, 126
        %v1796 = vpop.permute.xlu0 %1795
        %1797 = vrot.lane.b32.xlu0 %v1792, 126
        %v1798 = vpop.permute.xlu0 %1797
        %v1801 = vadd.f32 %v1745, %v1796
        %v1802 = vadd.f32 %v1746, %v1798
        %s1803 = sld [smem:[#allocation10 + $0x83]]
        %v1804 = vstv %s1803
        %v1805 = vmul.f32 %v1804, %v1679
        %v1806 = vmul.f32 %v1804, %v1680
        %1809 = vrot.lane.b32.xlu0 %v1805, 126
        %v1810 = vpop.permute.xlu0 %1809
        %1811 = vrot.lane.b32.xlu0 %v1806, 126
        %v1812 = vpop.permute.xlu0 %1811
        %v1815 = vadd.f32 %v1759, %v1810
        %v1816 = vadd.f32 %v1760, %v1812
        %v1817 = vld [vmem:[%s444 + $0x2] sm:$0xff]
        %v1818 = vld [vmem:[%s444 + $0xa] sm:$0xff]
        %s1819 = sld [smem:[#allocation10 + $0x18]]
        %v1820 = vstv %s1819
        %v1821 = vmul.f32 %v1820, %v1817
        %v1822 = vmul.f32 %v1820, %v1818
        %v1823 = vadd.f32 %v1773, %v1821
        %v1824 = vadd.f32 %v1774, %v1822
        %s1825 = sld [smem:[#allocation10 + $0x3c]]
        %v1826 = vstv %s1825
        %v1827 = vmul.f32 %v1826, %v1817
        %v1828 = vmul.f32 %v1826, %v1818
        %v1829 = vadd.f32 %v1787, %v1827
        %v1830 = vadd.f32 %v1788, %v1828
        %s1831 = sld [smem:[#allocation10 + $0x60]]
        %v1832 = vstv %s1831
        %v1833 = vmul.f32 %v1832, %v1817
        %v1834 = vmul.f32 %v1832, %v1818
        %v1835 = vadd.f32 %v1801, %v1833
        %v1836 = vadd.f32 %v1802, %v1834
        %s1837 = sld [smem:[#allocation10 + $0x84]]
        %v1838 = vstv %s1837
        %v1839 = vmul.f32 %v1838, %v1817
        %v1840 = vmul.f32 %v1838, %v1818
        %v1841 = vadd.f32 %v1815, %v1839
        %v1842 = vadd.f32 %v1816, %v1840
        %s1843 = sld [smem:[#allocation10 + $0x19]]
        %v1844 = vstv %s1843
        %v1845 = vmul.f32 %v1844, %v1817
        %v1846 = vmul.f32 %v1844, %v1818
        %1849 = vrot.lane.b32.xlu0 %v1845, 127
        %v1850 = vpop.permute.xlu0 %1849
        %1851 = vrot.lane.b32.xlu0 %v1846, 127
        %v1852 = vpop.permute.xlu0 %1851
        %v1855 = vadd.f32 %v1823, %v1850
        %v1856 = vadd.f32 %v1824, %v1852
        %s1857 = sld [smem:[#allocation10 + $0x3d]]
        %v1858 = vstv %s1857
        %v1859 = vmul.f32 %v1858, %v1817
        %v1860 = vmul.f32 %v1858, %v1818
        %1863 = vrot.lane.b32.xlu0 %v1859, 127
        %v1864 = vpop.permute.xlu0 %1863
        %1865 = vrot.lane.b32.xlu0 %v1860, 127
        %v1866 = vpop.permute.xlu0 %1865
        %v1869 = vadd.f32 %v1829, %v1864
        %v1870 = vadd.f32 %v1830, %v1866
        %s1871 = sld [smem:[#allocation10 + $0x61]]
        %v1872 = vstv %s1871
        %v1873 = vmul.f32 %v1872, %v1817
        %v1874 = vmul.f32 %v1872, %v1818
        %1877 = vrot.lane.b32.xlu0 %v1873, 127
        %v1878 = vpop.permute.xlu0 %1877
        %1879 = vrot.lane.b32.xlu0 %v1874, 127
        %v1880 = vpop.permute.xlu0 %1879
        %v1883 = vadd.f32 %v1835, %v1878
        %v1884 = vadd.f32 %v1836, %v1880
        %s1885 = sld [smem:[#allocation10 + $0x85]]
        %v1886 = vstv %s1885
        %v1887 = vmul.f32 %v1886, %v1817
        %v1888 = vmul.f32 %v1886, %v1818
        %1891 = vrot.lane.b32.xlu0 %v1887, 127
        %v1892 = vpop.permute.xlu0 %1891
        %1893 = vrot.lane.b32.xlu0 %v1888, 127
        %v1894 = vpop.permute.xlu0 %1893
        %v1897 = vadd.f32 %v1841, %v1892
        %v1898 = vadd.f32 %v1842, %v1894
        %s1899 = sld [smem:[#allocation10 + $0x1a]]
        %v1900 = vstv %s1899
        %v1901 = vmul.f32 %v1900, %v1817
        %v1902 = vmul.f32 %v1900, %v1818
        %1905 = vrot.lane.b32.xlu0 %v1901, 126
        %v1906 = vpop.permute.xlu0 %1905
        %1907 = vrot.lane.b32.xlu0 %v1902, 126
        %v1908 = vpop.permute.xlu0 %1907
        %v1911 = vadd.f32 %v1855, %v1906
        %v1912 = vadd.f32 %v1856, %v1908
        %s1913 = sld [smem:[#allocation10 + $0x3e]]
        %v1914 = vstv %s1913
        %v1915 = vmul.f32 %v1914, %v1817
        %v1916 = vmul.f32 %v1914, %v1818
        %1919 = vrot.lane.b32.xlu0 %v1915, 126
        %v1920 = vpop.permute.xlu0 %1919
        %1921 = vrot.lane.b32.xlu0 %v1916, 126
        %v1922 = vpop.permute.xlu0 %1921
        %v1925 = vadd.f32 %v1869, %v1920
        %v1926 = vadd.f32 %v1870, %v1922
        %s1927 = sld [smem:[#allocation10 + $0x62]]
        %v1928 = vstv %s1927
        %v1929 = vmul.f32 %v1928, %v1817
        %v1930 = vmul.f32 %v1928, %v1818
        %1933 = vrot.lane.b32.xlu0 %v1929, 126
        %v1934 = vpop.permute.xlu0 %1933
        %1935 = vrot.lane.b32.xlu0 %v1930, 126
        %v1936 = vpop.permute.xlu0 %1935
        %v1939 = vadd.f32 %v1883, %v1934
        %v1940 = vadd.f32 %v1884, %v1936
        %s1941 = sld [smem:[#allocation10 + $0x86]]
        %v1942 = vstv %s1941
        %v1943 = vmul.f32 %v1942, %v1817
        %v1944 = vmul.f32 %v1942, %v1818
        %1947 = vrot.lane.b32.xlu0 %v1943, 126
        %v1948 = vpop.permute.xlu0 %1947
        %1949 = vrot.lane.b32.xlu0 %v1944, 126
        %v1950 = vpop.permute.xlu0 %1949
        %v1953 = vadd.f32 %v1897, %v1948
        %v1954 = vadd.f32 %v1898, %v1950
        %v1955 = vld [vmem:[%s458] sm:$0xff]
        %v1956 = vld [vmem:[%s458 + $0x8] sm:$0xff]
        %s1957 = sld [smem:[#allocation10 + $0x1b]]
        %v1958 = vstv %s1957
        %v1959 = vmul.f32 %v1958, %v1955
        %v1960 = vmul.f32 %v1958, %v1956
        %v1961 = vadd.f32 %v1911, %v1959
        %v1962 = vadd.f32 %v1912, %v1960
        %s1963 = sld [smem:[#allocation10 + $0x3f]]
        %v1964 = vstv %s1963
        %v1965 = vmul.f32 %v1964, %v1955
        %v1966 = vmul.f32 %v1964, %v1956
        %v1967 = vadd.f32 %v1925, %v1965
        %v1968 = vadd.f32 %v1926, %v1966
        %s1969 = sld [smem:[#allocation10 + $0x63]]
        %v1970 = vstv %s1969
        %v1971 = vmul.f32 %v1970, %v1955
        %v1972 = vmul.f32 %v1970, %v1956
        %v1973 = vadd.f32 %v1939, %v1971
        %v1974 = vadd.f32 %v1940, %v1972
        %s1975 = sld [smem:[#allocation10 + $0x87]]
        %v1976 = vstv %s1975
        %v1977 = vmul.f32 %v1976, %v1955
        %v1978 = vmul.f32 %v1976, %v1956
        %v1979 = vadd.f32 %v1953, %v1977
        %v1980 = vadd.f32 %v1954, %v1978
        %s1981 = sld [smem:[#allocation10 + $0x1c]]
        %v1982 = vstv %s1981
        %v1983 = vmul.f32 %v1982, %v1955
        %v1984 = vmul.f32 %v1982, %v1956
        %1987 = vrot.lane.b32.xlu0 %v1983, 127
        %v1988 = vpop.permute.xlu0 %1987
        %1989 = vrot.lane.b32.xlu0 %v1984, 127
        %v1990 = vpop.permute.xlu0 %1989
        %v1993 = vadd.f32 %v1961, %v1988
        %v1994 = vadd.f32 %v1962, %v1990
        %s1995 = sld [smem:[#allocation10 + $0x40]]
        %v1996 = vstv %s1995
        %v1997 = vmul.f32 %v1996, %v1955
        %v1998 = vmul.f32 %v1996, %v1956
        %2001 = vrot.lane.b32.xlu0 %v1997, 127
        %v2002 = vpop.permute.xlu0 %2001
        %2003 = vrot.lane.b32.xlu0 %v1998, 127
        %v2004 = vpop.permute.xlu0 %2003
        %v2007 = vadd.f32 %v1967, %v2002
        %v2008 = vadd.f32 %v1968, %v2004
        %s2009 = sld [smem:[#allocation10 + $0x64]]
        %v2010 = vstv %s2009
        %v2011 = vmul.f32 %v2010, %v1955
        %v2012 = vmul.f32 %v2010, %v1956
        %2015 = vrot.lane.b32.xlu0 %v2011, 127
        %v2016 = vpop.permute.xlu0 %2015
        %2017 = vrot.lane.b32.xlu0 %v2012, 127
        %v2018 = vpop.permute.xlu0 %2017
        %v2021 = vadd.f32 %v1973, %v2016
        %v2022 = vadd.f32 %v1974, %v2018
        %s2023 = sld [smem:[#allocation10 + $0x88]]
        %v2024 = vstv %s2023
        %v2025 = vmul.f32 %v2024, %v1955
        %v2026 = vmul.f32 %v2024, %v1956
        %2029 = vrot.lane.b32.xlu0 %v2025, 127
        %v2030 = vpop.permute.xlu0 %2029
        %2031 = vrot.lane.b32.xlu0 %v2026, 127
        %v2032 = vpop.permute.xlu0 %2031
        %v2035 = vadd.f32 %v1979, %v2030
        %v2036 = vadd.f32 %v1980, %v2032
        %s2037 = sld [smem:[#allocation10 + $0x1d]]
        %v2038 = vstv %s2037
        %v2039 = vmul.f32 %v2038, %v1955
        %v2040 = vmul.f32 %v2038, %v1956
        %2043 = vrot.lane.b32.xlu0 %v2039, 126
        %v2044 = vpop.permute.xlu0 %2043
        %2045 = vrot.lane.b32.xlu0 %v2040, 126
        %v2046 = vpop.permute.xlu0 %2045
        %v2049 = vadd.f32 %v1993, %v2044
        %v2050 = vadd.f32 %v1994, %v2046
        %s2051 = sld [smem:[#allocation10 + $0x41]]
        %v2052 = vstv %s2051
        %v2053 = vmul.f32 %v2052, %v1955
        %v2054 = vmul.f32 %v2052, %v1956
        %2057 = vrot.lane.b32.xlu0 %v2053, 126
        %v2058 = vpop.permute.xlu0 %2057
        %2059 = vrot.lane.b32.xlu0 %v2054, 126
        %v2060 = vpop.permute.xlu0 %2059
        %v2063 = vadd.f32 %v2007, %v2058
        %v2064 = vadd.f32 %v2008, %v2060
        %s2065 = sld [smem:[#allocation10 + $0x65]]
        %v2066 = vstv %s2065
        %v2067 = vmul.f32 %v2066, %v1955
        %v2068 = vmul.f32 %v2066, %v1956
        %2071 = vrot.lane.b32.xlu0 %v2067, 126
        %v2072 = vpop.permute.xlu0 %2071
        %2073 = vrot.lane.b32.xlu0 %v2068, 126
        %v2074 = vpop.permute.xlu0 %2073
        %v2077 = vadd.f32 %v2021, %v2072
        %v2078 = vadd.f32 %v2022, %v2074
        %s2079 = sld [smem:[#allocation10 + $0x89]]
        %v2080 = vstv %s2079
        %v2081 = vmul.f32 %v2080, %v1955
        %v2082 = vmul.f32 %v2080, %v1956
        %2085 = vrot.lane.b32.xlu0 %v2081, 126
        %v2086 = vpop.permute.xlu0 %2085
        %2087 = vrot.lane.b32.xlu0 %v2082, 126
        %v2088 = vpop.permute.xlu0 %2087
        %v2091 = vadd.f32 %v2035, %v2086
        %v2092 = vadd.f32 %v2036, %v2088
        %v2093 = vld [vmem:[%s458 + $0x1] sm:$0xff]
        %v2094 = vld [vmem:[%s458 + $0x9] sm:$0xff]
        %s2095 = sld [smem:[#allocation10 + $0x1e]]
        %v2096 = vstv %s2095
        %v2097 = vmul.f32 %v2096, %v2093
        %v2098 = vmul.f32 %v2096, %v2094
        %v2099 = vadd.f32 %v2049, %v2097
        %v2100 = vadd.f32 %v2050, %v2098
        %s2101 = sld [smem:[#allocation10 + $0x42]]
        %v2102 = vstv %s2101
        %v2103 = vmul.f32 %v2102, %v2093
        %v2104 = vmul.f32 %v2102, %v2094
        %v2105 = vadd.f32 %v2063, %v2103
        %v2106 = vadd.f32 %v2064, %v2104
        %s2107 = sld [smem:[#allocation10 + $0x66]]
        %v2108 = vstv %s2107
        %v2109 = vmul.f32 %v2108, %v2093
        %v2110 = vmul.f32 %v2108, %v2094
        %v2111 = vadd.f32 %v2077, %v2109
        %v2112 = vadd.f32 %v2078, %v2110
        %s2113 = sld [smem:[#allocation10 + $0x8a]]
        %v2114 = vstv %s2113
        %v2115 = vmul.f32 %v2114, %v2093
        %v2116 = vmul.f32 %v2114, %v2094
        %v2117 = vadd.f32 %v2091, %v2115
        %v2118 = vadd.f32 %v2092, %v2116
        %s2119 = sld [smem:[#allocation10 + $0x1f]]
        %v2120 = vstv %s2119
        %v2121 = vmul.f32 %v2120, %v2093
        %v2122 = vmul.f32 %v2120, %v2094
        %2125 = vrot.lane.b32.xlu0 %v2121, 127
        %v2126 = vpop.permute.xlu0 %2125
        %2127 = vrot.lane.b32.xlu0 %v2122, 127
        %v2128 = vpop.permute.xlu0 %2127
        %v2131 = vadd.f32 %v2099, %v2126
        %v2132 = vadd.f32 %v2100, %v2128
        %s2133 = sld [smem:[#allocation10 + $0x43]]
        %v2134 = vstv %s2133
        %v2135 = vmul.f32 %v2134, %v2093
        %v2136 = vmul.f32 %v2134, %v2094
        %2139 = vrot.lane.b32.xlu0 %v2135, 127
        %v2140 = vpop.permute.xlu0 %2139
        %2141 = vrot.lane.b32.xlu0 %v2136, 127
        %v2142 = vpop.permute.xlu0 %2141
        %v2145 = vadd.f32 %v2105, %v2140
        %v2146 = vadd.f32 %v2106, %v2142
        %s2147 = sld [smem:[#allocation10 + $0x67]]
        %v2148 = vstv %s2147
        %v2149 = vmul.f32 %v2148, %v2093
        %v2150 = vmul.f32 %v2148, %v2094
        %2153 = vrot.lane.b32.xlu0 %v2149, 127
        %v2154 = vpop.permute.xlu0 %2153
        %2155 = vrot.lane.b32.xlu0 %v2150, 127
        %v2156 = vpop.permute.xlu0 %2155
        %v2159 = vadd.f32 %v2111, %v2154
        %v2160 = vadd.f32 %v2112, %v2156
        %s2161 = sld [smem:[#allocation10 + $0x8b]]
        %v2162 = vstv %s2161
        %v2163 = vmul.f32 %v2162, %v2093
        %v2164 = vmul.f32 %v2162, %v2094
        %2167 = vrot.lane.b32.xlu0 %v2163, 127
        %v2168 = vpop.permute.xlu0 %2167
        %2169 = vrot.lane.b32.xlu0 %v2164, 127
        %v2170 = vpop.permute.xlu0 %2169
        %v2173 = vadd.f32 %v2117, %v2168
        %v2174 = vadd.f32 %v2118, %v2170
        %s2175 = sld [smem:[#allocation10 + $0x20]]
        %v2176 = vstv %s2175
        %v2177 = vmul.f32 %v2176, %v2093
        %v2178 = vmul.f32 %v2176, %v2094
        %2181 = vrot.lane.b32.xlu0 %v2177, 126
        %v2182 = vpop.permute.xlu0 %2181
        %2183 = vrot.lane.b32.xlu0 %v2178, 126
        %v2184 = vpop.permute.xlu0 %2183
        %v2187 = vadd.f32 %v2131, %v2182
        %v2188 = vadd.f32 %v2132, %v2184
        %s2189 = sld [smem:[#allocation10 + $0x44]]
        %v2190 = vstv %s2189
        %v2191 = vmul.f32 %v2190, %v2093
        %v2192 = vmul.f32 %v2190, %v2094
        %2195 = vrot.lane.b32.xlu0 %v2191, 126
        %v2196 = vpop.permute.xlu0 %2195
        %2197 = vrot.lane.b32.xlu0 %v2192, 126
        %v2198 = vpop.permute.xlu0 %2197
        %v2201 = vadd.f32 %v2145, %v2196
        %v2202 = vadd.f32 %v2146, %v2198
        %s2203 = sld [smem:[#allocation10 + $0x68]]
        %v2204 = vstv %s2203
        %v2205 = vmul.f32 %v2204, %v2093
        %v2206 = vmul.f32 %v2204, %v2094
        %2209 = vrot.lane.b32.xlu0 %v2205, 126
        %v2210 = vpop.permute.xlu0 %2209
        %2211 = vrot.lane.b32.xlu0 %v2206, 126
        %v2212 = vpop.permute.xlu0 %2211
        %v2215 = vadd.f32 %v2159, %v2210
        %v2216 = vadd.f32 %v2160, %v2212
        %s2217 = sld [smem:[#allocation10 + $0x8c]]
        %v2218 = vstv %s2217
        %v2219 = vmul.f32 %v2218, %v2093
        %v2220 = vmul.f32 %v2218, %v2094
        %2223 = vrot.lane.b32.xlu0 %v2219, 126
        %v2224 = vpop.permute.xlu0 %2223
        %2225 = vrot.lane.b32.xlu0 %v2220, 126
        %v2226 = vpop.permute.xlu0 %2225
        %v2229 = vadd.f32 %v2173, %v2224
        %v2230 = vadd.f32 %v2174, %v2226
        %v2231 = vld [vmem:[%s458 + $0x2] sm:$0xff]
        %v2232 = vld [vmem:[%s458 + $0xa] sm:$0xff]
        %s2233 = sld [smem:[#allocation10 + $0x21]]
        %v2234 = vstv %s2233
        %v2235 = vmul.f32 %v2234, %v2231
        %v2236 = vmul.f32 %v2234, %v2232
        %v2237 = vadd.f32 %v2187, %v2235
        %v2238 = vadd.f32 %v2188, %v2236
        %s2239 = sld [smem:[#allocation10 + $0x45]]
        %v2240 = vstv %s2239
        %v2241 = vmul.f32 %v2240, %v2231
        %v2242 = vmul.f32 %v2240, %v2232
        %v2243 = vadd.f32 %v2201, %v2241
        %v2244 = vadd.f32 %v2202, %v2242
        %s2245 = sld [smem:[#allocation10 + $0x69]]
        %v2246 = vstv %s2245
        %v2247 = vmul.f32 %v2246, %v2231
        %v2248 = vmul.f32 %v2246, %v2232
        %v2249 = vadd.f32 %v2215, %v2247
        %v2250 = vadd.f32 %v2216, %v2248
        %s2251 = sld [smem:[#allocation10 + $0x8d]]
        %v2252 = vstv %s2251
        %v2253 = vmul.f32 %v2252, %v2231
        %v2254 = vmul.f32 %v2252, %v2232
        %v2255 = vadd.f32 %v2229, %v2253
        %v2256 = vadd.f32 %v2230, %v2254
        %s2257 = sld [smem:[#allocation10 + $0x22]]
        %v2258 = vstv %s2257
        %v2259 = vmul.f32 %v2258, %v2231
        %v2260 = vmul.f32 %v2258, %v2232
        %2263 = vrot.lane.b32.xlu0 %v2259, 127
        %v2264 = vpop.permute.xlu0 %2263
        %2265 = vrot.lane.b32.xlu0 %v2260, 127
        %v2266 = vpop.permute.xlu0 %2265
        %v2269 = vadd.f32 %v2237, %v2264
        %v2270 = vadd.f32 %v2238, %v2266
        %s2271 = sld [smem:[#allocation10 + $0x46]]
        %v2272 = vstv %s2271
        %v2273 = vmul.f32 %v2272, %v2231
        %v2274 = vmul.f32 %v2272, %v2232
        %2277 = vrot.lane.b32.xlu0 %v2273, 127
        %v2278 = vpop.permute.xlu0 %2277
        %2279 = vrot.lane.b32.xlu0 %v2274, 127
        %v2280 = vpop.permute.xlu0 %2279
        %v2283 = vadd.f32 %v2243, %v2278
        %v2284 = vadd.f32 %v2244, %v2280
        %s2285 = sld [smem:[#allocation10 + $0x6a]]
        %v2286 = vstv %s2285
        %v2287 = vmul.f32 %v2286, %v2231
        %v2288 = vmul.f32 %v2286, %v2232
        %2291 = vrot.lane.b32.xlu0 %v2287, 127
        %v2292 = vpop.permute.xlu0 %2291
        %2293 = vrot.lane.b32.xlu0 %v2288, 127
        %v2294 = vpop.permute.xlu0 %2293
        %v2297 = vadd.f32 %v2249, %v2292
        %v2298 = vadd.f32 %v2250, %v2294
        %s2299 = sld [smem:[#allocation10 + $0x8e]]
        %v2300 = vstv %s2299
        %v2301 = vmul.f32 %v2300, %v2231
        %v2302 = vmul.f32 %v2300, %v2232
        %2305 = vrot.lane.b32.xlu0 %v2301, 127
        %v2306 = vpop.permute.xlu0 %2305
        %2307 = vrot.lane.b32.xlu0 %v2302, 127
        %v2308 = vpop.permute.xlu0 %2307
        %v2311 = vadd.f32 %v2255, %v2306
        %v2312 = vadd.f32 %v2256, %v2308
        %s2313 = sld [smem:[#allocation10 + $0x23]]
        %v2314 = vstv %s2313
        %v2315 = vmul.f32 %v2314, %v2231
        %v2316 = vmul.f32 %v2314, %v2232
        %2319 = vrot.lane.b32.xlu0 %v2315, 126
        %v2320 = vpop.permute.xlu0 %2319
        %2321 = vrot.lane.b32.xlu0 %v2316, 126
        %v2322 = vpop.permute.xlu0 %2321
        %v2325 = vadd.f32 %v2269, %v2320
        %v2326 = vadd.f32 %v2270, %v2322
        %s2327 = sld [smem:[#allocation10 + $0x47]]
        %v2328 = vstv %s2327
        %v2329 = vmul.f32 %v2328, %v2231
        %v2330 = vmul.f32 %v2328, %v2232
        %2333 = vrot.lane.b32.xlu0 %v2329, 126
        %v2334 = vpop.permute.xlu0 %2333
        %2335 = vrot.lane.b32.xlu0 %v2330, 126
        %v2336 = vpop.permute.xlu0 %2335
        %v2339 = vadd.f32 %v2283, %v2334
        %v2340 = vadd.f32 %v2284, %v2336
        %s2341 = sld [smem:[#allocation10 + $0x6b]]
        %v2342 = vstv %s2341
        %v2343 = vmul.f32 %v2342, %v2231
        %v2344 = vmul.f32 %v2342, %v2232
        %2347 = vrot.lane.b32.xlu0 %v2343, 126
        %v2348 = vpop.permute.xlu0 %2347
        %2349 = vrot.lane.b32.xlu0 %v2344, 126
        %v2350 = vpop.permute.xlu0 %2349
        %v2353 = vadd.f32 %v2297, %v2348
        %v2354 = vadd.f32 %v2298, %v2350
        %s2355 = sld [smem:[#allocation10 + $0x8f]]
        %v2356 = vstv %s2355
        %v2357 = vmul.f32 %v2356, %v2231
        %v2358 = vmul.f32 %v2356, %v2232
        %2361 = vrot.lane.b32.xlu0 %v2357, 126
        %v2362 = vpop.permute.xlu0 %2361
        %2363 = vrot.lane.b32.xlu0 %v2358, 126
        %v2364 = vpop.permute.xlu0 %2363
        %v2367 = vadd.f32 %v2311, %v2362
        %v2368 = vadd.f32 %v2312, %v2364
        %v2369 = vld [vmem:[#allocation3] sm:$0xff]
        %v2370 = vld [vmem:[#allocation3 + $0x8] sm:$0xff]
        %s2371 = sld [smem:[#allocation11]]
        %v2372 = vstv %s2371
        %v2373 = vmul.f32 %v2372, %v2369
        %v2374 = vmul.f32 %v2372, %v2370
        %v2375 = vadd.f32 %v2325, %v2373
        %v2376 = vadd.f32 %v2326, %v2374
        %s2377 = sld [smem:[#allocation11 + $0x24]]
        %v2378 = vstv %s2377
        %v2379 = vmul.f32 %v2378, %v2369
        %v2380 = vmul.f32 %v2378, %v2370
        %v2381 = vadd.f32 %v2339, %v2379
        %v2382 = vadd.f32 %v2340, %v2380
        %s2383 = sld [smem:[#allocation11 + $0x48]]
        %v2384 = vstv %s2383
        %v2385 = vmul.f32 %v2384, %v2369
        %v2386 = vmul.f32 %v2384, %v2370
        %v2387 = vadd.f32 %v2353, %v2385
        %v2388 = vadd.f32 %v2354, %v2386
        %s2389 = sld [smem:[#allocation11 + $0x6c]]
        %v2390 = vstv %s2389
        %v2391 = vmul.f32 %v2390, %v2369
        %v2392 = vmul.f32 %v2390, %v2370
        %v2393 = vadd.f32 %v2367, %v2391
        %v2394 = vadd.f32 %v2368, %v2392
        %s2395 = sld [smem:[#allocation11 + $0x1]]
        %v2396 = vstv %s2395
        %v2397 = vmul.f32 %v2396, %v2369
        %v2398 = vmul.f32 %v2396, %v2370
        %2401 = vrot.lane.b32.xlu0 %v2397, 127
        %v2402 = vpop.permute.xlu0 %2401
        %2403 = vrot.lane.b32.xlu0 %v2398, 127
        %v2404 = vpop.permute.xlu0 %2403
        %v2407 = vadd.f32 %v2375, %v2402
        %v2408 = vadd.f32 %v2376, %v2404
        %s2409 = sld [smem:[#allocation11 + $0x25]]
        %v2410 = vstv %s2409
        %v2411 = vmul.f32 %v2410, %v2369
        %v2412 = vmul.f32 %v2410, %v2370
        %2415 = vrot.lane.b32.xlu0 %v2411, 127
        %v2416 = vpop.permute.xlu0 %2415
        %2417 = vrot.lane.b32.xlu0 %v2412, 127
        %v2418 = vpop.permute.xlu0 %2417
        %v2421 = vadd.f32 %v2381, %v2416
        %v2422 = vadd.f32 %v2382, %v2418
        %s2423 = sld [smem:[#allocation11 + $0x49]]
        %v2424 = vstv %s2423
        %v2425 = vmul.f32 %v2424, %v2369
        %v2426 = vmul.f32 %v2424, %v2370
        %2429 = vrot.lane.b32.xlu0 %v2425, 127
        %v2430 = vpop.permute.xlu0 %2429
        %2431 = vrot.lane.b32.xlu0 %v2426, 127
        %v2432 = vpop.permute.xlu0 %2431
        %v2435 = vadd.f32 %v2387, %v2430
        %v2436 = vadd.f32 %v2388, %v2432
        %s2437 = sld [smem:[#allocation11 + $0x6d]]
        %v2438 = vstv %s2437
        %v2439 = vmul.f32 %v2438, %v2369
        %v2440 = vmul.f32 %v2438, %v2370
        %2443 = vrot.lane.b32.xlu0 %v2439, 127
        %v2444 = vpop.permute.xlu0 %2443
        %2445 = vrot.lane.b32.xlu0 %v2440, 127
        %v2446 = vpop.permute.xlu0 %2445
        %v2449 = vadd.f32 %v2393, %v2444
        %v2450 = vadd.f32 %v2394, %v2446
        %s2451 = sld [smem:[#allocation11 + $0x2]]
        %v2452 = vstv %s2451
        %v2453 = vmul.f32 %v2452, %v2369
        %v2454 = vmul.f32 %v2452, %v2370
        %2457 = vrot.lane.b32.xlu0 %v2453, 126
        %v2458 = vpop.permute.xlu0 %2457
        %2459 = vrot.lane.b32.xlu0 %v2454, 126
        %v2460 = vpop.permute.xlu0 %2459
        %v2463 = vadd.f32 %v2407, %v2458
        %v2464 = vadd.f32 %v2408, %v2460
        %s2465 = sld [smem:[#allocation11 + $0x26]]
        %v2466 = vstv %s2465
        %v2467 = vmul.f32 %v2466, %v2369
        %v2468 = vmul.f32 %v2466, %v2370
        %2471 = vrot.lane.b32.xlu0 %v2467, 126
        %v2472 = vpop.permute.xlu0 %2471
        %2473 = vrot.lane.b32.xlu0 %v2468, 126
        %v2474 = vpop.permute.xlu0 %2473
        %v2477 = vadd.f32 %v2421, %v2472
        %v2478 = vadd.f32 %v2422, %v2474
        %s2479 = sld [smem:[#allocation11 + $0x4a]]
        %v2480 = vstv %s2479
        %v2481 = vmul.f32 %v2480, %v2369
        %v2482 = vmul.f32 %v2480, %v2370
        %2485 = vrot.lane.b32.xlu0 %v2481, 126
        %v2486 = vpop.permute.xlu0 %2485
        %2487 = vrot.lane.b32.xlu0 %v2482, 126
        %v2488 = vpop.permute.xlu0 %2487
        %v2491 = vadd.f32 %v2435, %v2486
        %v2492 = vadd.f32 %v2436, %v2488
        %s2493 = sld [smem:[#allocation11 + $0x6e]]
        %v2494 = vstv %s2493
        %v2495 = vmul.f32 %v2494, %v2369
        %v2496 = vmul.f32 %v2494, %v2370
        %2499 = vrot.lane.b32.xlu0 %v2495, 126
        %v2500 = vpop.permute.xlu0 %2499
        %2501 = vrot.lane.b32.xlu0 %v2496, 126
        %v2502 = vpop.permute.xlu0 %2501
        %v2505 = vadd.f32 %v2449, %v2500
        %v2506 = vadd.f32 %v2450, %v2502
        %v2507 = vld [vmem:[#allocation3 + $0x1] sm:$0xff]
        %v2508 = vld [vmem:[#allocation3 + $0x9] sm:$0xff]
        %s2509 = sld [smem:[#allocation11 + $0x3]]
        %v2510 = vstv %s2509
        %v2511 = vmul.f32 %v2510, %v2507
        %v2512 = vmul.f32 %v2510, %v2508
        %v2513 = vadd.f32 %v2463, %v2511
        %v2514 = vadd.f32 %v2464, %v2512
        %s2515 = sld [smem:[#allocation11 + $0x27]]
        %v2516 = vstv %s2515
        %v2517 = vmul.f32 %v2516, %v2507
        %v2518 = vmul.f32 %v2516, %v2508
        %v2519 = vadd.f32 %v2477, %v2517
        %v2520 = vadd.f32 %v2478, %v2518
        %s2521 = sld [smem:[#allocation11 + $0x4b]]
        %v2522 = vstv %s2521
        %v2523 = vmul.f32 %v2522, %v2507
        %v2524 = vmul.f32 %v2522, %v2508
        %v2525 = vadd.f32 %v2491, %v2523
        %v2526 = vadd.f32 %v2492, %v2524
        %s2527 = sld [smem:[#allocation11 + $0x6f]]
        %v2528 = vstv %s2527
        %v2529 = vmul.f32 %v2528, %v2507
        %v2530 = vmul.f32 %v2528, %v2508
        %v2531 = vadd.f32 %v2505, %v2529
        %v2532 = vadd.f32 %v2506, %v2530
        %s2533 = sld [smem:[#allocation11 + $0x4]]
        %v2534 = vstv %s2533
        %v2535 = vmul.f32 %v2534, %v2507
        %v2536 = vmul.f32 %v2534, %v2508
        %2539 = vrot.lane.b32.xlu0 %v2535, 127
        %v2540 = vpop.permute.xlu0 %2539
        %2541 = vrot.lane.b32.xlu0 %v2536, 127
        %v2542 = vpop.permute.xlu0 %2541
        %v2545 = vadd.f32 %v2513, %v2540
        %v2546 = vadd.f32 %v2514, %v2542
        %s2547 = sld [smem:[#allocation11 + $0x28]]
        %v2548 = vstv %s2547
        %v2549 = vmul.f32 %v2548, %v2507
        %v2550 = vmul.f32 %v2548, %v2508
        %2553 = vrot.lane.b32.xlu0 %v2549, 127
        %v2554 = vpop.permute.xlu0 %2553
        %2555 = vrot.lane.b32.xlu0 %v2550, 127
        %v2556 = vpop.permute.xlu0 %2555
        %v2559 = vadd.f32 %v2519, %v2554
        %v2560 = vadd.f32 %v2520, %v2556
        %s2561 = sld [smem:[#allocation11 + $0x4c]]
        %v2562 = vstv %s2561
        %v2563 = vmul.f32 %v2562, %v2507
        %v2564 = vmul.f32 %v2562, %v2508
        %2567 = vrot.lane.b32.xlu0 %v2563, 127
        %v2568 = vpop.permute.xlu0 %2567
        %2569 = vrot.lane.b32.xlu0 %v2564, 127
        %v2570 = vpop.permute.xlu0 %2569
        %v2573 = vadd.f32 %v2525, %v2568
        %v2574 = vadd.f32 %v2526, %v2570
        %s2575 = sld [smem:[#allocation11 + $0x70]]
        %v2576 = vstv %s2575
        %v2577 = vmul.f32 %v2576, %v2507
        %v2578 = vmul.f32 %v2576, %v2508
        %2581 = vrot.lane.b32.xlu0 %v2577, 127
        %v2582 = vpop.permute.xlu0 %2581
        %2583 = vrot.lane.b32.xlu0 %v2578, 127
        %v2584 = vpop.permute.xlu0 %2583
        %v2587 = vadd.f32 %v2531, %v2582
        %v2588 = vadd.f32 %v2532, %v2584
        %s2589 = sld [smem:[#allocation11 + $0x5]]
        %v2590 = vstv %s2589
        %v2591 = vmul.f32 %v2590, %v2507
        %v2592 = vmul.f32 %v2590, %v2508
        %2595 = vrot.lane.b32.xlu0 %v2591, 126
        %v2596 = vpop.permute.xlu0 %2595
        %2597 = vrot.lane.b32.xlu0 %v2592, 126
        %v2598 = vpop.permute.xlu0 %2597
        %v2601 = vadd.f32 %v2545, %v2596
        %v2602 = vadd.f32 %v2546, %v2598
        %s2603 = sld [smem:[#allocation11 + $0x29]]
        %v2604 = vstv %s2603
        %v2605 = vmul.f32 %v2604, %v2507
        %v2606 = vmul.f32 %v2604, %v2508
        %2609 = vrot.lane.b32.xlu0 %v2605, 126
        %v2610 = vpop.permute.xlu0 %2609
        %2611 = vrot.lane.b32.xlu0 %v2606, 126
        %v2612 = vpop.permute.xlu0 %2611
        %v2615 = vadd.f32 %v2559, %v2610
        %v2616 = vadd.f32 %v2560, %v2612
        %s2617 = sld [smem:[#allocation11 + $0x4d]]
        %v2618 = vstv %s2617
        %v2619 = vmul.f32 %v2618, %v2507
        %v2620 = vmul.f32 %v2618, %v2508
        %2623 = vrot.lane.b32.xlu0 %v2619, 126
        %v2624 = vpop.permute.xlu0 %2623
        %2625 = vrot.lane.b32.xlu0 %v2620, 126
        %v2626 = vpop.permute.xlu0 %2625
        %v2629 = vadd.f32 %v2573, %v2624
        %v2630 = vadd.f32 %v2574, %v2626
        %s2631 = sld [smem:[#allocation11 + $0x71]]
        %v2632 = vstv %s2631
        %v2633 = vmul.f32 %v2632, %v2507
        %v2634 = vmul.f32 %v2632, %v2508
        %2637 = vrot.lane.b32.xlu0 %v2633, 126
        %v2638 = vpop.permute.xlu0 %2637
        %2639 = vrot.lane.b32.xlu0 %v2634, 126
        %v2640 = vpop.permute.xlu0 %2639
        %v2643 = vadd.f32 %v2587, %v2638
        %v2644 = vadd.f32 %v2588, %v2640
        %v2645 = vld [vmem:[#allocation3 + $0x2] sm:$0xff]
        %v2646 = vld [vmem:[#allocation3 + $0xa] sm:$0xff]
        %s2647 = sld [smem:[#allocation11 + $0x6]]
        %v2648 = vstv %s2647
        %v2649 = vmul.f32 %v2648, %v2645
        %v2650 = vmul.f32 %v2648, %v2646
        %v2651 = vadd.f32 %v2601, %v2649
        %v2652 = vadd.f32 %v2602, %v2650
        %s2653 = sld [smem:[#allocation11 + $0x2a]]
        %v2654 = vstv %s2653
        %v2655 = vmul.f32 %v2654, %v2645
        %v2656 = vmul.f32 %v2654, %v2646
        %v2657 = vadd.f32 %v2615, %v2655
        %v2658 = vadd.f32 %v2616, %v2656
        %s2659 = sld [smem:[#allocation11 + $0x4e]]
        %v2660 = vstv %s2659
        %v2661 = vmul.f32 %v2660, %v2645
        %v2662 = vmul.f32 %v2660, %v2646
        %v2663 = vadd.f32 %v2629, %v2661
        %v2664 = vadd.f32 %v2630, %v2662
        %s2665 = sld [smem:[#allocation11 + $0x72]]
        %v2666 = vstv %s2665
        %v2667 = vmul.f32 %v2666, %v2645
        %v2668 = vmul.f32 %v2666, %v2646
        %v2669 = vadd.f32 %v2643, %v2667
        %v2670 = vadd.f32 %v2644, %v2668
        %s2671 = sld [smem:[#allocation11 + $0x7]]
        %v2672 = vstv %s2671
        %v2673 = vmul.f32 %v2672, %v2645
        %v2674 = vmul.f32 %v2672, %v2646
        %2677 = vrot.lane.b32.xlu0 %v2673, 127
        %v2678 = vpop.permute.xlu0 %2677
        %2679 = vrot.lane.b32.xlu0 %v2674, 127
        %v2680 = vpop.permute.xlu0 %2679
        %v2683 = vadd.f32 %v2651, %v2678
        %v2684 = vadd.f32 %v2652, %v2680
        %s2685 = sld [smem:[#allocation11 + $0x2b]]
        %v2686 = vstv %s2685
        %v2687 = vmul.f32 %v2686, %v2645
        %v2688 = vmul.f32 %v2686, %v2646
        %2691 = vrot.lane.b32.xlu0 %v2687, 127
        %v2692 = vpop.permute.xlu0 %2691
        %2693 = vrot.lane.b32.xlu0 %v2688, 127
        %v2694 = vpop.permute.xlu0 %2693
        %v2697 = vadd.f32 %v2657, %v2692
        %v2698 = vadd.f32 %v2658, %v2694
        %s2699 = sld [smem:[#allocation11 + $0x4f]]
        %v2700 = vstv %s2699
        %v2701 = vmul.f32 %v2700, %v2645
        %v2702 = vmul.f32 %v2700, %v2646
        %2705 = vrot.lane.b32.xlu0 %v2701, 127
        %v2706 = vpop.permute.xlu0 %2705
        %2707 = vrot.lane.b32.xlu0 %v2702, 127
        %v2708 = vpop.permute.xlu0 %2707
        %v2711 = vadd.f32 %v2663, %v2706
        %v2712 = vadd.f32 %v2664, %v2708
        %s2713 = sld [smem:[#allocation11 + $0x73]]
        %v2714 = vstv %s2713
        %v2715 = vmul.f32 %v2714, %v2645
        %v2716 = vmul.f32 %v2714, %v2646
        %2719 = vrot.lane.b32.xlu0 %v2715, 127
        %v2720 = vpop.permute.xlu0 %2719
        %2721 = vrot.lane.b32.xlu0 %v2716, 127
        %v2722 = vpop.permute.xlu0 %2721
        %v2725 = vadd.f32 %v2669, %v2720
        %v2726 = vadd.f32 %v2670, %v2722
        %s2727 = sld [smem:[#allocation11 + $0x8]]
        %v2728 = vstv %s2727
        %v2729 = vmul.f32 %v2728, %v2645
        %v2730 = vmul.f32 %v2728, %v2646
        %2733 = vrot.lane.b32.xlu0 %v2729, 126
        %v2734 = vpop.permute.xlu0 %2733
        %2735 = vrot.lane.b32.xlu0 %v2730, 126
        %v2736 = vpop.permute.xlu0 %2735
        %v2739 = vadd.f32 %v2683, %v2734
        %v2740 = vadd.f32 %v2684, %v2736
        %s2741 = sld [smem:[#allocation11 + $0x2c]]
        %v2742 = vstv %s2741
        %v2743 = vmul.f32 %v2742, %v2645
        %v2744 = vmul.f32 %v2742, %v2646
        %2747 = vrot.lane.b32.xlu0 %v2743, 126
        %v2748 = vpop.permute.xlu0 %2747
        %2749 = vrot.lane.b32.xlu0 %v2744, 126
        %v2750 = vpop.permute.xlu0 %2749
        %v2753 = vadd.f32 %v2697, %v2748
        %v2754 = vadd.f32 %v2698, %v2750
        %s2755 = sld [smem:[#allocation11 + $0x50]]
        %v2756 = vstv %s2755
        %v2757 = vmul.f32 %v2756, %v2645
        %v2758 = vmul.f32 %v2756, %v2646
        %2761 = vrot.lane.b32.xlu0 %v2757, 126
        %v2762 = vpop.permute.xlu0 %2761
        %2763 = vrot.lane.b32.xlu0 %v2758, 126
        %v2764 = vpop.permute.xlu0 %2763
        %v2767 = vadd.f32 %v2711, %v2762
        %v2768 = vadd.f32 %v2712, %v2764
        %s2769 = sld [smem:[#allocation11 + $0x74]]
        %v2770 = vstv %s2769
        %v2771 = vmul.f32 %v2770, %v2645
        %v2772 = vmul.f32 %v2770, %v2646
        %2775 = vrot.lane.b32.xlu0 %v2771, 126
        %v2776 = vpop.permute.xlu0 %2775
        %2777 = vrot.lane.b32.xlu0 %v2772, 126
        %v2778 = vpop.permute.xlu0 %2777
        %v2781 = vadd.f32 %v2725, %v2776
        %v2782 = vadd.f32 %v2726, %v2778
        %v2783 = vld [vmem:[%s584] sm:$0xff]
        %v2784 = vld [vmem:[%s584 + $0x8] sm:$0xff]
        %s2785 = sld [smem:[#allocation11 + $0x9]]
        %v2786 = vstv %s2785
        %v2787 = vmul.f32 %v2786, %v2783
        %v2788 = vmul.f32 %v2786, %v2784
        %v2789 = vadd.f32 %v2739, %v2787
        %v2790 = vadd.f32 %v2740, %v2788
        %s2791 = sld [smem:[#allocation11 + $0x2d]]
        %v2792 = vstv %s2791
        %v2793 = vmul.f32 %v2792, %v2783
        %v2794 = vmul.f32 %v2792, %v2784
        %v2795 = vadd.f32 %v2753, %v2793
        %v2796 = vadd.f32 %v2754, %v2794
        %s2797 = sld [smem:[#allocation11 + $0x51]]
        %v2798 = vstv %s2797
        %v2799 = vmul.f32 %v2798, %v2783
        %v2800 = vmul.f32 %v2798, %v2784
        %v2801 = vadd.f32 %v2767, %v2799
        %v2802 = vadd.f32 %v2768, %v2800
        %s2803 = sld [smem:[#allocation11 + $0x75]]
        %v2804 = vstv %s2803
        %v2805 = vmul.f32 %v2804, %v2783
        %v2806 = vmul.f32 %v2804, %v2784
        %v2807 = vadd.f32 %v2781, %v2805
        %v2808 = vadd.f32 %v2782, %v2806
        %s2809 = sld [smem:[#allocation11 + $0xa]]
        %v2810 = vstv %s2809
        %v2811 = vmul.f32 %v2810, %v2783
        %v2812 = vmul.f32 %v2810, %v2784
        %2815 = vrot.lane.b32.xlu0 %v2811, 127
        %v2816 = vpop.permute.xlu0 %2815
        %2817 = vrot.lane.b32.xlu0 %v2812, 127
        %v2818 = vpop.permute.xlu0 %2817
        %v2821 = vadd.f32 %v2789, %v2816
        %v2822 = vadd.f32 %v2790, %v2818
        %s2823 = sld [smem:[#allocation11 + $0x2e]]
        %v2824 = vstv %s2823
        %v2825 = vmul.f32 %v2824, %v2783
        %v2826 = vmul.f32 %v2824, %v2784
        %2829 = vrot.lane.b32.xlu0 %v2825, 127
        %v2830 = vpop.permute.xlu0 %2829
        %2831 = vrot.lane.b32.xlu0 %v2826, 127
        %v2832 = vpop.permute.xlu0 %2831
        %v2835 = vadd.f32 %v2795, %v2830
        %v2836 = vadd.f32 %v2796, %v2832
        %s2837 = sld [smem:[#allocation11 + $0x52]]
        %v2838 = vstv %s2837
        %v2839 = vmul.f32 %v2838, %v2783
        %v2840 = vmul.f32 %v2838, %v2784
        %2843 = vrot.lane.b32.xlu0 %v2839, 127
        %v2844 = vpop.permute.xlu0 %2843
        %2845 = vrot.lane.b32.xlu0 %v2840, 127
        %v2846 = vpop.permute.xlu0 %2845
        %v2849 = vadd.f32 %v2801, %v2844
        %v2850 = vadd.f32 %v2802, %v2846
        %s2851 = sld [smem:[#allocation11 + $0x76]]
        %v2852 = vstv %s2851
        %v2853 = vmul.f32 %v2852, %v2783
        %v2854 = vmul.f32 %v2852, %v2784
        %2857 = vrot.lane.b32.xlu0 %v2853, 127
        %v2858 = vpop.permute.xlu0 %2857
        %2859 = vrot.lane.b32.xlu0 %v2854, 127
        %v2860 = vpop.permute.xlu0 %2859
        %v2863 = vadd.f32 %v2807, %v2858
        %v2864 = vadd.f32 %v2808, %v2860
        %s2865 = sld [smem:[#allocation11 + $0xb]]
        %v2866 = vstv %s2865
        %v2867 = vmul.f32 %v2866, %v2783
        %v2868 = vmul.f32 %v2866, %v2784
        %2871 = vrot.lane.b32.xlu0 %v2867, 126
        %v2872 = vpop.permute.xlu0 %2871
        %2873 = vrot.lane.b32.xlu0 %v2868, 126
        %v2874 = vpop.permute.xlu0 %2873
        %v2877 = vadd.f32 %v2821, %v2872
        %v2878 = vadd.f32 %v2822, %v2874
        %s2879 = sld [smem:[#allocation11 + $0x2f]]
        %v2880 = vstv %s2879
        %v2881 = vmul.f32 %v2880, %v2783
        %v2882 = vmul.f32 %v2880, %v2784
        %2885 = vrot.lane.b32.xlu0 %v2881, 126
        %v2886 = vpop.permute.xlu0 %2885
        %2887 = vrot.lane.b32.xlu0 %v2882, 126
        %v2888 = vpop.permute.xlu0 %2887
        %v2891 = vadd.f32 %v2835, %v2886
        %v2892 = vadd.f32 %v2836, %v2888
        %s2893 = sld [smem:[#allocation11 + $0x53]]
        %v2894 = vstv %s2893
        %v2895 = vmul.f32 %v2894, %v2783
        %v2896 = vmul.f32 %v2894, %v2784
        %2899 = vrot.lane.b32.xlu0 %v2895, 126
        %v2900 = vpop.permute.xlu0 %2899
        %2901 = vrot.lane.b32.xlu0 %v2896, 126
        %v2902 = vpop.permute.xlu0 %2901
        %v2905 = vadd.f32 %v2849, %v2900
        %v2906 = vadd.f32 %v2850, %v2902
        %s2907 = sld [smem:[#allocation11 + $0x77]]
        %v2908 = vstv %s2907
        %v2909 = vmul.f32 %v2908, %v2783
        %v2910 = vmul.f32 %v2908, %v2784
        %2913 = vrot.lane.b32.xlu0 %v2909, 126
        %v2914 = vpop.permute.xlu0 %2913
        %2915 = vrot.lane.b32.xlu0 %v2910, 126
        %v2916 = vpop.permute.xlu0 %2915
        %v2919 = vadd.f32 %v2863, %v2914
        %v2920 = vadd.f32 %v2864, %v2916
        %v2921 = vld [vmem:[%s584 + $0x1] sm:$0xff]
        %v2922 = vld [vmem:[%s584 + $0x9] sm:$0xff]
        %s2923 = sld [smem:[#allocation11 + $0xc]]
        %v2924 = vstv %s2923
        %v2925 = vmul.f32 %v2924, %v2921
        %v2926 = vmul.f32 %v2924, %v2922
        %v2927 = vadd.f32 %v2877, %v2925
        %v2928 = vadd.f32 %v2878, %v2926
        %s2929 = sld [smem:[#allocation11 + $0x30]]
        %v2930 = vstv %s2929
        %v2931 = vmul.f32 %v2930, %v2921
        %v2932 = vmul.f32 %v2930, %v2922
        %v2933 = vadd.f32 %v2891, %v2931
        %v2934 = vadd.f32 %v2892, %v2932
        %s2935 = sld [smem:[#allocation11 + $0x54]]
        %v2936 = vstv %s2935
        %v2937 = vmul.f32 %v2936, %v2921
        %v2938 = vmul.f32 %v2936, %v2922
        %v2939 = vadd.f32 %v2905, %v2937
        %v2940 = vadd.f32 %v2906, %v2938
        %s2941 = sld [smem:[#allocation11 + $0x78]]
        %v2942 = vstv %s2941
        %v2943 = vmul.f32 %v2942, %v2921
        %v2944 = vmul.f32 %v2942, %v2922
        %v2945 = vadd.f32 %v2919, %v2943
        %v2946 = vadd.f32 %v2920, %v2944
        %s2947 = sld [smem:[#allocation11 + $0xd]]
        %v2948 = vstv %s2947
        %v2949 = vmul.f32 %v2948, %v2921
        %v2950 = vmul.f32 %v2948, %v2922
        %2953 = vrot.lane.b32.xlu0 %v2949, 127
        %v2954 = vpop.permute.xlu0 %2953
        %2955 = vrot.lane.b32.xlu0 %v2950, 127
        %v2956 = vpop.permute.xlu0 %2955
        %v2959 = vadd.f32 %v2927, %v2954
        %v2960 = vadd.f32 %v2928, %v2956
        %s2961 = sld [smem:[#allocation11 + $0x31]]
        %v2962 = vstv %s2961
        %v2963 = vmul.f32 %v2962, %v2921
        %v2964 = vmul.f32 %v2962, %v2922
        %2967 = vrot.lane.b32.xlu0 %v2963, 127
        %v2968 = vpop.permute.xlu0 %2967
        %2969 = vrot.lane.b32.xlu0 %v2964, 127
        %v2970 = vpop.permute.xlu0 %2969
        %v2973 = vadd.f32 %v2933, %v2968
        %v2974 = vadd.f32 %v2934, %v2970
        %s2975 = sld [smem:[#allocation11 + $0x55]]
        %v2976 = vstv %s2975
        %v2977 = vmul.f32 %v2976, %v2921
        %v2978 = vmul.f32 %v2976, %v2922
        %2981 = vrot.lane.b32.xlu0 %v2977, 127
        %v2982 = vpop.permute.xlu0 %2981
        %2983 = vrot.lane.b32.xlu0 %v2978, 127
        %v2984 = vpop.permute.xlu0 %2983
        %v2987 = vadd.f32 %v2939, %v2982
        %v2988 = vadd.f32 %v2940, %v2984
        %s2989 = sld [smem:[#allocation11 + $0x79]]
        %v2990 = vstv %s2989
        %v2991 = vmul.f32 %v2990, %v2921
        %v2992 = vmul.f32 %v2990, %v2922
        %2995 = vrot.lane.b32.xlu0 %v2991, 127
        %v2996 = vpop.permute.xlu0 %2995
        %2997 = vrot.lane.b32.xlu0 %v2992, 127
        %v2998 = vpop.permute.xlu0 %2997
        %v3001 = vadd.f32 %v2945, %v2996
        %v3002 = vadd.f32 %v2946, %v2998
        %s3003 = sld [smem:[#allocation11 + $0xe]]
        %v3004 = vstv %s3003
        %v3005 = vmul.f32 %v3004, %v2921
        %v3006 = vmul.f32 %v3004, %v2922
        %3009 = vrot.lane.b32.xlu0 %v3005, 126
        %v3010 = vpop.permute.xlu0 %3009
        %3011 = vrot.lane.b32.xlu0 %v3006, 126
        %v3012 = vpop.permute.xlu0 %3011
        %v3015 = vadd.f32 %v2959, %v3010
        %v3016 = vadd.f32 %v2960, %v3012
        %s3017 = sld [smem:[#allocation11 + $0x32]]
        %v3018 = vstv %s3017
        %v3019 = vmul.f32 %v3018, %v2921
        %v3020 = vmul.f32 %v3018, %v2922
        %3023 = vrot.lane.b32.xlu0 %v3019, 126
        %v3024 = vpop.permute.xlu0 %3023
        %3025 = vrot.lane.b32.xlu0 %v3020, 126
        %v3026 = vpop.permute.xlu0 %3025
        %v3029 = vadd.f32 %v2973, %v3024
        %v3030 = vadd.f32 %v2974, %v3026
        %s3031 = sld [smem:[#allocation11 + $0x56]]
        %v3032 = vstv %s3031
        %v3033 = vmul.f32 %v3032, %v2921
        %v3034 = vmul.f32 %v3032, %v2922
        %3037 = vrot.lane.b32.xlu0 %v3033, 126
        %v3038 = vpop.permute.xlu0 %3037
        %3039 = vrot.lane.b32.xlu0 %v3034, 126
        %v3040 = vpop.permute.xlu0 %3039
        %v3043 = vadd.f32 %v2987, %v3038
        %v3044 = vadd.f32 %v2988, %v3040
        %s3045 = sld [smem:[#allocation11 + $0x7a]]
        %v3046 = vstv %s3045
        %v3047 = vmul.f32 %v3046, %v2921
        %v3048 = vmul.f32 %v3046, %v2922
        %3051 = vrot.lane.b32.xlu0 %v3047, 126
        %v3052 = vpop.permute.xlu0 %3051
        %3053 = vrot.lane.b32.xlu0 %v3048, 126
        %v3054 = vpop.permute.xlu0 %3053
        %v3057 = vadd.f32 %v3001, %v3052
        %v3058 = vadd.f32 %v3002, %v3054
        %v3059 = vld [vmem:[%s584 + $0x2] sm:$0xff]
        %v3060 = vld [vmem:[%s584 + $0xa] sm:$0xff]
        %s3061 = sld [smem:[#allocation11 + $0xf]]
        %v3062 = vstv %s3061
        %v3063 = vmul.f32 %v3062, %v3059
        %v3064 = vmul.f32 %v3062, %v3060
        %v3065 = vadd.f32 %v3015, %v3063
        %v3066 = vadd.f32 %v3016, %v3064
        %s3067 = sld [smem:[#allocation11 + $0x33]]
        %v3068 = vstv %s3067
        %v3069 = vmul.f32 %v3068, %v3059
        %v3070 = vmul.f32 %v3068, %v3060
        %v3071 = vadd.f32 %v3029, %v3069
        %v3072 = vadd.f32 %v3030, %v3070
        %s3073 = sld [smem:[#allocation11 + $0x57]]
        %v3074 = vstv %s3073
        %v3075 = vmul.f32 %v3074, %v3059
        %v3076 = vmul.f32 %v3074, %v3060
        %v3077 = vadd.f32 %v3043, %v3075
        %v3078 = vadd.f32 %v3044, %v3076
        %s3079 = sld [smem:[#allocation11 + $0x7b]]
        %v3080 = vstv %s3079
        %v3081 = vmul.f32 %v3080, %v3059
        %v3082 = vmul.f32 %v3080, %v3060
        %v3083 = vadd.f32 %v3057, %v3081
        %v3084 = vadd.f32 %v3058, %v3082
        %s3085 = sld [smem:[#allocation11 + $0x10]]
        %v3086 = vstv %s3085
        %v3087 = vmul.f32 %v3086, %v3059
        %v3088 = vmul.f32 %v3086, %v3060
        %3091 = vrot.lane.b32.xlu0 %v3087, 127
        %v3092 = vpop.permute.xlu0 %3091
        %3093 = vrot.lane.b32.xlu0 %v3088, 127
        %v3094 = vpop.permute.xlu0 %3093
        %v3097 = vadd.f32 %v3065, %v3092
        %v3098 = vadd.f32 %v3066, %v3094
        %s3099 = sld [smem:[#allocation11 + $0x34]]
        %v3100 = vstv %s3099
        %v3101 = vmul.f32 %v3100, %v3059
        %v3102 = vmul.f32 %v3100, %v3060
        %3105 = vrot.lane.b32.xlu0 %v3101, 127
        %v3106 = vpop.permute.xlu0 %3105
        %3107 = vrot.lane.b32.xlu0 %v3102, 127
        %v3108 = vpop.permute.xlu0 %3107
        %v3111 = vadd.f32 %v3071, %v3106
        %v3112 = vadd.f32 %v3072, %v3108
        %s3113 = sld [smem:[#allocation11 + $0x58]]
        %v3114 = vstv %s3113
        %v3115 = vmul.f32 %v3114, %v3059
        %v3116 = vmul.f32 %v3114, %v3060
        %3119 = vrot.lane.b32.xlu0 %v3115, 127
        %v3120 = vpop.permute.xlu0 %3119
        %3121 = vrot.lane.b32.xlu0 %v3116, 127
        %v3122 = vpop.permute.xlu0 %3121
        %v3125 = vadd.f32 %v3077, %v3120
        %v3126 = vadd.f32 %v3078, %v3122
        %s3127 = sld [smem:[#allocation11 + $0x7c]]
        %v3128 = vstv %s3127
        %v3129 = vmul.f32 %v3128, %v3059
        %v3130 = vmul.f32 %v3128, %v3060
        %3133 = vrot.lane.b32.xlu0 %v3129, 127
        %v3134 = vpop.permute.xlu0 %3133
        %3135 = vrot.lane.b32.xlu0 %v3130, 127
        %v3136 = vpop.permute.xlu0 %3135
        %v3139 = vadd.f32 %v3083, %v3134
        %v3140 = vadd.f32 %v3084, %v3136
        %s3141 = sld [smem:[#allocation11 + $0x11]]
        %v3142 = vstv %s3141
        %v3143 = vmul.f32 %v3142, %v3059
        %v3144 = vmul.f32 %v3142, %v3060
        %3147 = vrot.lane.b32.xlu0 %v3143, 126
        %v3148 = vpop.permute.xlu0 %3147
        %3149 = vrot.lane.b32.xlu0 %v3144, 126
        %v3150 = vpop.permute.xlu0 %3149
        %v3153 = vadd.f32 %v3097, %v3148
        %v3154 = vadd.f32 %v3098, %v3150
        %s3155 = sld [smem:[#allocation11 + $0x35]]
        %v3156 = vstv %s3155
        %v3157 = vmul.f32 %v3156, %v3059
        %v3158 = vmul.f32 %v3156, %v3060
        %3161 = vrot.lane.b32.xlu0 %v3157, 126
        %v3162 = vpop.permute.xlu0 %3161
        %3163 = vrot.lane.b32.xlu0 %v3158, 126
        %v3164 = vpop.permute.xlu0 %3163
        %v3167 = vadd.f32 %v3111, %v3162
        %v3168 = vadd.f32 %v3112, %v3164
        %s3169 = sld [smem:[#allocation11 + $0x59]]
        %v3170 = vstv %s3169
        %v3171 = vmul.f32 %v3170, %v3059
        %v3172 = vmul.f32 %v3170, %v3060
        %3175 = vrot.lane.b32.xlu0 %v3171, 126
        %v3176 = vpop.permute.xlu0 %3175
        %3177 = vrot.lane.b32.xlu0 %v3172, 126
        %v3178 = vpop.permute.xlu0 %3177
        %v3181 = vadd.f32 %v3125, %v3176
        %v3182 = vadd.f32 %v3126, %v3178
        %s3183 = sld [smem:[#allocation11 + $0x7d]]
        %v3184 = vstv %s3183
        %v3185 = vmul.f32 %v3184, %v3059
        %v3186 = vmul.f32 %v3184, %v3060
        %3189 = vrot.lane.b32.xlu0 %v3185, 126
        %v3190 = vpop.permute.xlu0 %3189
        %3191 = vrot.lane.b32.xlu0 %v3186, 126
        %v3192 = vpop.permute.xlu0 %3191
        %v3195 = vadd.f32 %v3139, %v3190
        %v3196 = vadd.f32 %v3140, %v3192
        %v3197 = vld [vmem:[%s643] sm:$0xff]
        %v3198 = vld [vmem:[%s643 + $0x8] sm:$0xff]
        %s3199 = sld [smem:[#allocation11 + $0x12]]
        %v3200 = vstv %s3199
        %v3201 = vmul.f32 %v3200, %v3197
        %v3202 = vmul.f32 %v3200, %v3198
        %v3203 = vadd.f32 %v3153, %v3201
        %v3204 = vadd.f32 %v3154, %v3202
        %s3205 = sld [smem:[#allocation11 + $0x36]]
        %v3206 = vstv %s3205
        %v3207 = vmul.f32 %v3206, %v3197
        %v3208 = vmul.f32 %v3206, %v3198
        %v3209 = vadd.f32 %v3167, %v3207
        %v3210 = vadd.f32 %v3168, %v3208
        %s3211 = sld [smem:[#allocation11 + $0x5a]]
        %v3212 = vstv %s3211
        %v3213 = vmul.f32 %v3212, %v3197
        %v3214 = vmul.f32 %v3212, %v3198
        %v3215 = vadd.f32 %v3181, %v3213
        %v3216 = vadd.f32 %v3182, %v3214
        %s3217 = sld [smem:[#allocation11 + $0x7e]]
        %v3218 = vstv %s3217
        %v3219 = vmul.f32 %v3218, %v3197
        %v3220 = vmul.f32 %v3218, %v3198
        %v3221 = vadd.f32 %v3195, %v3219
        %v3222 = vadd.f32 %v3196, %v3220
        %s3223 = sld [smem:[#allocation11 + $0x13]]
        %v3224 = vstv %s3223
        %v3225 = vmul.f32 %v3224, %v3197
        %v3226 = vmul.f32 %v3224, %v3198
        %3229 = vrot.lane.b32.xlu0 %v3225, 127
        %v3230 = vpop.permute.xlu0 %3229
        %3231 = vrot.lane.b32.xlu0 %v3226, 127
        %v3232 = vpop.permute.xlu0 %3231
        %v3235 = vadd.f32 %v3203, %v3230
        %v3236 = vadd.f32 %v3204, %v3232
        %s3237 = sld [smem:[#allocation11 + $0x37]]
        %v3238 = vstv %s3237
        %v3239 = vmul.f32 %v3238, %v3197
        %v3240 = vmul.f32 %v3238, %v3198
        %3243 = vrot.lane.b32.xlu0 %v3239, 127
        %v3244 = vpop.permute.xlu0 %3243
        %3245 = vrot.lane.b32.xlu0 %v3240, 127
        %v3246 = vpop.permute.xlu0 %3245
        %v3249 = vadd.f32 %v3209, %v3244
        %v3250 = vadd.f32 %v3210, %v3246
        %s3251 = sld [smem:[#allocation11 + $0x5b]]
        %v3252 = vstv %s3251
        %v3253 = vmul.f32 %v3252, %v3197
        %v3254 = vmul.f32 %v3252, %v3198
        %3257 = vrot.lane.b32.xlu0 %v3253, 127
        %v3258 = vpop.permute.xlu0 %3257
        %3259 = vrot.lane.b32.xlu0 %v3254, 127
        %v3260 = vpop.permute.xlu0 %3259
        %v3263 = vadd.f32 %v3215, %v3258
        %v3264 = vadd.f32 %v3216, %v3260
        %s3265 = sld [smem:[#allocation11 + $0x7f]]
        %v3266 = vstv %s3265
        %v3267 = vmul.f32 %v3266, %v3197
        %v3268 = vmul.f32 %v3266, %v3198
        %3271 = vrot.lane.b32.xlu0 %v3267, 127
        %v3272 = vpop.permute.xlu0 %3271
        %3273 = vrot.lane.b32.xlu0 %v3268, 127
        %v3274 = vpop.permute.xlu0 %3273
        %v3277 = vadd.f32 %v3221, %v3272
        %v3278 = vadd.f32 %v3222, %v3274
        %s3279 = sld [smem:[#allocation11 + $0x14]]
        %v3280 = vstv %s3279
        %v3281 = vmul.f32 %v3280, %v3197
        %v3282 = vmul.f32 %v3280, %v3198
        %3285 = vrot.lane.b32.xlu0 %v3281, 126
        %v3286 = vpop.permute.xlu0 %3285
        %3287 = vrot.lane.b32.xlu0 %v3282, 126
        %v3288 = vpop.permute.xlu0 %3287
        %v3291 = vadd.f32 %v3235, %v3286
        %v3292 = vadd.f32 %v3236, %v3288
        %s3293 = sld [smem:[#allocation11 + $0x38]]
        %v3294 = vstv %s3293
        %v3295 = vmul.f32 %v3294, %v3197
        %v3296 = vmul.f32 %v3294, %v3198
        %3299 = vrot.lane.b32.xlu0 %v3295, 126
        %v3300 = vpop.permute.xlu0 %3299
        %3301 = vrot.lane.b32.xlu0 %v3296, 126
        %v3302 = vpop.permute.xlu0 %3301
        %v3305 = vadd.f32 %v3249, %v3300
        %v3306 = vadd.f32 %v3250, %v3302
        %s3307 = sld [smem:[#allocation11 + $0x5c]]
        %v3308 = vstv %s3307
        %v3309 = vmul.f32 %v3308, %v3197
        %v3310 = vmul.f32 %v3308, %v3198
        %3313 = vrot.lane.b32.xlu0 %v3309, 126
        %v3314 = vpop.permute.xlu0 %3313
        %3315 = vrot.lane.b32.xlu0 %v3310, 126
        %v3316 = vpop.permute.xlu0 %3315
        %v3319 = vadd.f32 %v3263, %v3314
        %v3320 = vadd.f32 %v3264, %v3316
        %s3321 = sld [smem:[#allocation11 + $0x80]]
        %v3322 = vstv %s3321
        %v3323 = vmul.f32 %v3322, %v3197
        %v3324 = vmul.f32 %v3322, %v3198
        %3327 = vrot.lane.b32.xlu0 %v3323, 126
        %v3328 = vpop.permute.xlu0 %3327
        %3329 = vrot.lane.b32.xlu0 %v3324, 126
        %v3330 = vpop.permute.xlu0 %3329
        %v3333 = vadd.f32 %v3277, %v3328
        %v3334 = vadd.f32 %v3278, %v3330
        %v3335 = vld [vmem:[%s643 + $0x1] sm:$0xff]
        %v3336 = vld [vmem:[%s643 + $0x9] sm:$0xff]
        %s3337 = sld [smem:[#allocation11 + $0x15]]
        %v3338 = vstv %s3337
        %v3339 = vmul.f32 %v3338, %v3335
        %v3340 = vmul.f32 %v3338, %v3336
        %v3341 = vadd.f32 %v3291, %v3339
        %v3342 = vadd.f32 %v3292, %v3340
        %s3343 = sld [smem:[#allocation11 + $0x39]]
        %v3344 = vstv %s3343
        %v3345 = vmul.f32 %v3344, %v3335
        %v3346 = vmul.f32 %v3344, %v3336
        %v3347 = vadd.f32 %v3305, %v3345
        %v3348 = vadd.f32 %v3306, %v3346
        %s3349 = sld [smem:[#allocation11 + $0x5d]]
        %v3350 = vstv %s3349
        %v3351 = vmul.f32 %v3350, %v3335
        %v3352 = vmul.f32 %v3350, %v3336
        %v3353 = vadd.f32 %v3319, %v3351
        %v3354 = vadd.f32 %v3320, %v3352
        %s3355 = sld [smem:[#allocation11 + $0x81]]
        %v3356 = vstv %s3355
        %v3357 = vmul.f32 %v3356, %v3335
        %v3358 = vmul.f32 %v3356, %v3336
        %v3359 = vadd.f32 %v3333, %v3357
        %v3360 = vadd.f32 %v3334, %v3358
        %s3361 = sld [smem:[#allocation11 + $0x16]]
        %v3362 = vstv %s3361
        %v3363 = vmul.f32 %v3362, %v3335
        %v3364 = vmul.f32 %v3362, %v3336
        %3367 = vrot.lane.b32.xlu0 %v3363, 127
        %v3368 = vpop.permute.xlu0 %3367
        %3369 = vrot.lane.b32.xlu0 %v3364, 127
        %v3370 = vpop.permute.xlu0 %3369
        %v3373 = vadd.f32 %v3341, %v3368
        %v3374 = vadd.f32 %v3342, %v3370
        %s3375 = sld [smem:[#allocation11 + $0x3a]]
        %v3376 = vstv %s3375
        %v3377 = vmul.f32 %v3376, %v3335
        %v3378 = vmul.f32 %v3376, %v3336
        %3381 = vrot.lane.b32.xlu0 %v3377, 127
        %v3382 = vpop.permute.xlu0 %3381
        %3383 = vrot.lane.b32.xlu0 %v3378, 127
        %v3384 = vpop.permute.xlu0 %3383
        %v3387 = vadd.f32 %v3347, %v3382
        %v3388 = vadd.f32 %v3348, %v3384
        %s3389 = sld [smem:[#allocation11 + $0x5e]]
        %v3390 = vstv %s3389
        %v3391 = vmul.f32 %v3390, %v3335
        %v3392 = vmul.f32 %v3390, %v3336
        %3395 = vrot.lane.b32.xlu0 %v3391, 127
        %v3396 = vpop.permute.xlu0 %3395
        %3397 = vrot.lane.b32.xlu0 %v3392, 127
        %v3398 = vpop.permute.xlu0 %3397
        %v3401 = vadd.f32 %v3353, %v3396
        %v3402 = vadd.f32 %v3354, %v3398
        %s3403 = sld [smem:[#allocation11 + $0x82]]
        %v3404 = vstv %s3403
        %v3405 = vmul.f32 %v3404, %v3335
        %v3406 = vmul.f32 %v3404, %v3336
        %3409 = vrot.lane.b32.xlu0 %v3405, 127
        %v3410 = vpop.permute.xlu0 %3409
        %3411 = vrot.lane.b32.xlu0 %v3406, 127
        %v3412 = vpop.permute.xlu0 %3411
        %v3415 = vadd.f32 %v3359, %v3410
        %v3416 = vadd.f32 %v3360, %v3412
        %s3417 = sld [smem:[#allocation11 + $0x17]]
        %v3418 = vstv %s3417
        %v3419 = vmul.f32 %v3418, %v3335
        %v3420 = vmul.f32 %v3418, %v3336
        %3423 = vrot.lane.b32.xlu0 %v3419, 126
        %v3424 = vpop.permute.xlu0 %3423
        %3425 = vrot.lane.b32.xlu0 %v3420, 126
        %v3426 = vpop.permute.xlu0 %3425
        %v3429 = vadd.f32 %v3373, %v3424
        %v3430 = vadd.f32 %v3374, %v3426
        %s3431 = sld [smem:[#allocation11 + $0x3b]]
        %v3432 = vstv %s3431
        %v3433 = vmul.f32 %v3432, %v3335
        %v3434 = vmul.f32 %v3432, %v3336
        %3437 = vrot.lane.b32.xlu0 %v3433, 126
        %v3438 = vpop.permute.xlu0 %3437
        %3439 = vrot.lane.b32.xlu0 %v3434, 126
        %v3440 = vpop.permute.xlu0 %3439
        %v3443 = vadd.f32 %v3387, %v3438
        %v3444 = vadd.f32 %v3388, %v3440
        %s3445 = sld [smem:[#allocation11 + $0x5f]]
        %v3446 = vstv %s3445
        %v3447 = vmul.f32 %v3446, %v3335
        %v3448 = vmul.f32 %v3446, %v3336
        %3451 = vrot.lane.b32.xlu0 %v3447, 126
        %v3452 = vpop.permute.xlu0 %3451
        %3453 = vrot.lane.b32.xlu0 %v3448, 126
        %v3454 = vpop.permute.xlu0 %3453
        %v3457 = vadd.f32 %v3401, %v3452
        %v3458 = vadd.f32 %v3402, %v3454
        %s3459 = sld [smem:[#allocation11 + $0x83]]
        %v3460 = vstv %s3459
        %v3461 = vmul.f32 %v3460, %v3335
        %v3462 = vmul.f32 %v3460, %v3336
        %3465 = vrot.lane.b32.xlu0 %v3461, 126
        %v3466 = vpop.permute.xlu0 %3465
        %3467 = vrot.lane.b32.xlu0 %v3462, 126
        %v3468 = vpop.permute.xlu0 %3467
        %v3471 = vadd.f32 %v3415, %v3466
        %v3472 = vadd.f32 %v3416, %v3468
        %v3473 = vld [vmem:[%s643 + $0x2] sm:$0xff]
        %v3474 = vld [vmem:[%s643 + $0xa] sm:$0xff]
        %s3475 = sld [smem:[#allocation11 + $0x18]]
        %v3476 = vstv %s3475
        %v3477 = vmul.f32 %v3476, %v3473
        %v3478 = vmul.f32 %v3476, %v3474
        %v3479 = vadd.f32 %v3429, %v3477
        %v3480 = vadd.f32 %v3430, %v3478
        %s3481 = sld [smem:[#allocation11 + $0x3c]]
        %v3482 = vstv %s3481
        %v3483 = vmul.f32 %v3482, %v3473
        %v3484 = vmul.f32 %v3482, %v3474
        %v3485 = vadd.f32 %v3443, %v3483
        %v3486 = vadd.f32 %v3444, %v3484
        %s3487 = sld [smem:[#allocation11 + $0x60]]
        %v3488 = vstv %s3487
        %v3489 = vmul.f32 %v3488, %v3473
        %v3490 = vmul.f32 %v3488, %v3474
        %v3491 = vadd.f32 %v3457, %v3489
        %v3492 = vadd.f32 %v3458, %v3490
        %s3493 = sld [smem:[#allocation11 + $0x84]]
        %v3494 = vstv %s3493
        %v3495 = vmul.f32 %v3494, %v3473
        %v3496 = vmul.f32 %v3494, %v3474
        %v3497 = vadd.f32 %v3471, %v3495
        %v3498 = vadd.f32 %v3472, %v3496
        %s3499 = sld [smem:[#allocation11 + $0x19]]
        %v3500 = vstv %s3499
        %v3501 = vmul.f32 %v3500, %v3473
        %v3502 = vmul.f32 %v3500, %v3474
        %3505 = vrot.lane.b32.xlu0 %v3501, 127
        %v3506 = vpop.permute.xlu0 %3505
        %3507 = vrot.lane.b32.xlu0 %v3502, 127
        %v3508 = vpop.permute.xlu0 %3507
        %v3511 = vadd.f32 %v3479, %v3506
        %v3512 = vadd.f32 %v3480, %v3508
        %s3513 = sld [smem:[#allocation11 + $0x3d]]
        %v3514 = vstv %s3513
        %v3515 = vmul.f32 %v3514, %v3473
        %v3516 = vmul.f32 %v3514, %v3474
        %3519 = vrot.lane.b32.xlu0 %v3515, 127
        %v3520 = vpop.permute.xlu0 %3519
        %3521 = vrot.lane.b32.xlu0 %v3516, 127
        %v3522 = vpop.permute.xlu0 %3521
        %v3525 = vadd.f32 %v3485, %v3520
        %v3526 = vadd.f32 %v3486, %v3522
        %s3527 = sld [smem:[#allocation11 + $0x61]]
        %v3528 = vstv %s3527
        %v3529 = vmul.f32 %v3528, %v3473
        %v3530 = vmul.f32 %v3528, %v3474
        %3533 = vrot.lane.b32.xlu0 %v3529, 127
        %v3534 = vpop.permute.xlu0 %3533
        %3535 = vrot.lane.b32.xlu0 %v3530, 127
        %v3536 = vpop.permute.xlu0 %3535
        %v3539 = vadd.f32 %v3491, %v3534
        %v3540 = vadd.f32 %v3492, %v3536
        %s3541 = sld [smem:[#allocation11 + $0x85]]
        %v3542 = vstv %s3541
        %v3543 = vmul.f32 %v3542, %v3473
        %v3544 = vmul.f32 %v3542, %v3474
        %3547 = vrot.lane.b32.xlu0 %v3543, 127
        %v3548 = vpop.permute.xlu0 %3547
        %3549 = vrot.lane.b32.xlu0 %v3544, 127
        %v3550 = vpop.permute.xlu0 %3549
        %v3553 = vadd.f32 %v3497, %v3548
        %v3554 = vadd.f32 %v3498, %v3550
        %s3555 = sld [smem:[#allocation11 + $0x1a]]
        %v3556 = vstv %s3555
        %v3557 = vmul.f32 %v3556, %v3473
        %v3558 = vmul.f32 %v3556, %v3474
        %3561 = vrot.lane.b32.xlu0 %v3557, 126
        %v3562 = vpop.permute.xlu0 %3561
        %3563 = vrot.lane.b32.xlu0 %v3558, 126
        %v3564 = vpop.permute.xlu0 %3563
        %v3567 = vadd.f32 %v3511, %v3562
        %v3568 = vadd.f32 %v3512, %v3564
        %s3569 = sld [smem:[#allocation11 + $0x3e]]
        %v3570 = vstv %s3569
        %v3571 = vmul.f32 %v3570, %v3473
        %v3572 = vmul.f32 %v3570, %v3474
        %3575 = vrot.lane.b32.xlu0 %v3571, 126
        %v3576 = vpop.permute.xlu0 %3575
        %3577 = vrot.lane.b32.xlu0 %v3572, 126
        %v3578 = vpop.permute.xlu0 %3577
        %v3581 = vadd.f32 %v3525, %v3576
        %v3582 = vadd.f32 %v3526, %v3578
        %s3583 = sld [smem:[#allocation11 + $0x62]]
        %v3584 = vstv %s3583
        %v3585 = vmul.f32 %v3584, %v3473
        %v3586 = vmul.f32 %v3584, %v3474
        %3589 = vrot.lane.b32.xlu0 %v3585, 126
        %v3590 = vpop.permute.xlu0 %3589
        %3591 = vrot.lane.b32.xlu0 %v3586, 126
        %v3592 = vpop.permute.xlu0 %3591
        %v3595 = vadd.f32 %v3539, %v3590
        %v3596 = vadd.f32 %v3540, %v3592
        %s3597 = sld [smem:[#allocation11 + $0x86]]
        %v3598 = vstv %s3597
        %v3599 = vmul.f32 %v3598, %v3473
        %v3600 = vmul.f32 %v3598, %v3474
        %3603 = vrot.lane.b32.xlu0 %v3599, 126
        %v3604 = vpop.permute.xlu0 %3603
        %3605 = vrot.lane.b32.xlu0 %v3600, 126
        %v3606 = vpop.permute.xlu0 %3605
        %v3609 = vadd.f32 %v3553, %v3604
        %v3610 = vadd.f32 %v3554, %v3606
        %v3611 = vld [vmem:[%s702] sm:$0xff]
        %v3612 = vld [vmem:[%s702 + $0x8] sm:$0xff]
        %s3613 = sld [smem:[#allocation11 + $0x1b]]
        %v3614 = vstv %s3613
        %v3615 = vmul.f32 %v3614, %v3611
        %v3616 = vmul.f32 %v3614, %v3612
        %v3617 = vadd.f32 %v3567, %v3615
        %v3618 = vadd.f32 %v3568, %v3616
        %s3619 = sld [smem:[#allocation11 + $0x3f]]
        %v3620 = vstv %s3619
        %v3621 = vmul.f32 %v3620, %v3611
        %v3622 = vmul.f32 %v3620, %v3612
        %v3623 = vadd.f32 %v3581, %v3621
        %v3624 = vadd.f32 %v3582, %v3622
        %s3625 = sld [smem:[#allocation11 + $0x63]]
        %v3626 = vstv %s3625
        %v3627 = vmul.f32 %v3626, %v3611
        %v3628 = vmul.f32 %v3626, %v3612
        %v3629 = vadd.f32 %v3595, %v3627
        %v3630 = vadd.f32 %v3596, %v3628
        %s3631 = sld [smem:[#allocation11 + $0x87]]
        %v3632 = vstv %s3631
        %v3633 = vmul.f32 %v3632, %v3611
        %v3634 = vmul.f32 %v3632, %v3612
        %v3635 = vadd.f32 %v3609, %v3633
        %v3636 = vadd.f32 %v3610, %v3634
        %s3637 = sld [smem:[#allocation11 + $0x1c]]
        %v3638 = vstv %s3637
        %v3639 = vmul.f32 %v3638, %v3611
        %v3640 = vmul.f32 %v3638, %v3612
        %3643 = vrot.lane.b32.xlu0 %v3639, 127
        %v3644 = vpop.permute.xlu0 %3643
        %3645 = vrot.lane.b32.xlu0 %v3640, 127
        %v3646 = vpop.permute.xlu0 %3645
        %v3649 = vadd.f32 %v3617, %v3644
        %v3650 = vadd.f32 %v3618, %v3646
        %s3651 = sld [smem:[#allocation11 + $0x40]]
        %v3652 = vstv %s3651
        %v3653 = vmul.f32 %v3652, %v3611
        %v3654 = vmul.f32 %v3652, %v3612
        %3657 = vrot.lane.b32.xlu0 %v3653, 127
        %v3658 = vpop.permute.xlu0 %3657
        %3659 = vrot.lane.b32.xlu0 %v3654, 127
        %v3660 = vpop.permute.xlu0 %3659
        %v3663 = vadd.f32 %v3623, %v3658
        %v3664 = vadd.f32 %v3624, %v3660
        %s3665 = sld [smem:[#allocation11 + $0x64]]
        %v3666 = vstv %s3665
        %v3667 = vmul.f32 %v3666, %v3611
        %v3668 = vmul.f32 %v3666, %v3612
        %3671 = vrot.lane.b32.xlu0 %v3667, 127
        %v3672 = vpop.permute.xlu0 %3671
        %3673 = vrot.lane.b32.xlu0 %v3668, 127
        %v3674 = vpop.permute.xlu0 %3673
        %v3677 = vadd.f32 %v3629, %v3672
        %v3678 = vadd.f32 %v3630, %v3674
        %s3679 = sld [smem:[#allocation11 + $0x88]]
        %v3680 = vstv %s3679
        %v3681 = vmul.f32 %v3680, %v3611
        %v3682 = vmul.f32 %v3680, %v3612
        %3685 = vrot.lane.b32.xlu0 %v3681, 127
        %v3686 = vpop.permute.xlu0 %3685
        %3687 = vrot.lane.b32.xlu0 %v3682, 127
        %v3688 = vpop.permute.xlu0 %3687
        %v3691 = vadd.f32 %v3635, %v3686
        %v3692 = vadd.f32 %v3636, %v3688
        %s3693 = sld [smem:[#allocation11 + $0x1d]]
        %v3694 = vstv %s3693
        %v3695 = vmul.f32 %v3694, %v3611
        %v3696 = vmul.f32 %v3694, %v3612
        %3699 = vrot.lane.b32.xlu0 %v3695, 126
        %v3700 = vpop.permute.xlu0 %3699
        %3701 = vrot.lane.b32.xlu0 %v3696, 126
        %v3702 = vpop.permute.xlu0 %3701
        %v3705 = vadd.f32 %v3649, %v3700
        %v3706 = vadd.f32 %v3650, %v3702
        %s3707 = sld [smem:[#allocation11 + $0x41]]
        %v3708 = vstv %s3707
        %v3709 = vmul.f32 %v3708, %v3611
        %v3710 = vmul.f32 %v3708, %v3612
        %3713 = vrot.lane.b32.xlu0 %v3709, 126
        %v3714 = vpop.permute.xlu0 %3713
        %3715 = vrot.lane.b32.xlu0 %v3710, 126
        %v3716 = vpop.permute.xlu0 %3715
        %v3719 = vadd.f32 %v3663, %v3714
        %v3720 = vadd.f32 %v3664, %v3716
        %s3721 = sld [smem:[#allocation11 + $0x65]]
        %v3722 = vstv %s3721
        %v3723 = vmul.f32 %v3722, %v3611
        %v3724 = vmul.f32 %v3722, %v3612
        %3727 = vrot.lane.b32.xlu0 %v3723, 126
        %v3728 = vpop.permute.xlu0 %3727
        %3729 = vrot.lane.b32.xlu0 %v3724, 126
        %v3730 = vpop.permute.xlu0 %3729
        %v3733 = vadd.f32 %v3677, %v3728
        %v3734 = vadd.f32 %v3678, %v3730
        %s3735 = sld [smem:[#allocation11 + $0x89]]
        %v3736 = vstv %s3735
        %v3737 = vmul.f32 %v3736, %v3611
        %v3738 = vmul.f32 %v3736, %v3612
        %3741 = vrot.lane.b32.xlu0 %v3737, 126
        %v3742 = vpop.permute.xlu0 %3741
        %3743 = vrot.lane.b32.xlu0 %v3738, 126
        %v3744 = vpop.permute.xlu0 %3743
        %v3747 = vadd.f32 %v3691, %v3742
        %v3748 = vadd.f32 %v3692, %v3744
        %v3749 = vld [vmem:[%s702 + $0x1] sm:$0xff]
        %v3750 = vld [vmem:[%s702 + $0x9] sm:$0xff]
        %s3751 = sld [smem:[#allocation11 + $0x1e]]
        %v3752 = vstv %s3751
        %v3753 = vmul.f32 %v3752, %v3749
        %v3754 = vmul.f32 %v3752, %v3750
        %v3755 = vadd.f32 %v3705, %v3753
        %v3756 = vadd.f32 %v3706, %v3754
        %s3757 = sld [smem:[#allocation11 + $0x42]]
        %v3758 = vstv %s3757
        %v3759 = vmul.f32 %v3758, %v3749
        %v3760 = vmul.f32 %v3758, %v3750
        %v3761 = vadd.f32 %v3719, %v3759
        %v3762 = vadd.f32 %v3720, %v3760
        %s3763 = sld [smem:[#allocation11 + $0x66]]
        %v3764 = vstv %s3763
        %v3765 = vmul.f32 %v3764, %v3749
        %v3766 = vmul.f32 %v3764, %v3750
        %v3767 = vadd.f32 %v3733, %v3765
        %v3768 = vadd.f32 %v3734, %v3766
        %s3769 = sld [smem:[#allocation11 + $0x8a]]
        %v3770 = vstv %s3769
        %v3771 = vmul.f32 %v3770, %v3749
        %v3772 = vmul.f32 %v3770, %v3750
        %v3773 = vadd.f32 %v3747, %v3771
        %v3774 = vadd.f32 %v3748, %v3772
        %s3775 = sld [smem:[#allocation11 + $0x1f]]
        %v3776 = vstv %s3775
        %v3777 = vmul.f32 %v3776, %v3749
        %v3778 = vmul.f32 %v3776, %v3750
        %3781 = vrot.lane.b32.xlu0 %v3777, 127
        %v3782 = vpop.permute.xlu0 %3781
        %3783 = vrot.lane.b32.xlu0 %v3778, 127
        %v3784 = vpop.permute.xlu0 %3783
        %v3787 = vadd.f32 %v3755, %v3782
        %v3788 = vadd.f32 %v3756, %v3784
        %s3789 = sld [smem:[#allocation11 + $0x43]]
        %v3790 = vstv %s3789
        %v3791 = vmul.f32 %v3790, %v3749
        %v3792 = vmul.f32 %v3790, %v3750
        %3795 = vrot.lane.b32.xlu0 %v3791, 127
        %v3796 = vpop.permute.xlu0 %3795
        %3797 = vrot.lane.b32.xlu0 %v3792, 127
        %v3798 = vpop.permute.xlu0 %3797
        %v3801 = vadd.f32 %v3761, %v3796
        %v3802 = vadd.f32 %v3762, %v3798
        %s3803 = sld [smem:[#allocation11 + $0x67]]
        %v3804 = vstv %s3803
        %v3805 = vmul.f32 %v3804, %v3749
        %v3806 = vmul.f32 %v3804, %v3750
        %3809 = vrot.lane.b32.xlu0 %v3805, 127
        %v3810 = vpop.permute.xlu0 %3809
        %3811 = vrot.lane.b32.xlu0 %v3806, 127
        %v3812 = vpop.permute.xlu0 %3811
        %v3815 = vadd.f32 %v3767, %v3810
        %v3816 = vadd.f32 %v3768, %v3812
        %s3817 = sld [smem:[#allocation11 + $0x8b]]
        %v3818 = vstv %s3817
        %v3819 = vmul.f32 %v3818, %v3749
        %v3820 = vmul.f32 %v3818, %v3750
        %3823 = vrot.lane.b32.xlu0 %v3819, 127
        %v3824 = vpop.permute.xlu0 %3823
        %3825 = vrot.lane.b32.xlu0 %v3820, 127
        %v3826 = vpop.permute.xlu0 %3825
        %v3829 = vadd.f32 %v3773, %v3824
        %v3830 = vadd.f32 %v3774, %v3826
        %s3831 = sld [smem:[#allocation11 + $0x20]]
        %v3832 = vstv %s3831
        %v3833 = vmul.f32 %v3832, %v3749
        %v3834 = vmul.f32 %v3832, %v3750
        %3837 = vrot.lane.b32.xlu0 %v3833, 126
        %v3838 = vpop.permute.xlu0 %3837
        %3839 = vrot.lane.b32.xlu0 %v3834, 126
        %v3840 = vpop.permute.xlu0 %3839
        %v3843 = vadd.f32 %v3787, %v3838
        %v3844 = vadd.f32 %v3788, %v3840
        %s3845 = sld [smem:[#allocation11 + $0x44]]
        %v3846 = vstv %s3845
        %v3847 = vmul.f32 %v3846, %v3749
        %v3848 = vmul.f32 %v3846, %v3750
        %3851 = vrot.lane.b32.xlu0 %v3847, 126
        %v3852 = vpop.permute.xlu0 %3851
        %3853 = vrot.lane.b32.xlu0 %v3848, 126
        %v3854 = vpop.permute.xlu0 %3853
        %v3857 = vadd.f32 %v3801, %v3852
        %v3858 = vadd.f32 %v3802, %v3854
        %s3859 = sld [smem:[#allocation11 + $0x68]]
        %v3860 = vstv %s3859
        %v3861 = vmul.f32 %v3860, %v3749
        %v3862 = vmul.f32 %v3860, %v3750
        %3865 = vrot.lane.b32.xlu0 %v3861, 126
        %v3866 = vpop.permute.xlu0 %3865
        %3867 = vrot.lane.b32.xlu0 %v3862, 126
        %v3868 = vpop.permute.xlu0 %3867
        %v3871 = vadd.f32 %v3815, %v3866
        %v3872 = vadd.f32 %v3816, %v3868
        %s3873 = sld [smem:[#allocation11 + $0x8c]]
        %v3874 = vstv %s3873
        %v3875 = vmul.f32 %v3874, %v3749
        %v3876 = vmul.f32 %v3874, %v3750
        %3879 = vrot.lane.b32.xlu0 %v3875, 126
        %v3880 = vpop.permute.xlu0 %3879
        %3881 = vrot.lane.b32.xlu0 %v3876, 126
        %v3882 = vpop.permute.xlu0 %3881
        %v3885 = vadd.f32 %v3829, %v3880
        %v3886 = vadd.f32 %v3830, %v3882
        %v3887 = vld [vmem:[%s702 + $0x2] sm:$0xff]
        %v3888 = vld [vmem:[%s702 + $0xa] sm:$0xff]
        %s3889 = sld [smem:[#allocation11 + $0x21]]
        %v3890 = vstv %s3889
        %v3891 = vmul.f32 %v3890, %v3887
        %v3892 = vmul.f32 %v3890, %v3888
        %v3893 = vadd.f32 %v3843, %v3891
        %v3894 = vadd.f32 %v3844, %v3892
        %s3895 = sld [smem:[#allocation11 + $0x45]]
        %v3896 = vstv %s3895
        %v3897 = vmul.f32 %v3896, %v3887
        %v3898 = vmul.f32 %v3896, %v3888
        %v3899 = vadd.f32 %v3857, %v3897
        %v3900 = vadd.f32 %v3858, %v3898
        %s3901 = sld [smem:[#allocation11 + $0x69]]
        %v3902 = vstv %s3901
        %v3903 = vmul.f32 %v3902, %v3887
        %v3904 = vmul.f32 %v3902, %v3888
        %v3905 = vadd.f32 %v3871, %v3903
        %v3906 = vadd.f32 %v3872, %v3904
        %s3907 = sld [smem:[#allocation11 + $0x8d]]
        %v3908 = vstv %s3907
        %v3909 = vmul.f32 %v3908, %v3887
        %v3910 = vmul.f32 %v3908, %v3888
        %v3911 = vadd.f32 %v3885, %v3909
        %v3912 = vadd.f32 %v3886, %v3910
        %s3913 = sld [smem:[#allocation11 + $0x22]]
        %v3914 = vstv %s3913
        %v3915 = vmul.f32 %v3914, %v3887
        %v3916 = vmul.f32 %v3914, %v3888
        %3919 = vrot.lane.b32.xlu0 %v3915, 127
        %v3920 = vpop.permute.xlu0 %3919
        %3921 = vrot.lane.b32.xlu0 %v3916, 127
        %v3922 = vpop.permute.xlu0 %3921
        %v3925 = vadd.f32 %v3893, %v3920
        %v3926 = vadd.f32 %v3894, %v3922
        %s3927 = sld [smem:[#allocation11 + $0x46]]
        %v3928 = vstv %s3927
        %v3929 = vmul.f32 %v3928, %v3887
        %v3930 = vmul.f32 %v3928, %v3888
        %3933 = vrot.lane.b32.xlu0 %v3929, 127
        %v3934 = vpop.permute.xlu0 %3933
        %3935 = vrot.lane.b32.xlu0 %v3930, 127
        %v3936 = vpop.permute.xlu0 %3935
        %v3939 = vadd.f32 %v3899, %v3934
        %v3940 = vadd.f32 %v3900, %v3936
        %s3941 = sld [smem:[#allocation11 + $0x6a]]
        %v3942 = vstv %s3941
        %v3943 = vmul.f32 %v3942, %v3887
        %v3944 = vmul.f32 %v3942, %v3888
        %3947 = vrot.lane.b32.xlu0 %v3943, 127
        %v3948 = vpop.permute.xlu0 %3947
        %3949 = vrot.lane.b32.xlu0 %v3944, 127
        %v3950 = vpop.permute.xlu0 %3949
        %v3953 = vadd.f32 %v3905, %v3948
        %v3954 = vadd.f32 %v3906, %v3950
        %s3955 = sld [smem:[#allocation11 + $0x8e]]
        %v3956 = vstv %s3955
        %v3957 = vmul.f32 %v3956, %v3887
        %v3958 = vmul.f32 %v3956, %v3888
        %3961 = vrot.lane.b32.xlu0 %v3957, 127
        %v3962 = vpop.permute.xlu0 %3961
        %3963 = vrot.lane.b32.xlu0 %v3958, 127
        %v3964 = vpop.permute.xlu0 %3963
        %v3967 = vadd.f32 %v3911, %v3962
        %v3968 = vadd.f32 %v3912, %v3964
        %s3969 = sld [smem:[#allocation11 + $0x23]]
        %v3970 = vstv %s3969
        %v3971 = vmul.f32 %v3970, %v3887
        %v3972 = vmul.f32 %v3970, %v3888
        %3975 = vrot.lane.b32.xlu0 %v3971, 126
        %v3976 = vpop.permute.xlu0 %3975
        %3977 = vrot.lane.b32.xlu0 %v3972, 126
        %v3978 = vpop.permute.xlu0 %3977
        %v3981 = vadd.f32 %v3925, %v3976
        %v3982 = vadd.f32 %v3926, %v3978
        %s3983 = sld [smem:[#allocation11 + $0x47]]
        %v3984 = vstv %s3983
        %v3985 = vmul.f32 %v3984, %v3887
        %v3986 = vmul.f32 %v3984, %v3888
        %3989 = vrot.lane.b32.xlu0 %v3985, 126
        %v3990 = vpop.permute.xlu0 %3989
        %3991 = vrot.lane.b32.xlu0 %v3986, 126
        %v3992 = vpop.permute.xlu0 %3991
        %v3995 = vadd.f32 %v3939, %v3990
        %v3996 = vadd.f32 %v3940, %v3992
        %s3997 = sld [smem:[#allocation11 + $0x6b]]
        %v3998 = vstv %s3997
        %v3999 = vmul.f32 %v3998, %v3887
        %v4000 = vmul.f32 %v3998, %v3888
        %4003 = vrot.lane.b32.xlu0 %v3999, 126
        %v4004 = vpop.permute.xlu0 %4003
        %4005 = vrot.lane.b32.xlu0 %v4000, 126
        %v4006 = vpop.permute.xlu0 %4005
        %v4009 = vadd.f32 %v3953, %v4004
        %v4010 = vadd.f32 %v3954, %v4006
        %s4011 = sld [smem:[#allocation11 + $0x8f]]
        %v4012 = vstv %s4011
        %v4013 = vmul.f32 %v4012, %v3887
        %v4014 = vmul.f32 %v4012, %v3888
        %4017 = vrot.lane.b32.xlu0 %v4013, 126
        %v4018 = vpop.permute.xlu0 %4017
        %4019 = vrot.lane.b32.xlu0 %v4014, 126
        %v4020 = vpop.permute.xlu0 %4019
        %v4023 = vadd.f32 %v3967, %v4018
        %v4024 = vadd.f32 %v3968, %v4020
        %v4025 = vmax.f32 %v3981, 0.0
        %v4026 = vmax.f32 %v3982, 0.0
        %vm4027 = vcmask 130048
        %4028 = vst.msk [vmem:[%s379] sm:$0xff] %vm4027, %v4025
        %4029 = vst.msk [vmem:[%s379 + $0x8] sm:$0xff] %vm4027, %v4026
        %v4030 = vmax.f32 %v3995, 0.0
        %v4031 = vmax.f32 %v3996, 0.0
        %s4032 = scalar_lea.vmem %s379, 16 [#allocation14]
        %4033 = vst.msk [vmem:[%s4032] sm:$0xff] %vm4027, %v4030
        %4034 = vst.msk [vmem:[%s4032 + $0x8] sm:$0xff] %vm4027, %v4031
        %v4035 = vmax.f32 %v4009, 0.0
        %v4036 = vmax.f32 %v4010, 0.0
        %s4037 = scalar_lea.vmem %s379, 32 [#allocation14]
        %4038 = vst.msk [vmem:[%s4037] sm:$0xff] %vm4027, %v4035
        %4039 = vst.msk [vmem:[%s4037 + $0x8] sm:$0xff] %vm4027, %v4036
        %v4040 = vmax.f32 %v4023, 0.0
        %v4041 = vmax.f32 %v4024, 0.0
        %s4042 = scalar_lea.vmem %s379, 48 [#allocation14]
        %4043 = vst.msk [vmem:[%s4042] sm:$0xff] %vm4027, %v4040
        %4044 = vst.msk [vmem:[%s4042 + $0x8] sm:$0xff] %vm4027, %v4041
        %s4045 = sand.u32 %s194, 1
        %s4046 = scalar_lea.sflag [#allocation6], %s4045
        %s4047 = sand.u32 %s194, 1
        %s4048 = smul.addr %s4047, 64
        %s4049 = scalar_lea.vmem [#allocation14], %s4048
        // Predicated region
        $region69: #{tpu_custom_call.1} parent=47 // pred_check
          %p4050 = pneg %p204
        $region70: #{tpu_custom_call.1} parent=47 // pred_check_branch
          %4052 = sbr.rel (%p4050) target = $region72
        $region71: #{tpu_custom_call.1} parent=47 // pred_region
          %4054 = vsyncadd %s4046, 0
          %s4055 = smul.addr %s29, 8
          %s4056 = smul.addr %s4055, 8
          %s4057 = scalar_lea.hbm %s7, %s4056
          %s4058 = sshll.u32 %s4049, 4
          %s4059 = int_to_ptr.vmem [resolvable:$true] %s4058
          %s4060 = sshll.u32 %s4057, 4
          %s4061 = int_to_ptr.hbm [resolvable:$true] %s4060
          %4066 = dma.vmem_to_hbm [thread:$0]  %s4059, 1024, %s4061, %s4046, 128, 128, 8
        $region72: #{tpu_custom_call.1} parent=47 // pred_fallthru
          _
      $region48: #{tpu_custom_call.1} parent=5 // pred_fallthru
        _
      %p4067 = scmp.le.s32.totalorder 2, %s24
      // Predicated region
      $region73: #{tpu_custom_call.1} parent=5 // pred_check
        %p4068 = pneg %p4067
      $region74: #{tpu_custom_call.1} parent=5 // pred_check_branch
        %4070 = sbr.rel (%p4068) target = $region76
      $region75: #{tpu_custom_call.1} parent=5 // pred_region
        %s4071 = ssub.s32 %s24, 2
        // Predicated region
        $region77: #{tpu_custom_call.1} parent=75 // pred_check
          %p4072 = pneg %p210
        $region78: #{tpu_custom_call.1} parent=75 // pred_check_branch
          %4074 = sbr.rel (%p4072) target = $region80
        $region79: #{tpu_custom_call.1} parent=75 // pred_region
          %s4075 = sand.u32 %s195, 1
          %s4076 = scalar_lea.sflag [#allocation6], %s4075
          %s4077 = sand.u32 %s195, 1
          %s4078 = smul.addr %s4077, 64
          %s4079 = scalar_lea.vmem [#allocation14], %s4078
          %4081 = dma.done %s4076, 1024
        $region80: #{tpu_custom_call.1} parent=75 // pred_fallthru
          _
      $region76: #{tpu_custom_call.1} parent=5 // pred_fallthru
        _
    $region6: #{tpu_custom_call.1} parent=1 // loop_footer
      %s28 = sadd.s32 1, %s24
    $region7: #{tpu_custom_call.1} parent=1 // loop_footer_branch
      %23 = sbr.rel target = $region3
    $region8: #{tpu_custom_call.1} parent=1 // loop_exit
      _
    %4082 = vsyncpa [#allocation5], 1
    %s4083 = scalar_lea.sflag [#allocation5], 1
    %4084 = vsyncpa %s4083, 1
    %4085 = vsyncpa [#allocation9], 1
    %s4086 = scalar_lea.sflag [#allocation9], 1
    %4087 = vsyncpa %s4086, 1
    %4088 = vsyncpa [#allocation6], 1
    %s4089 = scalar_lea.sflag [#allocation6], 1
    %4090 = vsyncpa %s4089, 1
    %4091 = vsyncpa [#allocation7], 1
    %s4092 = scalar_lea.sflag [#allocation7], 1
    %4093 = vsyncpa %s4092, 1
    %4094 = vsyncpa [#allocation12], 1

</llo_original>
